<compile_context>
chip_gen: v5e
topology: v5e:2x2
jax: 0.10.0
libtpu: 0.0.40
codegen_flags: <defaults>
</compile_context>

<pallas_src>
import functools

import numpy as np
import jax
import jax.numpy as jnp
from jax.experimental import pallas as pl
from jax.experimental.pallas import tpu as pltpu


_GATE_PAD = 8  # pad the tiny gate hidden dim (r=1) up to 8 lanes (zero-pad is exact)


# ------------------------- fused Pallas kernel -------------------------

def _osblock_kernel(x_ref, w1_ref, s1_ref, b1_ref,
                    w0_ref, lvlw_ref, shift_ref, lvlk_ref, lvlb_ref,
                    gw1_ref, gb1_ref, gw2_ref, gb2_ref,
                    w3t_ref, s3_ref, b3_ref,
                    downw_ref, downs_ref, downb_ref,
                    o_ref, *, S, C):
    f32 = jnp.float32
    bf16 = jnp.bfloat16

    x = x_ref[...]                                                    # [S, Cin] bf16

    # conv1: 1x1 + BN + ReLU  (bf16 MXU operands, f32 accumulate)
    x1 = jnp.dot(x, w1_ref[...], preferred_element_type=f32)
    x1 = jnp.maximum(x1 * s1_ref[...] + b1_ref[...], 0.0)            # [S, mid] f32

    shifts = shift_ref[...]                                           # [9S, S] bf16

    def dw_bn_relu(z, lvl):
        # Depthwise 3x3 + BN + ReLU on the 4-branch slab: one bf16 [9S,S]@[S,C]
        # matmul produces all 9 border-masked shifted copies, then 9
        # per-channel MACs on the VPU (taps already carry the BN scale).
        zs = jnp.dot(shifts, z.astype(bf16), preferred_element_type=f32)  # [9S, C]
        acc = jnp.zeros((S, C), f32)
        for t in range(9):
            row = lvl * 9 + t
            acc = acc + zs[t * S:(t + 1) * S, :] * lvlk_ref[row:row + 1, :]
        acc = acc + lvlb_ref[lvl:lvl + 1, :]
        return jnp.maximum(acc, 0.0)

    # level 0: all four branches' first LightConv3x3 (weights concatenated -> N=64).
    slab = jnp.dot(x1.astype(bf16), w0_ref[...], preferred_element_type=f32)   # [S, C]
    slab = dw_bn_relu(slab, 0)
    # levels 1..3: block-diagonal 1x1 (identity blocks for finished branches).
    for lvl in range(1, 4):
        z = jnp.dot(slab.astype(bf16), lvlw_ref[lvl - 1],
                    preferred_element_type=f32)
        slab = dw_bn_relu(z, lvl)

    # channel gate for all four branches at once (block-diagonal FCs, one sigmoid).
    avg = jnp.mean(slab, axis=0, keepdims=True)                       # [1, C]
    h = jnp.dot(avg, gw1_ref[...], preferred_element_type=f32) + gb1_ref[...]
    h = jnp.maximum(h, 0.0)
    g = jnp.dot(h, gw2_ref[...], preferred_element_type=f32) + gb2_ref[...]
    g = jax.nn.sigmoid(g)                                             # [1, C]
    gated = slab * g                                                  # [S, C]

    # conv3 (+BN) of the branch sum: w3 tiled 4x folds the 4-way sum into one matmul.
    y = jnp.dot(gated.astype(bf16), w3t_ref[...], preferred_element_type=f32)  # [S, Cout]
    y = y * s3_ref[...] + b3_ref[...]

    # downsample identity path (1x1 + BN), residual add, final ReLU.
    idn = jnp.dot(x, downw_ref[...], preferred_element_type=f32)
    idn = idn * downs_ref[...] + downb_ref[...]
    o_ref[...] = jnp.maximum(y + idn, 0.0)


# ------------------------- host-side parameter prep -------------------------

def _block_diag4(blocks):
    """Block-diagonal [4a, 4b] matrix from four [a, b] blocks."""
    a, b = blocks[0].shape
    zero = jnp.zeros((a, b), jnp.float32)
    rows = [jnp.concatenate([blk if j == i else zero for j in range(4)], axis=1)
            for i, blk in enumerate(blocks)]
    return jnp.concatenate(rows, axis=0)


def _make_shift_matrices(H, W):
    """[9*S, S] stack of boundary-masked spatial shift matrices.

    Row block t = dh*3+dw holds Sh_t with Sh_t[s_out, s_in] = 1 iff s_in is the
    (dh-1, dw-1)-shifted neighbour of s_out (rows at image borders stay zero),
    so (Sh_t @ z)[s, c] = z[neighbour(s, t), c] or 0 — exactly a 3x3 depthwise
    conv tap with zero padding.
    """
    S = H * W
    sh = np.zeros((9, S, S), np.float32)
    for dh in range(3):
        for dw in range(3):
            t = dh * 3 + dw
            for h in range(H):
                for w in range(W):
                    hh, ww = h + dh - 1, w + dw - 1
                    if 0 <= hh < H and 0 <= ww < W:
                        sh[t, h * W + w, hh * W + ww] = 1.0
    return jnp.asarray(sh.reshape(9 * S, S))


def prepare_fused_params(p, H, W):
    """Build the fused-kernel weight set from raw OSBlock params."""
    mid = p['conv1_w'].shape[1]
    branches = [p['branch_a'], p['branch_b'], p['branch_c'], p['branch_d']]

    eye = jnp.eye(mid, dtype=jnp.float32)
    delta = jnp.zeros((9, mid), jnp.float32).at[4, :].set(1.0)  # identity dw kernel
    zeros = jnp.zeros((1, mid), jnp.float32)

    # level 0: every branch starts from x1 -> concatenate the four 1x1 weights.
    w0 = jnp.concatenate([br[0]['w'] for br in branches], axis=1)        # [mid, 4*mid]

    lvl_w, lvl_k, lvl_b = [], [], []
    for lvl in range(4):
        wblk, kcol, bcol = [], [], []
        for br in branches:
            if lvl < len(br):          # branch still active at this level
                lp = br[lvl]
                wblk.append(lp['w'])
                # fold the depthwise BN scale into the 9 per-channel taps (exact)
                kcol.append(lp['k'].reshape(9, mid) * lp['s'])
                bcol.append(lp['b'])
            else:                      # finished branch: exact identity pass-through
                wblk.append(eye)
                kcol.append(delta)     # scale folded in is 1.0
                bcol.append(zeros)
        if lvl > 0:
            lvl_w.append(_block_diag4(wblk))
        lvl_k.append(jnp.concatenate(kcol, axis=1))
        lvl_b.append(jnp.concatenate(bcol, axis=1))

    # channel gate (shared weights, applied to all 4 branches) -> block-diagonal
    # FC1/FC2 with the hidden dim zero-padded from r to _GATE_PAD (mathematically exact).
    r = p['g_w1'].shape[1]
    g_w1p = jnp.zeros((mid, _GATE_PAD), jnp.float32).at[:, :r].set(p['g_w1'])
    g_b1p = jnp.zeros((1, _GATE_PAD), jnp.float32).at[:, :r].set(p['g_b1'])
    g_w2p = jnp.zeros((_GATE_PAD, mid), jnp.float32).at[:r, :].set(p['g_w2'])

    bf16 = jnp.bfloat16
    return dict(
        w1=p['conv1_w'].astype(bf16), s1=p['conv1_s'], b1=p['conv1_b'],
        w0=w0.astype(bf16),
        lvl_w=jnp.stack(lvl_w).astype(bf16),                  # [3, C, C]
        shifts=_make_shift_matrices(H, W).astype(bf16),       # [9*S, S] bf16 (0/1, exact)
        lvl_k=jnp.concatenate(lvl_k, axis=0),                 # [36, C]  (BN scale folded)
        lvl_b=jnp.concatenate(lvl_b, axis=0),                 # [4, C]
        gw1=_block_diag4([g_w1p] * 4),                        # [C, 4*_GATE_PAD]
        gb1=jnp.tile(g_b1p, (1, 4)),                          # [1, 4*_GATE_PAD]
        gw2=_block_diag4([g_w2p] * 4),                        # [4*_GATE_PAD, C]
        gb2=jnp.tile(p['g_b2'], (1, 4)),                      # [1, C]
        w3t=jnp.tile(p['conv3_w'], (4, 1)).astype(bf16),      # [C, Cout]
        s3=p['conv3_s'], b3=p['conv3_b'],
        downw=p['down_w'].astype(bf16), downs=p['down_s'], downb=p['down_b'],
    )


# ------------------------- forward passes -------------------------

def osblock_forward_pallas(x_nchw, p):
    B, Cin, H, W = x_nchw.shape
    mid = p['conv1_w'].shape[1]
    Cout = p['conv3_w'].shape[1]
    S, C, GH = H * W, 4 * mid, 4 * _GATE_PAD

    fp = prepare_fused_params(p, H, W)
    x = jnp.transpose(x_nchw, (0, 2, 3, 1)).reshape(B, S, Cin).astype(jnp.bfloat16)

    def shared(shape):
        zero = (0,) * len(shape)
        return pl.BlockSpec(shape, lambda b: zero)

    out = pl.pallas_call(
        functools.partial(_osblock_kernel, S=S, C=C),
        out_shape=jax.ShapeDtypeStruct((B, S, Cout), jnp.float32),
        grid=(B,),
        in_specs=[
            pl.BlockSpec((None, S, Cin), lambda b: (b, 0, 0)),        # x (per batch)
            shared((Cin, mid)), shared((1, mid)), shared((1, mid)),   # conv1 w, s, b
            shared((mid, C)),                                         # level-0 1x1 (concat)
            shared((3, C, C)),                                        # levels 1-3 1x1 (block-diag)
            shared((9 * S, S)),                                       # dw shift matrices (bf16)
            shared((36, C)),                                          # dw taps (BN scale folded)
            shared((4, C)),                                           # dw BN bias
            shared((C, GH)), shared((1, GH)),                         # gate fc1 (block-diag)
            shared((GH, C)), shared((1, C)),                          # gate fc2 (block-diag)
            shared((C, Cout)), shared((1, Cout)), shared((1, Cout)),  # conv3 (tiled) w, s, b
            shared((Cin, Cout)), shared((1, Cout)), shared((1, Cout)),# downsample w, s, b
        ],
        out_specs=pl.BlockSpec((None, S, Cout), lambda b: (b, 0, 0)),
        compiler_params=pltpu.CompilerParams(
            dimension_semantics=("parallel",)),   # v7x: one batch element per TensorCore
    )(x, fp['w1'], fp['s1'], fp['b1'], fp['w0'], fp['lvl_w'],
      fp['shifts'], fp['lvl_k'], fp['lvl_b'],
      fp['gw1'], fp['gb1'], fp['gw2'], fp['gb2'],
      fp['w3t'], fp['s3'], fp['b3'],
      fp['downw'], fp['downs'], fp['downb'])

    return jnp.transpose(out.reshape(B, H, W, Cout), (0, 3, 1, 2))    # back to NCHW


def osblock_forward_ref(x_nchw, p):
    # pure-JAX f32 reference with the same folded parameters.
    x = jnp.transpose(x_nchw, (0, 2, 3, 1)).astype(jnp.float32)
    B, H, W, Cin = x.shape
    hp = jax.lax.Precision.HIGHEST

    def c1x1(x, w, s, b, relu):
        y = jnp.einsum('bhwc,cd->bhwd', x, w, precision=hp)
        y = y * s.reshape(1, 1, 1, -1) + b.reshape(1, 1, 1, -1)
        return jnp.maximum(y, 0.0) if relu else y

    def dw(x, k, s, b):
        xp = jnp.pad(x, ((0, 0), (1, 1), (1, 1), (0, 0)))
        acc = jnp.zeros_like(x)
        for dh in range(3):
            for dwi in range(3):
                acc = acc + xp[:, dh:dh + H, dwi:dwi + W, :] * k[dh, dwi]
        return jnp.maximum(acc * s.reshape(1, 1, 1, -1) + b.reshape(1, 1, 1, -1), 0.0)

    def light(x, lp):
        return dw(jnp.einsum('bhwc,cd->bhwd', x, lp['w'], precision=hp),
                  lp['k'], lp['s'], lp['b'])

    def chain(x, lps):
        for lp in lps:
            x = light(x, lp)
        return x

    def gate(x):
        avg = x.mean(axis=(1, 2))                              # [B, mid]
        h = jnp.maximum(avg @ p['g_w1'] + p['g_b1'], 0.0)
        g = jax.nn.sigmoid(h @ p['g_w2'] + p['g_b2'])
        return x * g[:, None, None, :]

    x1 = c1x1(x, p['conv1_w'], p['conv1_s'], p['conv1_b'], True)
    x2 = (gate(chain(x1, p['branch_a'])) + gate(chain(x1, p['branch_b'])) +
          gate(chain(x1, p['branch_c'])) + gate(chain(x1, p['branch_d'])))
    x3 = c1x1(x2, p['conv3_w'], p['conv3_s'], p['conv3_b'], False)
    idn = c1x1(x, p['down_w'], p['down_s'], p['down_b'], False)
    out = jnp.maximum(x3 + idn, 0.0)
    return jnp.transpose(out, (0, 3, 1, 2))


# ------------------------- parameters (deterministic, synthetic) -------------------------

def make_bn(key, c):
    k1, k2, k3, k4 = jax.random.split(key, 4)
    gamma = 1.0 + 0.1 * jax.random.normal(k1, (c,), jnp.float32)
    beta = 0.1 * jax.random.normal(k2, (c,), jnp.float32)
    mean = 0.1 * jax.random.normal(k3, (c,), jnp.float32)
    var = 1.0 + 0.1 * jnp.abs(jax.random.normal(k4, (c,), jnp.float32))
    scale = gamma / jnp.sqrt(var + 1e-5)
    bias = beta - mean * scale
    return scale.reshape(1, c), bias.reshape(1, c)


def make_light(key, c):
    k1, k2, k3 = jax.random.split(key, 3)
    w = 0.2 * jax.random.normal(k1, (c, c), jnp.float32)       # 1x1 linear (no bias)
    k = 0.2 * jax.random.normal(k2, (3, 3, c), jnp.float32)    # depthwise 3x3
    s, b = make_bn(k3, c)
    return dict(w=w, k=k, s=s, b=b)


def init_params(key, in_ch, out_ch, bottleneck_reduction=4, gate_reduction=16):
    mid = out_ch // bottleneck_reduction
    r = max(mid // gate_reduction, 1)
    keys = iter(jax.random.split(key, 32))
    p = {}
    p['conv1_w'] = 0.2 * jax.random.normal(next(keys), (in_ch, mid), jnp.float32)
    p['conv1_s'], p['conv1_b'] = make_bn(next(keys), mid)
    p['branch_a'] = [make_light(next(keys), mid) for _ in range(1)]
    p['branch_b'] = [make_light(next(keys), mid) for _ in range(2)]
    p['branch_c'] = [make_light(next(keys), mid) for _ in range(3)]
    p['branch_d'] = [make_light(next(keys), mid) for _ in range(4)]
    p['g_w1'] = 0.2 * jax.random.normal(next(keys), (mid, r), jnp.float32)
    p['g_b1'] = 0.1 * jax.random.normal(next(keys), (1, r), jnp.float32)
    p['g_w2'] = 0.2 * jax.random.normal(next(keys), (r, mid), jnp.float32)
    p['g_b2'] = 0.1 * jax.random.normal(next(keys), (1, mid), jnp.float32)
    p['conv3_w'] = 0.2 * jax.random.normal(next(keys), (mid, out_ch), jnp.float32)
    p['conv3_s'], p['conv3_b'] = make_bn(next(keys), out_ch)
    p['down_w'] = 0.2 * jax.random.normal(next(keys), (in_ch, out_ch), jnp.float32)
    p['down_s'], p['down_b'] = make_bn(next(keys), out_ch)
    return p, mid, r


# ------------------------- main -------------------------

if __name__ == "__main__":
    key = jax.random.PRNGKey(0)
    k_x, k_p = jax.random.split(key)

    B, Cin, Cout, H, W = 2, 32, 64, 8, 8        # mid = 64 // 4 = 16, gate hidden r = 1
    x = jax.random.normal(k_x, (B, Cin, H, W), jnp.float32)
    params, mid, r = init_params(k_p, Cin, Cout)

    out = jax.block_until_ready(osblock_forward_pallas(x, params))
    ref = jax.block_until_ready(osblock_forward_ref(x, params))

    assert out.shape == (B, Cout, H, W), out.shape
    np.testing.assert_allclose(np.asarray(out), np.asarray(ref), rtol=5e-2, atol=5e-2)
    print("KERNEL_OK")
</pallas_src>

<mosaic_0001>
module attributes {stable_mosaic.version = 11 : i64} {
  func.func @_osblock_kernel(%arg0: i32, %arg1: memref<1x64x32xbf16, #tpu.memory_space<vmem>>, %arg2: memref<32x16xbf16, #tpu.memory_space<vmem>>, %arg3: memref<1x16xf32, #tpu.memory_space<vmem>>, %arg4: memref<1x16xf32, #tpu.memory_space<vmem>>, %arg5: memref<16x64xbf16, #tpu.memory_space<vmem>>, %arg6: memref<3x64x64xbf16, #tpu.memory_space<vmem>>, %arg7: memref<576x64xbf16, #tpu.memory_space<vmem>>, %arg8: memref<36x64xf32, #tpu.memory_space<vmem>>, %arg9: memref<4x64xf32, #tpu.memory_space<vmem>>, %arg10: memref<64x32xf32, #tpu.memory_space<vmem>>, %arg11: memref<1x32xf32, #tpu.memory_space<vmem>>, %arg12: memref<32x64xf32, #tpu.memory_space<vmem>>, %arg13: memref<1x64xf32, #tpu.memory_space<vmem>>, %arg14: memref<64x64xbf16, #tpu.memory_space<vmem>>, %arg15: memref<1x64xf32, #tpu.memory_space<vmem>>, %arg16: memref<1x64xf32, #tpu.memory_space<vmem>>, %arg17: memref<32x64xbf16, #tpu.memory_space<vmem>>, %arg18: memref<1x64xf32, #tpu.memory_space<vmem>>, %arg19: memref<1x64xf32, #tpu.memory_space<vmem>>, %arg20: memref<1x64x64xf32, #tpu.memory_space<vmem>>) attributes {dimension_semantics = [#tpu.dimension_semantics<parallel>], iteration_bounds = array<i64: 2>, scalar_prefetch = 0 : i64, scratch_operands = 0 : i64, tpu.core_type = #tpu.core_type<tc>, window_params = [{transform_indices = @transform_0, window_bounds = array<i64: 1, 64, 32>}, {pipeline_mode = #tpu.pipeline_mode<synchronous>, transform_indices = @transform_1, window_bounds = array<i64: 32, 16>}, {pipeline_mode = #tpu.pipeline_mode<synchronous>, transform_indices = @transform_2, window_bounds = array<i64: 1, 16>}, {pipeline_mode = #tpu.pipeline_mode<synchronous>, transform_indices = @transform_3, window_bounds = array<i64: 1, 16>}, {pipeline_mode = #tpu.pipeline_mode<synchronous>, transform_indices = @transform_4, window_bounds = array<i64: 16, 64>}, {pipeline_mode = #tpu.pipeline_mode<synchronous>, transform_indices = @transform_5, window_bounds = array<i64: 3, 64, 64>}, {pipeline_mode = #tpu.pipeline_mode<synchronous>, transform_indices = @transform_6, window_bounds = array<i64: 576, 64>}, {pipeline_mode = #tpu.pipeline_mode<synchronous>, transform_indices = @transform_7, window_bounds = array<i64: 36, 64>}, {pipeline_mode = #tpu.pipeline_mode<synchronous>, transform_indices = @transform_8, window_bounds = array<i64: 4, 64>}, {pipeline_mode = #tpu.pipeline_mode<synchronous>, transform_indices = @transform_9, window_bounds = array<i64: 64, 32>}, {pipeline_mode = #tpu.pipeline_mode<synchronous>, transform_indices = @transform_10, window_bounds = array<i64: 1, 32>}, {pipeline_mode = #tpu.pipeline_mode<synchronous>, transform_indices = @transform_11, window_bounds = array<i64: 32, 64>}, {pipeline_mode = #tpu.pipeline_mode<synchronous>, transform_indices = @transform_12, window_bounds = array<i64: 1, 64>}, {pipeline_mode = #tpu.pipeline_mode<synchronous>, transform_indices = @transform_13, window_bounds = array<i64: 64, 64>}, {pipeline_mode = #tpu.pipeline_mode<synchronous>, transform_indices = @transform_14, window_bounds = array<i64: 1, 64>}, {pipeline_mode = #tpu.pipeline_mode<synchronous>, transform_indices = @transform_15, window_bounds = array<i64: 1, 64>}, {pipeline_mode = #tpu.pipeline_mode<synchronous>, transform_indices = @transform_16, window_bounds = array<i64: 32, 64>}, {pipeline_mode = #tpu.pipeline_mode<synchronous>, transform_indices = @transform_17, window_bounds = array<i64: 1, 64>}, {pipeline_mode = #tpu.pipeline_mode<synchronous>, transform_indices = @transform_18, window_bounds = array<i64: 1, 64>}, {transform_indices = @transform_19, window_bounds = array<i64: 1, 64, 64>}]} {
    %c0 = arith.constant 0 : index
    %c0_0 = arith.constant 0 : index
    %c0_1 = arith.constant 0 : index
    %0 = vector.load %arg1[%c0, %c0_0, %c0_1] : memref<1x64x32xbf16, #tpu.memory_space<vmem>>, vector<1x64x32xbf16>
    %1 = vector.shape_cast %0 : vector<1x64x32xbf16> to vector<64x32xbf16>
    %c0_2 = arith.constant 0 : index
    %c0_3 = arith.constant 0 : index
    %2 = vector.load %arg2[%c0_2, %c0_3] : memref<32x16xbf16, #tpu.memory_space<vmem>>, vector<32x16xbf16>
    %cst = arith.constant dense<0.000000e+00> : vector<64x16xf32>
    %3 = tpu.matmul %1, %2, %cst {dimension_numbers = #tpu.dot_dimension_numbers<[1], [0], [0], [1], [0, 0, 1, 1], [], []>} : vector<64x32xbf16>, vector<32x16xbf16>, vector<64x16xf32> -> vector<64x16xf32>
    %c0_4 = arith.constant 0 : index
    %c0_5 = arith.constant 0 : index
    %4 = vector.load %arg3[%c0_4, %c0_5] : memref<1x16xf32, #tpu.memory_space<vmem>>, vector<1x16xf32>
    %5 = vector.broadcast %4 : vector<1x16xf32> to vector<64x16xf32>
    %6 = arith.mulf %3, %5 : vector<64x16xf32>
    %c0_6 = arith.constant 0 : index
    %c0_7 = arith.constant 0 : index
    %7 = vector.load %arg4[%c0_6, %c0_7] : memref<1x16xf32, #tpu.memory_space<vmem>>, vector<1x16xf32>
    %8 = vector.broadcast %7 : vector<1x16xf32> to vector<64x16xf32>
    %9 = arith.addf %6, %8 : vector<64x16xf32>
    %cst_8 = arith.constant 0.000000e+00 : f32
    %10 = vector.broadcast %cst_8 : f32 to vector<64x16xf32>
    %11 = arith.maximumf %9, %10 : vector<64x16xf32>
    %c0_9 = arith.constant 0 : index
    %c0_10 = arith.constant 0 : index
    %12 = vector.load %arg7[%c0_9, %c0_10] : memref<576x64xbf16, #tpu.memory_space<vmem>>, vector<576x64xbf16>
    %13 = arith.truncf %11 : vector<64x16xf32> to vector<64x16xbf16>
    %c0_11 = arith.constant 0 : index
    %c0_12 = arith.constant 0 : index
    %14 = vector.load %arg5[%c0_11, %c0_12] : memref<16x64xbf16, #tpu.memory_space<vmem>>, vector<16x64xbf16>
    %cst_13 = arith.constant dense<0.000000e+00> : vector<64x64xf32>
    %15 = tpu.matmul %13, %14, %cst_13 {dimension_numbers = #tpu.dot_dimension_numbers<[1], [0], [0], [1], [0, 0, 1, 1], [], []>} : vector<64x16xbf16>, vector<16x64xbf16>, vector<64x64xf32> -> vector<64x64xf32>
    %16 = arith.truncf %15 : vector<64x64xf32> to vector<64x64xbf16>
    %cst_14 = arith.constant dense<0.000000e+00> : vector<576x64xf32>
    %17 = tpu.matmul %12, %16, %cst_14 {dimension_numbers = #tpu.dot_dimension_numbers<[1], [0], [0], [1], [0, 0, 1, 1], [], []>} : vector<576x64xbf16>, vector<64x64xbf16>, vector<576x64xf32> -> vector<576x64xf32>
    %cst_15 = arith.constant 0.000000e+00 : f32
    %18 = vector.broadcast %cst_15 : f32 to vector<64x64xf32>
    %19 = vector.extract_strided_slice %17 {offsets = [0, 0], sizes = [64, 64], strides = [1, 1]} : vector<576x64xf32> to vector<64x64xf32>
    %c0_16 = arith.constant 0 : index
    %c0_17 = arith.constant 0 : index
    %20 = vector.load %arg8[%c0_16, %c0_17] : memref<36x64xf32, #tpu.memory_space<vmem>>, vector<1x64xf32>
    %21 = vector.broadcast %20 : vector<1x64xf32> to vector<64x64xf32>
    %22 = arith.mulf %19, %21 : vector<64x64xf32>
    %23 = arith.addf %18, %22 : vector<64x64xf32>
    %24 = vector.extract_strided_slice %17 {offsets = [64, 0], sizes = [64, 64], strides = [1, 1]} : vector<576x64xf32> to vector<64x64xf32>
    %c1 = arith.constant 1 : index
    %c0_18 = arith.constant 0 : index
    %25 = vector.load %arg8[%c1, %c0_18] : memref<36x64xf32, #tpu.memory_space<vmem>>, vector<1x64xf32>
    %26 = vector.broadcast %25 : vector<1x64xf32> to vector<64x64xf32>
    %27 = arith.mulf %24, %26 : vector<64x64xf32>
    %28 = arith.addf %23, %27 : vector<64x64xf32>
    %29 = vector.extract_strided_slice %17 {offsets = [128, 0], sizes = [64, 64], strides = [1, 1]} : vector<576x64xf32> to vector<64x64xf32>
    %c2 = arith.constant 2 : index
    %c0_19 = arith.constant 0 : index
    %30 = vector.load %arg8[%c2, %c0_19] : memref<36x64xf32, #tpu.memory_space<vmem>>, vector<1x64xf32>
    %31 = vector.broadcast %30 : vector<1x64xf32> to vector<64x64xf32>
    %32 = arith.mulf %29, %31 : vector<64x64xf32>
    %33 = arith.addf %28, %32 : vector<64x64xf32>
    %34 = vector.extract_strided_slice %17 {offsets = [192, 0], sizes = [64, 64], strides = [1, 1]} : vector<576x64xf32> to vector<64x64xf32>
    %c3 = arith.constant 3 : index
    %c0_20 = arith.constant 0 : index
    %35 = vector.load %arg8[%c3, %c0_20] : memref<36x64xf32, #tpu.memory_space<vmem>>, vector<1x64xf32>
    %36 = vector.broadcast %35 : vector<1x64xf32> to vector<64x64xf32>
    %37 = arith.mulf %34, %36 : vector<64x64xf32>
    %38 = arith.addf %33, %37 : vector<64x64xf32>
    %39 = vector.extract_strided_slice %17 {offsets = [256, 0], sizes = [64, 64], strides = [1, 1]} : vector<576x64xf32> to vector<64x64xf32>
    %c4 = arith.constant 4 : index
    %c0_21 = arith.constant 0 : index
    %40 = vector.load %arg8[%c4, %c0_21] : memref<36x64xf32, #tpu.memory_space<vmem>>, vector<1x64xf32>
    %41 = vector.broadcast %40 : vector<1x64xf32> to vector<64x64xf32>
    %42 = arith.mulf %39, %41 : vector<64x64xf32>
    %43 = arith.addf %38, %42 : vector<64x64xf32>
    %44 = vector.extract_strided_slice %17 {offsets = [320, 0], sizes = [64, 64], strides = [1, 1]} : vector<576x64xf32> to vector<64x64xf32>
    %c5 = arith.constant 5 : index
    %c0_22 = arith.constant 0 : index
    %45 = vector.load %arg8[%c5, %c0_22] : memref<36x64xf32, #tpu.memory_space<vmem>>, vector<1x64xf32>
    %46 = vector.broadcast %45 : vector<1x64xf32> to vector<64x64xf32>
    %47 = arith.mulf %44, %46 : vector<64x64xf32>
    %48 = arith.addf %43, %47 : vector<64x64xf32>
    %49 = vector.extract_strided_slice %17 {offsets = [384, 0], sizes = [64, 64], strides = [1, 1]} : vector<576x64xf32> to vector<64x64xf32>
    %c6 = arith.constant 6 : index
    %c0_23 = arith.constant 0 : index
    %50 = vector.load %arg8[%c6, %c0_23] : memref<36x64xf32, #tpu.memory_space<vmem>>, vector<1x64xf32>
    %51 = vector.broadcast %50 : vector<1x64xf32> to vector<64x64xf32>
    %52 = arith.mulf %49, %51 : vector<64x64xf32>
    %53 = arith.addf %48, %52 : vector<64x64xf32>
    %54 = vector.extract_strided_slice %17 {offsets = [448, 0], sizes = [64, 64], strides = [1, 1]} : vector<576x64xf32> to vector<64x64xf32>
    %c7 = arith.constant 7 : index
    %c0_24 = arith.constant 0 : index
    %55 = vector.load %arg8[%c7, %c0_24] : memref<36x64xf32, #tpu.memory_space<vmem>>, vector<1x64xf32>
    %56 = vector.broadcast %55 : vector<1x64xf32> to vector<64x64xf32>
    %57 = arith.mulf %54, %56 : vector<64x64xf32>
    %58 = arith.addf %53, %57 : vector<64x64xf32>
    %59 = vector.extract_strided_slice %17 {offsets = [512, 0], sizes = [64, 64], strides = [1, 1]} : vector<576x64xf32> to vector<64x64xf32>
    %c8 = arith.constant 8 : index
    %c0_25 = arith.constant 0 : index
    %60 = vector.load %arg8[%c8, %c0_25] : memref<36x64xf32, #tpu.memory_space<vmem>>, vector<1x64xf32>
    %61 = vector.broadcast %60 : vector<1x64xf32> to vector<64x64xf32>
    %62 = arith.mulf %59, %61 : vector<64x64xf32>
    %63 = arith.addf %58, %62 : vector<64x64xf32>
    %c0_26 = arith.constant 0 : index
    %c0_27 = arith.constant 0 : index
    %64 = vector.load %arg9[%c0_26, %c0_27] : memref<4x64xf32, #tpu.memory_space<vmem>>, vector<1x64xf32>
    %65 = vector.broadcast %64 : vector<1x64xf32> to vector<64x64xf32>
    %66 = arith.addf %63, %65 : vector<64x64xf32>
    %cst_28 = arith.constant 0.000000e+00 : f32
    %67 = vector.broadcast %cst_28 : f32 to vector<64x64xf32>
    %68 = arith.maximumf %66, %67 : vector<64x64xf32>
    %69 = arith.truncf %68 : vector<64x64xf32> to vector<64x64xbf16>
    %c0_29 = arith.constant 0 : index
    %c0_30 = arith.constant 0 : index
    %c0_31 = arith.constant 0 : index
    %70 = vector.load %arg6[%c0_29, %c0_30, %c0_31] : memref<3x64x64xbf16, #tpu.memory_space<vmem>>, vector<1x64x64xbf16>
    %71 = vector.shape_cast %70 : vector<1x64x64xbf16> to vector<64x64xbf16>
    %cst_32 = arith.constant dense<0.000000e+00> : vector<64x64xf32>
    %72 = tpu.matmul %69, %71, %cst_32 {dimension_numbers = #tpu.dot_dimension_numbers<[1], [0], [0], [1], [0, 0, 1, 1], [], []>} : vector<64x64xbf16>, vector<64x64xbf16>, vector<64x64xf32> -> vector<64x64xf32>
    %73 = arith.truncf %72 : vector<64x64xf32> to vector<64x64xbf16>
    %cst_33 = arith.constant dense<0.000000e+00> : vector<576x64xf32>
    %74 = tpu.matmul %12, %73, %cst_33 {dimension_numbers = #tpu.dot_dimension_numbers<[1], [0], [0], [1], [0, 0, 1, 1], [], []>} : vector<576x64xbf16>, vector<64x64xbf16>, vector<576x64xf32> -> vector<576x64xf32>
    %cst_34 = arith.constant 0.000000e+00 : f32
    %75 = vector.broadcast %cst_34 : f32 to vector<64x64xf32>
    %76 = vector.extract_strided_slice %74 {offsets = [0, 0], sizes = [64, 64], strides = [1, 1]} : vector<576x64xf32> to vector<64x64xf32>
    %c9 = arith.constant 9 : index
    %c0_35 = arith.constant 0 : index
    %77 = vector.load %arg8[%c9, %c0_35] : memref<36x64xf32, #tpu.memory_space<vmem>>, vector<1x64xf32>
    %78 = vector.broadcast %77 : vector<1x64xf32> to vector<64x64xf32>
    %79 = arith.mulf %76, %78 : vector<64x64xf32>
    %80 = arith.addf %75, %79 : vector<64x64xf32>
    %81 = vector.extract_strided_slice %74 {offsets = [64, 0], sizes = [64, 64], strides = [1, 1]} : vector<576x64xf32> to vector<64x64xf32>
    %c10 = arith.constant 10 : index
    %c0_36 = arith.constant 0 : index
    %82 = vector.load %arg8[%c10, %c0_36] : memref<36x64xf32, #tpu.memory_space<vmem>>, vector<1x64xf32>
    %83 = vector.broadcast %82 : vector<1x64xf32> to vector<64x64xf32>
    %84 = arith.mulf %81, %83 : vector<64x64xf32>
    %85 = arith.addf %80, %84 : vector<64x64xf32>
    %86 = vector.extract_strided_slice %74 {offsets = [128, 0], sizes = [64, 64], strides = [1, 1]} : vector<576x64xf32> to vector<64x64xf32>
    %c11 = arith.constant 11 : index
    %c0_37 = arith.constant 0 : index
    %87 = vector.load %arg8[%c11, %c0_37] : memref<36x64xf32, #tpu.memory_space<vmem>>, vector<1x64xf32>
    %88 = vector.broadcast %87 : vector<1x64xf32> to vector<64x64xf32>
    %89 = arith.mulf %86, %88 : vector<64x64xf32>
    %90 = arith.addf %85, %89 : vector<64x64xf32>
    %91 = vector.extract_strided_slice %74 {offsets = [192, 0], sizes = [64, 64], strides = [1, 1]} : vector<576x64xf32> to vector<64x64xf32>
    %c12 = arith.constant 12 : index
    %c0_38 = arith.constant 0 : index
    %92 = vector.load %arg8[%c12, %c0_38] : memref<36x64xf32, #tpu.memory_space<vmem>>, vector<1x64xf32>
    %93 = vector.broadcast %92 : vector<1x64xf32> to vector<64x64xf32>
    %94 = arith.mulf %91, %93 : vector<64x64xf32>
    %95 = arith.addf %90, %94 : vector<64x64xf32>
    %96 = vector.extract_strided_slice %74 {offsets = [256, 0], sizes = [64, 64], strides = [1, 1]} : vector<576x64xf32> to vector<64x64xf32>
    %c13 = arith.constant 13 : index
    %c0_39 = arith.constant 0 : index
    %97 = vector.load %arg8[%c13, %c0_39] : memref<36x64xf32, #tpu.memory_space<vmem>>, vector<1x64xf32>
    %98 = vector.broadcast %97 : vector<1x64xf32> to vector<64x64xf32>
    %99 = arith.mulf %96, %98 : vector<64x64xf32>
    %100 = arith.addf %95, %99 : vector<64x64xf32>
    %101 = vector.extract_strided_slice %74 {offsets = [320, 0], sizes = [64, 64], strides = [1, 1]} : vector<576x64xf32> to vector<64x64xf32>
    %c14 = arith.constant 14 : index
    %c0_40 = arith.constant 0 : index
    %102 = vector.load %arg8[%c14, %c0_40] : memref<36x64xf32, #tpu.memory_space<vmem>>, vector<1x64xf32>
    %103 = vector.broadcast %102 : vector<1x64xf32> to vector<64x64xf32>
    %104 = arith.mulf %101, %103 : vector<64x64xf32>
    %105 = arith.addf %100, %104 : vector<64x64xf32>
    %106 = vector.extract_strided_slice %74 {offsets = [384, 0], sizes = [64, 64], strides = [1, 1]} : vector<576x64xf32> to vector<64x64xf32>
    %c15 = arith.constant 15 : index
    %c0_41 = arith.constant 0 : index
    %107 = vector.load %arg8[%c15, %c0_41] : memref<36x64xf32, #tpu.memory_space<vmem>>, vector<1x64xf32>
    %108 = vector.broadcast %107 : vector<1x64xf32> to vector<64x64xf32>
    %109 = arith.mulf %106, %108 : vector<64x64xf32>
    %110 = arith.addf %105, %109 : vector<64x64xf32>
    %111 = vector.extract_strided_slice %74 {offsets = [448, 0], sizes = [64, 64], strides = [1, 1]} : vector<576x64xf32> to vector<64x64xf32>
    %c16 = arith.constant 16 : index
    %c0_42 = arith.constant 0 : index
    %112 = vector.load %arg8[%c16, %c0_42] : memref<36x64xf32, #tpu.memory_space<vmem>>, vector<1x64xf32>
    %113 = vector.broadcast %112 : vector<1x64xf32> to vector<64x64xf32>
    %114 = arith.mulf %111, %113 : vector<64x64xf32>
    %115 = arith.addf %110, %114 : vector<64x64xf32>
    %116 = vector.extract_strided_slice %74 {offsets = [512, 0], sizes = [64, 64], strides = [1, 1]} : vector<576x64xf32> to vector<64x64xf32>
    %c17 = arith.constant 17 : index
    %c0_43 = arith.constant 0 : index
    %117 = vector.load %arg8[%c17, %c0_43] : memref<36x64xf32, #tpu.memory_space<vmem>>, vector<1x64xf32>
    %118 = vector.broadcast %117 : vector<1x64xf32> to vector<64x64xf32>
    %119 = arith.mulf %116, %118 : vector<64x64xf32>
    %120 = arith.addf %115, %119 : vector<64x64xf32>
    %c1_44 = arith.constant 1 : index
    %c0_45 = arith.constant 0 : index
    %121 = vector.load %arg9[%c1_44, %c0_45] : memref<4x64xf32, #tpu.memory_space<vmem>>, vector<1x64xf32>
    %122 = vector.broadcast %121 : vector<1x64xf32> to vector<64x64xf32>
    %123 = arith.addf %120, %122 : vector<64x64xf32>
    %cst_46 = arith.constant 0.000000e+00 : f32
    %124 = vector.broadcast %cst_46 : f32 to vector<64x64xf32>
    %125 = arith.maximumf %123, %124 : vector<64x64xf32>
    %126 = arith.truncf %125 : vector<64x64xf32> to vector<64x64xbf16>
    %c1_47 = arith.constant 1 : index
    %c0_48 = arith.constant 0 : index
    %c0_49 = arith.constant 0 : index
    %127 = vector.load %arg6[%c1_47, %c0_48, %c0_49] : memref<3x64x64xbf16, #tpu.memory_space<vmem>>, vector<1x64x64xbf16>
    %128 = vector.shape_cast %127 : vector<1x64x64xbf16> to vector<64x64xbf16>
    %cst_50 = arith.constant dense<0.000000e+00> : vector<64x64xf32>
    %129 = tpu.matmul %126, %128, %cst_50 {dimension_numbers = #tpu.dot_dimension_numbers<[1], [0], [0], [1], [0, 0, 1, 1], [], []>} : vector<64x64xbf16>, vector<64x64xbf16>, vector<64x64xf32> -> vector<64x64xf32>
    %130 = arith.truncf %129 : vector<64x64xf32> to vector<64x64xbf16>
    %cst_51 = arith.constant dense<0.000000e+00> : vector<576x64xf32>
    %131 = tpu.matmul %12, %130, %cst_51 {dimension_numbers = #tpu.dot_dimension_numbers<[1], [0], [0], [1], [0, 0, 1, 1], [], []>} : vector<576x64xbf16>, vector<64x64xbf16>, vector<576x64xf32> -> vector<576x64xf32>
    %cst_52 = arith.constant 0.000000e+00 : f32
    %132 = vector.broadcast %cst_52 : f32 to vector<64x64xf32>
    %133 = vector.extract_strided_slice %131 {offsets = [0, 0], sizes = [64, 64], strides = [1, 1]} : vector<576x64xf32> to vector<64x64xf32>
    %c18 = arith.constant 18 : index
    %c0_53 = arith.constant 0 : index
    %134 = vector.load %arg8[%c18, %c0_53] : memref<36x64xf32, #tpu.memory_space<vmem>>, vector<1x64xf32>
    %135 = vector.broadcast %134 : vector<1x64xf32> to vector<64x64xf32>
    %136 = arith.mulf %133, %135 : vector<64x64xf32>
    %137 = arith.addf %132, %136 : vector<64x64xf32>
    %138 = vector.extract_strided_slice %131 {offsets = [64, 0], sizes = [64, 64], strides = [1, 1]} : vector<576x64xf32> to vector<64x64xf32>
    %c19 = arith.constant 19 : index
    %c0_54 = arith.constant 0 : index
    %139 = vector.load %arg8[%c19, %c0_54] : memref<36x64xf32, #tpu.memory_space<vmem>>, vector<1x64xf32>
    %140 = vector.broadcast %139 : vector<1x64xf32> to vector<64x64xf32>
    %141 = arith.mulf %138, %140 : vector<64x64xf32>
    %142 = arith.addf %137, %141 : vector<64x64xf32>
    %143 = vector.extract_strided_slice %131 {offsets = [128, 0], sizes = [64, 64], strides = [1, 1]} : vector<576x64xf32> to vector<64x64xf32>
    %c20 = arith.constant 20 : index
    %c0_55 = arith.constant 0 : index
    %144 = vector.load %arg8[%c20, %c0_55] : memref<36x64xf32, #tpu.memory_space<vmem>>, vector<1x64xf32>
    %145 = vector.broadcast %144 : vector<1x64xf32> to vector<64x64xf32>
    %146 = arith.mulf %143, %145 : vector<64x64xf32>
    %147 = arith.addf %142, %146 : vector<64x64xf32>
    %148 = vector.extract_strided_slice %131 {offsets = [192, 0], sizes = [64, 64], strides = [1, 1]} : vector<576x64xf32> to vector<64x64xf32>
    %c21 = arith.constant 21 : index
    %c0_56 = arith.constant 0 : index
    %149 = vector.load %arg8[%c21, %c0_56] : memref<36x64xf32, #tpu.memory_space<vmem>>, vector<1x64xf32>
    %150 = vector.broadcast %149 : vector<1x64xf32> to vector<64x64xf32>
    %151 = arith.mulf %148, %150 : vector<64x64xf32>
    %152 = arith.addf %147, %151 : vector<64x64xf32>
    %153 = vector.extract_strided_slice %131 {offsets = [256, 0], sizes = [64, 64], strides = [1, 1]} : vector<576x64xf32> to vector<64x64xf32>
    %c22 = arith.constant 22 : index
    %c0_57 = arith.constant 0 : index
    %154 = vector.load %arg8[%c22, %c0_57] : memref<36x64xf32, #tpu.memory_space<vmem>>, vector<1x64xf32>
    %155 = vector.broadcast %154 : vector<1x64xf32> to vector<64x64xf32>
    %156 = arith.mulf %153, %155 : vector<64x64xf32>
    %157 = arith.addf %152, %156 : vector<64x64xf32>
    %158 = vector.extract_strided_slice %131 {offsets = [320, 0], sizes = [64, 64], strides = [1, 1]} : vector<576x64xf32> to vector<64x64xf32>
    %c23 = arith.constant 23 : index
    %c0_58 = arith.constant 0 : index
    %159 = vector.load %arg8[%c23, %c0_58] : memref<36x64xf32, #tpu.memory_space<vmem>>, vector<1x64xf32>
    %160 = vector.broadcast %159 : vector<1x64xf32> to vector<64x64xf32>
    %161 = arith.mulf %158, %160 : vector<64x64xf32>
    %162 = arith.addf %157, %161 : vector<64x64xf32>
    %163 = vector.extract_strided_slice %131 {offsets = [384, 0], sizes = [64, 64], strides = [1, 1]} : vector<576x64xf32> to vector<64x64xf32>
    %c24 = arith.constant 24 : index
    %c0_59 = arith.constant 0 : index
    %164 = vector.load %arg8[%c24, %c0_59] : memref<36x64xf32, #tpu.memory_space<vmem>>, vector<1x64xf32>
    %165 = vector.broadcast %164 : vector<1x64xf32> to vector<64x64xf32>
    %166 = arith.mulf %163, %165 : vector<64x64xf32>
    %167 = arith.addf %162, %166 : vector<64x64xf32>
    %168 = vector.extract_strided_slice %131 {offsets = [448, 0], sizes = [64, 64], strides = [1, 1]} : vector<576x64xf32> to vector<64x64xf32>
    %c25 = arith.constant 25 : index
    %c0_60 = arith.constant 0 : index
    %169 = vector.load %arg8[%c25, %c0_60] : memref<36x64xf32, #tpu.memory_space<vmem>>, vector<1x64xf32>
    %170 = vector.broadcast %169 : vector<1x64xf32> to vector<64x64xf32>
    %171 = arith.mulf %168, %170 : vector<64x64xf32>
    %172 = arith.addf %167, %171 : vector<64x64xf32>
    %173 = vector.extract_strided_slice %131 {offsets = [512, 0], sizes = [64, 64], strides = [1, 1]} : vector<576x64xf32> to vector<64x64xf32>
    %c26 = arith.constant 26 : index
    %c0_61 = arith.constant 0 : index
    %174 = vector.load %arg8[%c26, %c0_61] : memref<36x64xf32, #tpu.memory_space<vmem>>, vector<1x64xf32>
    %175 = vector.broadcast %174 : vector<1x64xf32> to vector<64x64xf32>
    %176 = arith.mulf %173, %175 : vector<64x64xf32>
    %177 = arith.addf %172, %176 : vector<64x64xf32>
    %c2_62 = arith.constant 2 : index
    %c0_63 = arith.constant 0 : index
    %178 = vector.load %arg9[%c2_62, %c0_63] : memref<4x64xf32, #tpu.memory_space<vmem>>, vector<1x64xf32>
    %179 = vector.broadcast %178 : vector<1x64xf32> to vector<64x64xf32>
    %180 = arith.addf %177, %179 : vector<64x64xf32>
    %cst_64 = arith.constant 0.000000e+00 : f32
    %181 = vector.broadcast %cst_64 : f32 to vector<64x64xf32>
    %182 = arith.maximumf %180, %181 : vector<64x64xf32>
    %183 = arith.truncf %182 : vector<64x64xf32> to vector<64x64xbf16>
    %c2_65 = arith.constant 2 : index
    %c0_66 = arith.constant 0 : index
    %c0_67 = arith.constant 0 : index
    %184 = vector.load %arg6[%c2_65, %c0_66, %c0_67] : memref<3x64x64xbf16, #tpu.memory_space<vmem>>, vector<1x64x64xbf16>
    %185 = vector.shape_cast %184 : vector<1x64x64xbf16> to vector<64x64xbf16>
    %cst_68 = arith.constant dense<0.000000e+00> : vector<64x64xf32>
    %186 = tpu.matmul %183, %185, %cst_68 {dimension_numbers = #tpu.dot_dimension_numbers<[1], [0], [0], [1], [0, 0, 1, 1], [], []>} : vector<64x64xbf16>, vector<64x64xbf16>, vector<64x64xf32> -> vector<64x64xf32>
    %187 = arith.truncf %186 : vector<64x64xf32> to vector<64x64xbf16>
    %cst_69 = arith.constant dense<0.000000e+00> : vector<576x64xf32>
    %188 = tpu.matmul %12, %187, %cst_69 {dimension_numbers = #tpu.dot_dimension_numbers<[1], [0], [0], [1], [0, 0, 1, 1], [], []>} : vector<576x64xbf16>, vector<64x64xbf16>, vector<576x64xf32> -> vector<576x64xf32>
    %cst_70 = arith.constant 0.000000e+00 : f32
    %189 = vector.broadcast %cst_70 : f32 to vector<64x64xf32>
    %190 = vector.extract_strided_slice %188 {offsets = [0, 0], sizes = [64, 64], strides = [1, 1]} : vector<576x64xf32> to vector<64x64xf32>
    %c27 = arith.constant 27 : index
    %c0_71 = arith.constant 0 : index
    %191 = vector.load %arg8[%c27, %c0_71] : memref<36x64xf32, #tpu.memory_space<vmem>>, vector<1x64xf32>
    %192 = vector.broadcast %191 : vector<1x64xf32> to vector<64x64xf32>
    %193 = arith.mulf %190, %192 : vector<64x64xf32>
    %194 = arith.addf %189, %193 : vector<64x64xf32>
    %195 = vector.extract_strided_slice %188 {offsets = [64, 0], sizes = [64, 64], strides = [1, 1]} : vector<576x64xf32> to vector<64x64xf32>
    %c28 = arith.constant 28 : index
    %c0_72 = arith.constant 0 : index
    %196 = vector.load %arg8[%c28, %c0_72] : memref<36x64xf32, #tpu.memory_space<vmem>>, vector<1x64xf32>
    %197 = vector.broadcast %196 : vector<1x64xf32> to vector<64x64xf32>
    %198 = arith.mulf %195, %197 : vector<64x64xf32>
    %199 = arith.addf %194, %198 : vector<64x64xf32>
    %200 = vector.extract_strided_slice %188 {offsets = [128, 0], sizes = [64, 64], strides = [1, 1]} : vector<576x64xf32> to vector<64x64xf32>
    %c29 = arith.constant 29 : index
    %c0_73 = arith.constant 0 : index
    %201 = vector.load %arg8[%c29, %c0_73] : memref<36x64xf32, #tpu.memory_space<vmem>>, vector<1x64xf32>
    %202 = vector.broadcast %201 : vector<1x64xf32> to vector<64x64xf32>
    %203 = arith.mulf %200, %202 : vector<64x64xf32>
    %204 = arith.addf %199, %203 : vector<64x64xf32>
    %205 = vector.extract_strided_slice %188 {offsets = [192, 0], sizes = [64, 64], strides = [1, 1]} : vector<576x64xf32> to vector<64x64xf32>
    %c30 = arith.constant 30 : index
    %c0_74 = arith.constant 0 : index
    %206 = vector.load %arg8[%c30, %c0_74] : memref<36x64xf32, #tpu.memory_space<vmem>>, vector<1x64xf32>
    %207 = vector.broadcast %206 : vector<1x64xf32> to vector<64x64xf32>
    %208 = arith.mulf %205, %207 : vector<64x64xf32>
    %209 = arith.addf %204, %208 : vector<64x64xf32>
    %210 = vector.extract_strided_slice %188 {offsets = [256, 0], sizes = [64, 64], strides = [1, 1]} : vector<576x64xf32> to vector<64x64xf32>
    %c31 = arith.constant 31 : index
    %c0_75 = arith.constant 0 : index
    %211 = vector.load %arg8[%c31, %c0_75] : memref<36x64xf32, #tpu.memory_space<vmem>>, vector<1x64xf32>
    %212 = vector.broadcast %211 : vector<1x64xf32> to vector<64x64xf32>
    %213 = arith.mulf %210, %212 : vector<64x64xf32>
    %214 = arith.addf %209, %213 : vector<64x64xf32>
    %215 = vector.extract_strided_slice %188 {offsets = [320, 0], sizes = [64, 64], strides = [1, 1]} : vector<576x64xf32> to vector<64x64xf32>
    %c32 = arith.constant 32 : index
    %c0_76 = arith.constant 0 : index
    %216 = vector.load %arg8[%c32, %c0_76] : memref<36x64xf32, #tpu.memory_space<vmem>>, vector<1x64xf32>
    %217 = vector.broadcast %216 : vector<1x64xf32> to vector<64x64xf32>
    %218 = arith.mulf %215, %217 : vector<64x64xf32>
    %219 = arith.addf %214, %218 : vector<64x64xf32>
    %220 = vector.extract_strided_slice %188 {offsets = [384, 0], sizes = [64, 64], strides = [1, 1]} : vector<576x64xf32> to vector<64x64xf32>
    %c33 = arith.constant 33 : index
    %c0_77 = arith.constant 0 : index
    %221 = vector.load %arg8[%c33, %c0_77] : memref<36x64xf32, #tpu.memory_space<vmem>>, vector<1x64xf32>
    %222 = vector.broadcast %221 : vector<1x64xf32> to vector<64x64xf32>
    %223 = arith.mulf %220, %222 : vector<64x64xf32>
    %224 = arith.addf %219, %223 : vector<64x64xf32>
    %225 = vector.extract_strided_slice %188 {offsets = [448, 0], sizes = [64, 64], strides = [1, 1]} : vector<576x64xf32> to vector<64x64xf32>
    %c34 = arith.constant 34 : index
    %c0_78 = arith.constant 0 : index
    %226 = vector.load %arg8[%c34, %c0_78] : memref<36x64xf32, #tpu.memory_space<vmem>>, vector<1x64xf32>
    %227 = vector.broadcast %226 : vector<1x64xf32> to vector<64x64xf32>
    %228 = arith.mulf %225, %227 : vector<64x64xf32>
    %229 = arith.addf %224, %228 : vector<64x64xf32>
    %230 = vector.extract_strided_slice %188 {offsets = [512, 0], sizes = [64, 64], strides = [1, 1]} : vector<576x64xf32> to vector<64x64xf32>
    %c35 = arith.constant 35 : index
    %c0_79 = arith.constant 0 : index
    %231 = vector.load %arg8[%c35, %c0_79] : memref<36x64xf32, #tpu.memory_space<vmem>>, vector<1x64xf32>
    %232 = vector.broadcast %231 : vector<1x64xf32> to vector<64x64xf32>
    %233 = arith.mulf %230, %232 : vector<64x64xf32>
    %234 = arith.addf %229, %233 : vector<64x64xf32>
    %c3_80 = arith.constant 3 : index
    %c0_81 = arith.constant 0 : index
    %235 = vector.load %arg9[%c3_80, %c0_81] : memref<4x64xf32, #tpu.memory_space<vmem>>, vector<1x64xf32>
    %236 = vector.broadcast %235 : vector<1x64xf32> to vector<64x64xf32>
    %237 = arith.addf %234, %236 : vector<64x64xf32>
    %cst_82 = arith.constant 0.000000e+00 : f32
    %238 = vector.broadcast %cst_82 : f32 to vector<64x64xf32>
    %239 = arith.maximumf %237, %238 : vector<64x64xf32>
    %cst_83 = arith.constant dense<0.000000e+00> : vector<64xf32>
    %240 = vector.multi_reduction <add>, %239, %cst_83 [0] : vector<64x64xf32> to vector<64xf32>
    %241 = vector.shape_cast %240 : vector<64xf32> to vector<1x64xf32>
    %cst_84 = arith.constant 6.400000e+01 : f32
    %242 = vector.broadcast %cst_84 : f32 to vector<1x64xf32>
    %243 = arith.divf %241, %242 : vector<1x64xf32>
    %c0_85 = arith.constant 0 : index
    %c0_86 = arith.constant 0 : index
    %244 = vector.load %arg10[%c0_85, %c0_86] : memref<64x32xf32, #tpu.memory_space<vmem>>, vector<64x32xf32>
    %cst_87 = arith.constant dense<0.000000e+00> : vector<1x32xf32>
    %245 = tpu.matmul %243, %244, %cst_87 {dimension_numbers = #tpu.dot_dimension_numbers<[1], [0], [0], [1], [0, 0, 1, 1], [], []>} : vector<1x64xf32>, vector<64x32xf32>, vector<1x32xf32> -> vector<1x32xf32>
    %c0_88 = arith.constant 0 : index
    %c0_89 = arith.constant 0 : index
    %246 = vector.load %arg11[%c0_88, %c0_89] : memref<1x32xf32, #tpu.memory_space<vmem>>, vector<1x32xf32>
    %247 = arith.addf %245, %246 : vector<1x32xf32>
    %cst_90 = arith.constant 0.000000e+00 : f32
    %248 = vector.broadcast %cst_90 : f32 to vector<1x32xf32>
    %249 = arith.maximumf %247, %248 : vector<1x32xf32>
    %c0_91 = arith.constant 0 : index
    %c0_92 = arith.constant 0 : index
    %250 = vector.load %arg12[%c0_91, %c0_92] : memref<32x64xf32, #tpu.memory_space<vmem>>, vector<32x64xf32>
    %cst_93 = arith.constant dense<0.000000e+00> : vector<1x64xf32>
    %251 = tpu.matmul %249, %250, %cst_93 {dimension_numbers = #tpu.dot_dimension_numbers<[1], [0], [0], [1], [0, 0, 1, 1], [], []>} : vector<1x32xf32>, vector<32x64xf32>, vector<1x64xf32> -> vector<1x64xf32>
    %c0_94 = arith.constant 0 : index
    %c0_95 = arith.constant 0 : index
    %252 = vector.load %arg13[%c0_94, %c0_95] : memref<1x64xf32, #tpu.memory_space<vmem>>, vector<1x64xf32>
    %253 = arith.addf %251, %252 : vector<1x64xf32>
    %254 = arith.negf %253 : vector<1x64xf32>
    %255 = math.exp %254 : vector<1x64xf32>
    %cst_96 = arith.constant 1.000000e+00 : f32
    %256 = vector.broadcast %cst_96 : f32 to vector<1x64xf32>
    %257 = arith.addf %256, %255 : vector<1x64xf32>
    %258 = arith.divf %256, %257 : vector<1x64xf32>
    %259 = vector.broadcast %258 : vector<1x64xf32> to vector<64x64xf32>
    %260 = arith.mulf %239, %259 : vector<64x64xf32>
    %261 = arith.truncf %260 : vector<64x64xf32> to vector<64x64xbf16>
    %c0_97 = arith.constant 0 : index
    %c0_98 = arith.constant 0 : index
    %262 = vector.load %arg14[%c0_97, %c0_98] : memref<64x64xbf16, #tpu.memory_space<vmem>>, vector<64x64xbf16>
    %cst_99 = arith.constant dense<0.000000e+00> : vector<64x64xf32>
    %263 = tpu.matmul %261, %262, %cst_99 {dimension_numbers = #tpu.dot_dimension_numbers<[1], [0], [0], [1], [0, 0, 1, 1], [], []>} : vector<64x64xbf16>, vector<64x64xbf16>, vector<64x64xf32> -> vector<64x64xf32>
    %c0_100 = arith.constant 0 : index
    %c0_101 = arith.constant 0 : index
    %264 = vector.load %arg15[%c0_100, %c0_101] : memref<1x64xf32, #tpu.memory_space<vmem>>, vector<1x64xf32>
    %265 = vector.broadcast %264 : vector<1x64xf32> to vector<64x64xf32>
    %266 = arith.mulf %263, %265 : vector<64x64xf32>
    %c0_102 = arith.constant 0 : index
    %c0_103 = arith.constant 0 : index
    %267 = vector.load %arg16[%c0_102, %c0_103] : memref<1x64xf32, #tpu.memory_space<vmem>>, vector<1x64xf32>
    %268 = vector.broadcast %267 : vector<1x64xf32> to vector<64x64xf32>
    %269 = arith.addf %266, %268 : vector<64x64xf32>
    %c0_104 = arith.constant 0 : index
    %c0_105 = arith.constant 0 : index
    %270 = vector.load %arg17[%c0_104, %c0_105] : memref<32x64xbf16, #tpu.memory_space<vmem>>, vector<32x64xbf16>
    %cst_106 = arith.constant dense<0.000000e+00> : vector<64x64xf32>
    %271 = tpu.matmul %1, %270, %cst_106 {dimension_numbers = #tpu.dot_dimension_numbers<[1], [0], [0], [1], [0, 0, 1, 1], [], []>} : vector<64x32xbf16>, vector<32x64xbf16>, vector<64x64xf32> -> vector<64x64xf32>
    %c0_107 = arith.constant 0 : index
    %c0_108 = arith.constant 0 : index
    %272 = vector.load %arg18[%c0_107, %c0_108] : memref<1x64xf32, #tpu.memory_space<vmem>>, vector<1x64xf32>
    %273 = vector.broadcast %272 : vector<1x64xf32> to vector<64x64xf32>
    %274 = arith.mulf %271, %273 : vector<64x64xf32>
    %c0_109 = arith.constant 0 : index
    %c0_110 = arith.constant 0 : index
    %275 = vector.load %arg19[%c0_109, %c0_110] : memref<1x64xf32, #tpu.memory_space<vmem>>, vector<1x64xf32>
    %276 = vector.broadcast %275 : vector<1x64xf32> to vector<64x64xf32>
    %277 = arith.addf %274, %276 : vector<64x64xf32>
    %278 = arith.addf %269, %277 : vector<64x64xf32>
    %cst_111 = arith.constant 0.000000e+00 : f32
    %279 = vector.broadcast %cst_111 : f32 to vector<64x64xf32>
    %280 = arith.maximumf %278, %279 : vector<64x64xf32>
    %c0_112 = arith.constant 0 : index
    %c0_113 = arith.constant 0 : index
    %c0_114 = arith.constant 0 : index
    %281 = vector.load %arg20[%c0_112, %c0_113, %c0_114] : memref<1x64x64xf32, #tpu.memory_space<vmem>>, vector<1x64x64xf32>
    %282 = vector.shape_cast %281 : vector<1x64x64xf32> to vector<64x64xf32>
    %283 = vector.shape_cast %280 : vector<64x64xf32> to vector<1x64x64xf32>
    tpu.vector_store %arg20[%c0_112, %c0_113, %c0_114], %283 {strides = array<i32>} : memref<1x64x64xf32, #tpu.memory_space<vmem>>, vector<1x64x64xf32>,
    return
  }
  func.func @transform_0(%arg0: i32) -> (i32, i32, i32) {
    %c0_i32 = arith.constant 0 : i32
    %c0_i32_0 = arith.constant 0 : i32
    %c0_i32_1 = arith.constant 0 : i32
    return %arg0, %c0_i32, %c0_i32_0 : i32, i32, i32
  }
  func.func @transform_1(%arg0: i32) -> (i32, i32) {
    %c0_i32 = arith.constant 0 : i32
    %c0_i32_0 = arith.constant 0 : i32
    %c0_i32_1 = arith.constant 0 : i32
    return %c0_i32, %c0_i32_0 : i32, i32
  }
  func.func @transform_2(%arg0: i32) -> (i32, i32) {
    %c0_i32 = arith.constant 0 : i32
    %c0_i32_0 = arith.constant 0 : i32
    %c0_i32_1 = arith.constant 0 : i32
    return %c0_i32, %c0_i32_0 : i32, i32
  }
  func.func @transform_3(%arg0: i32) -> (i32, i32) {
    %c0_i32 = arith.constant 0 : i32
    %c0_i32_0 = arith.constant 0 : i32
    %c0_i32_1 = arith.constant 0 : i32
    return %c0_i32, %c0_i32_0 : i32, i32
  }
  func.func @transform_4(%arg0: i32) -> (i32, i32) {
    %c0_i32 = arith.constant 0 : i32
    %c0_i32_0 = arith.constant 0 : i32
    %c0_i32_1 = arith.constant 0 : i32
    return %c0_i32, %c0_i32_0 : i32, i32
  }
  func.func @transform_5(%arg0: i32) -> (i32, i32, i32) {
    %c0_i32 = arith.constant 0 : i32
    %c0_i32_0 = arith.constant 0 : i32
    %c0_i32_1 = arith.constant 0 : i32
    %c0_i32_2 = arith.constant 0 : i32
    return %c0_i32, %c0_i32_0, %c0_i32_1 : i32, i32, i32
  }
  func.func @transform_6(%arg0: i32) -> (i32, i32) {
    %c0_i32 = arith.constant 0 : i32
    %c0_i32_0 = arith.constant 0 : i32
    %c0_i32_1 = arith.constant 0 : i32
    return %c0_i32, %c0_i32_0 : i32, i32
  }
  func.func @transform_7(%arg0: i32) -> (i32, i32) {
    %c0_i32 = arith.constant 0 : i32
    %c0_i32_0 = arith.constant 0 : i32
    %c0_i32_1 = arith.constant 0 : i32
    return %c0_i32, %c0_i32_0 : i32, i32
  }
  func.func @transform_8(%arg0: i32) -> (i32, i32) {
    %c0_i32 = arith.constant 0 : i32
    %c0_i32_0 = arith.constant 0 : i32
    %c0_i32_1 = arith.constant 0 : i32
    return %c0_i32, %c0_i32_0 : i32, i32
  }
  func.func @transform_9(%arg0: i32) -> (i32, i32) {
    %c0_i32 = arith.constant 0 : i32
    %c0_i32_0 = arith.constant 0 : i32
    %c0_i32_1 = arith.constant 0 : i32
    return %c0_i32, %c0_i32_0 : i32, i32
  }
  func.func @transform_10(%arg0: i32) -> (i32, i32) {
    %c0_i32 = arith.constant 0 : i32
    %c0_i32_0 = arith.constant 0 : i32
    %c0_i32_1 = arith.constant 0 : i32
    return %c0_i32, %c0_i32_0 : i32, i32
  }
  func.func @transform_11(%arg0: i32) -> (i32, i32) {
    %c0_i32 = arith.constant 0 : i32
    %c0_i32_0 = arith.constant 0 : i32
    %c0_i32_1 = arith.constant 0 : i32
    return %c0_i32, %c0_i32_0 : i32, i32
  }
  func.func @transform_12(%arg0: i32) -> (i32, i32) {
    %c0_i32 = arith.constant 0 : i32
    %c0_i32_0 = arith.constant 0 : i32
    %c0_i32_1 = arith.constant 0 : i32
    return %c0_i32, %c0_i32_0 : i32, i32
  }
  func.func @transform_13(%arg0: i32) -> (i32, i32) {
    %c0_i32 = arith.constant 0 : i32
    %c0_i32_0 = arith.constant 0 : i32
    %c0_i32_1 = arith.constant 0 : i32
    return %c0_i32, %c0_i32_0 : i32, i32
  }
  func.func @transform_14(%arg0: i32) -> (i32, i32) {
    %c0_i32 = arith.constant 0 : i32
    %c0_i32_0 = arith.constant 0 : i32
    %c0_i32_1 = arith.constant 0 : i32
    return %c0_i32, %c0_i32_0 : i32, i32
  }
  func.func @transform_15(%arg0: i32) -> (i32, i32) {
    %c0_i32 = arith.constant 0 : i32
    %c0_i32_0 = arith.constant 0 : i32
    %c0_i32_1 = arith.constant 0 : i32
    return %c0_i32, %c0_i32_0 : i32, i32
  }
  func.func @transform_16(%arg0: i32) -> (i32, i32) {
    %c0_i32 = arith.constant 0 : i32
    %c0_i32_0 = arith.constant 0 : i32
    %c0_i32_1 = arith.constant 0 : i32
    return %c0_i32, %c0_i32_0 : i32, i32
  }
  func.func @transform_17(%arg0: i32) -> (i32, i32) {
    %c0_i32 = arith.constant 0 : i32
    %c0_i32_0 = arith.constant 0 : i32
    %c0_i32_1 = arith.constant 0 : i32
    return %c0_i32, %c0_i32_0 : i32, i32
  }
  func.func @transform_18(%arg0: i32) -> (i32, i32) {
    %c0_i32 = arith.constant 0 : i32
    %c0_i32_0 = arith.constant 0 : i32
    %c0_i32_1 = arith.constant 0 : i32
    return %c0_i32, %c0_i32_0 : i32, i32
  }
  func.func @transform_19(%arg0: i32) -> (i32, i32, i32) {
    %c0_i32 = arith.constant 0 : i32
    %c0_i32_0 = arith.constant 0 : i32
    %c0_i32_1 = arith.constant 0 : i32
    return %arg0, %c0_i32, %c0_i32_0 : i32, i32, i32
  }
}

</mosaic_0001>

<llo_original>
// kernel: tpu_custom_call.1
$region0: #{tpu_custom_call.1}
  #allocation0 [shape = 'u32[]', space=smem, size = 0x4, offset = 0x4, fixed_abs, tag = 'smem constant byte address 0x4 - core index']
  #allocation1 [shape = 'u32[72,128]{1,0:T(1,128)}', space=vmem, size = 0x9000, scoped, tag = 'internal scratch']
  %s0 = inlined_call_operand.vmem [shape: bf16[2,64,32], index: 0, kind: input, shape index: {}]
  %s1 = inlined_call_operand.vmem [shape: bf16[32,16], index: 1, kind: input, shape index: {}]
  %s2 = inlined_call_operand.vmem [shape: f32[1,16], index: 2, kind: input, shape index: {}]
  %s3 = inlined_call_operand.vmem [shape: f32[1,16], index: 3, kind: input, shape index: {}]
  %s4 = inlined_call_operand.vmem [shape: bf16[16,64], index: 4, kind: input, shape index: {}]
  %s5 = inlined_call_operand.vmem [shape: bf16[3,64,64], index: 5, kind: input, shape index: {}]
  %s6 = inlined_call_operand.vmem [shape: bf16[576,64], index: 6, kind: input, shape index: {}]
  %s7 = inlined_call_operand.vmem [shape: f32[36,64], index: 7, kind: input, shape index: {}]
  %s8 = inlined_call_operand.vmem [shape: f32[4,64], index: 8, kind: input, shape index: {}]
  %s9 = inlined_call_operand.vmem [shape: f32[64,32], index: 9, kind: input, shape index: {}]
  %s10 = inlined_call_operand.vmem [shape: f32[1,32], index: 10, kind: input, shape index: {}]
  %s11 = inlined_call_operand.vmem [shape: f32[32,64], index: 11, kind: input, shape index: {}]
  %s12 = inlined_call_operand.vmem [shape: f32[1,64], index: 12, kind: input, shape index: {}]
  %s13 = inlined_call_operand.vmem [shape: bf16[64,64], index: 13, kind: input, shape index: {}]
  %s14 = inlined_call_operand.vmem [shape: f32[1,64], index: 14, kind: input, shape index: {}]
  %s15 = inlined_call_operand.vmem [shape: f32[1,64], index: 15, kind: input, shape index: {}]
  %s16 = inlined_call_operand.vmem [shape: bf16[32,64], index: 16, kind: input, shape index: {}]
  %s17 = inlined_call_operand.vmem [shape: f32[1,64], index: 17, kind: input, shape index: {}]
  %s18 = inlined_call_operand.vmem [shape: f32[1,64], index: 18, kind: input, shape index: {}]
  %s19 = inlined_call_operand.hbm [shape: f32[2,64,64], index: 19, kind: output, shape index: {}]
  %s20 = sld [smem:[#allocation0]]
  $region109: #{tpu_custom_call.1} parent=0
    _
  %s22 = ssub.s32 1, %s20
  %s23 = scalar_select 0, %s22, %s20
  $region1: #{tpu_custom_call.1} parent=0
    #allocation2 [shape = 'u8[65536]{0}', space=vmem, size = 0x10000, scoped, tag = 'output window, operand 0']
    #allocation3 [shape = 's32[2]{0}', space=sflag, size = 0x8, scoped, tag = 'scoped memory for tpu_custom_call.1']
    %24 = vsyncpa [#allocation3], 0
    %s25 = scalar_lea.sflag [#allocation3], 1
    %26 = vsyncpa %s25, 0
    loop: start=0, step=1, limit=4
    $region2: #{tpu_custom_call.1} parent=1 // loop_pre_header
      _
    $region3: #{tpu_custom_call.1} parent=1 // loop_header
      %s28 = sphi 0, %s32
      %p29 = scmp.ge.s32.totalorder %s28, 4
      %s38 = sphi 0, %s40
      %s41 = sphi 0, %s38
      %s42 = sphi 0, %s41
      %s58 = sphi 0, %s42
      %s62 = sphi 0, %s62
      %s64 = sphi 0, %s62
      %s65 = sphi 0, %s64
      %s79 = sphi 0, %s65
      %s83 = sphi 0, %s83
      %s85 = sphi 0, %s83
      %s86 = sphi 0, %s85
      %s100 = sphi 0, %s86
      %s104 = sphi 0, %s104
      %s106 = sphi 0, %s104
      %s107 = sphi 0, %s106
      %s121 = sphi 0, %s107
      %s125 = sphi 0, %s125
      %s127 = sphi 0, %s125
      %s128 = sphi 0, %s127
      %s142 = sphi 0, %s128
      %s146 = sphi 0, %s146
      %s148 = sphi 0, %s146
      %s149 = sphi 0, %s148
      %s163 = sphi 0, %s149
      %s167 = sphi 0, %s167
      %s169 = sphi 0, %s167
      %s170 = sphi 0, %s169
      %s184 = sphi 0, %s170
      %s188 = sphi 0, %s188
      %s190 = sphi 0, %s188
      %s191 = sphi 0, %s190
      %s205 = sphi 0, %s191
      %s209 = sphi 0, %s209
      %s211 = sphi 0, %s209
      %s212 = sphi 0, %s211
      %s226 = sphi 0, %s212
      %s230 = sphi 0, %s230
      %s232 = sphi 0, %s230
      %s233 = sphi 0, %s232
      %s247 = sphi 0, %s233
      %s251 = sphi 0, %s251
      %s253 = sphi 0, %s251
      %s254 = sphi 0, %s253
      %s268 = sphi 0, %s254
      %s272 = sphi 0, %s272
      %s274 = sphi 0, %s272
      %s275 = sphi 0, %s274
      %s289 = sphi 0, %s275
      %s293 = sphi 0, %s293
      %s295 = sphi 0, %s293
      %s296 = sphi 0, %s295
      %s310 = sphi 0, %s296
      %s314 = sphi 0, %s314
      %s316 = sphi 0, %s314
      %s317 = sphi 0, %s316
      %s331 = sphi 0, %s317
      %s335 = sphi 0, %s335
      %s337 = sphi 0, %s335
      %s338 = sphi 0, %s337
      %s352 = sphi 0, %s338
      %s356 = sphi 0, %s356
      %s358 = sphi 0, %s356
      %s359 = sphi 0, %s358
      %s373 = sphi 0, %s359
      %s377 = sphi 0, %s377
      %s379 = sphi 0, %s377
      %s380 = sphi 0, %s379
      %s394 = sphi 0, %s380
      %s398 = sphi 0, %s398
      %s400 = sphi 0, %s398
      %s401 = sphi 0, %s400
      %s415 = sphi 0, %s401
      %s419 = sphi 0, %s419
      %s421 = sphi 0, %s419
      %s422 = sphi 0, %s421
      %s436 = sphi 0, %s422
      %s442 = sphi 0, %s444
      %s445 = sphi 0, %s442
      %s446 = sphi 0, %s445
      %s462 = sphi 0, %s446
    $region4: #{tpu_custom_call.1} parent=1 // loop_header_branch
      %31 = sbr.rel (%p29) target = $region8
    $region5: #{tpu_custom_call.1} parent=1 // loop_body
      %s33 = ssub.s32 %s28, 1
      %s34 = ssub.s32 %s28, 2
      %s35 = sadd.s32 %s28, 1
      %s36 = ssub.s32 %s28, %s35
      %p37 = scmp.eq.s32.totalorder %s36, 0
      %s39 = sadd.s32 %s38, 1
      %s40 = scalar_select %p37, %s38, %s39
      %p43 = pneg %p37
      %p44 = scmp.eq.s32.totalorder %s28, 1
      %p45 = por %p43, %p44
      %p46 = scmp.ne.s32.totalorder %s38, %s41
      %p47 = scmp.eq.s32.totalorder %s28, 0
      %p48 = por %p46, %p47
      %p49 = scmp.ne.s32.totalorder %s38, %s41
      %p50 = scmp.eq.s32.totalorder %s33, 1
      %p51 = por %p49, %p50
      %p52 = scmp.ne.s32.totalorder %s41, %s42
      %p53 = scmp.eq.s32.totalorder %s33, 0
      %p54 = por %p52, %p53
      %p55 = scmp.ne.s32.totalorder %s41, %s42
      %p56 = scmp.eq.s32.totalorder %s34, 1
      %p57 = por %p55, %p56
      %p59 = scmp.ne.s32.totalorder %s42, %s58
      %p60 = scmp.eq.s32.totalorder %s34, 0
      %p61 = por %p59, %p60
      %s63 = sadd.s32 %s62, 1
      %p66 = scmp.eq.s32.totalorder %s28, 1
      %p67 = scmp.ne.s32.totalorder %s62, %s64
      %p68 = scmp.eq.s32.totalorder %s28, 0
      %p69 = por %p67, %p68
      %p70 = scmp.ne.s32.totalorder %s62, %s64
      %p71 = scmp.eq.s32.totalorder %s33, 1
      %p72 = por %p70, %p71
      %p73 = scmp.ne.s32.totalorder %s64, %s65
      %p74 = scmp.eq.s32.totalorder %s33, 0
      %p75 = por %p73, %p74
      %p76 = scmp.ne.s32.totalorder %s64, %s65
      %p77 = scmp.eq.s32.totalorder %s34, 1
      %p78 = por %p76, %p77
      %p80 = scmp.ne.s32.totalorder %s65, %s79
      %p81 = scmp.eq.s32.totalorder %s34, 0
      %p82 = por %p80, %p81
      %s84 = sadd.s32 %s83, 1
      %p87 = scmp.eq.s32.totalorder %s28, 1
      %p88 = scmp.ne.s32.totalorder %s83, %s85
      %p89 = scmp.eq.s32.totalorder %s28, 0
      %p90 = por %p88, %p89
      %p91 = scmp.ne.s32.totalorder %s83, %s85
      %p92 = scmp.eq.s32.totalorder %s33, 1
      %p93 = por %p91, %p92
      %p94 = scmp.ne.s32.totalorder %s85, %s86
      %p95 = scmp.eq.s32.totalorder %s33, 0
      %p96 = por %p94, %p95
      %p97 = scmp.ne.s32.totalorder %s85, %s86
      %p98 = scmp.eq.s32.totalorder %s34, 1
      %p99 = por %p97, %p98
      %p101 = scmp.ne.s32.totalorder %s86, %s100
      %p102 = scmp.eq.s32.totalorder %s34, 0
      %p103 = por %p101, %p102
      %s105 = sadd.s32 %s104, 1
      %p108 = scmp.eq.s32.totalorder %s28, 1
      %p109 = scmp.ne.s32.totalorder %s104, %s106
      %p110 = scmp.eq.s32.totalorder %s28, 0
      %p111 = por %p109, %p110
      %p112 = scmp.ne.s32.totalorder %s104, %s106
      %p113 = scmp.eq.s32.totalorder %s33, 1
      %p114 = por %p112, %p113
      %p115 = scmp.ne.s32.totalorder %s106, %s107
      %p116 = scmp.eq.s32.totalorder %s33, 0
      %p117 = por %p115, %p116
      %p118 = scmp.ne.s32.totalorder %s106, %s107
      %p119 = scmp.eq.s32.totalorder %s34, 1
      %p120 = por %p118, %p119
      %p122 = scmp.ne.s32.totalorder %s107, %s121
      %p123 = scmp.eq.s32.totalorder %s34, 0
      %p124 = por %p122, %p123
      %s126 = sadd.s32 %s125, 1
      %p129 = scmp.eq.s32.totalorder %s28, 1
      %p130 = scmp.ne.s32.totalorder %s125, %s127
      %p131 = scmp.eq.s32.totalorder %s28, 0
      %p132 = por %p130, %p131
      %p133 = scmp.ne.s32.totalorder %s125, %s127
      %p134 = scmp.eq.s32.totalorder %s33, 1
      %p135 = por %p133, %p134
      %p136 = scmp.ne.s32.totalorder %s127, %s128
      %p137 = scmp.eq.s32.totalorder %s33, 0
      %p138 = por %p136, %p137
      %p139 = scmp.ne.s32.totalorder %s127, %s128
      %p140 = scmp.eq.s32.totalorder %s34, 1
      %p141 = por %p139, %p140
      %p143 = scmp.ne.s32.totalorder %s128, %s142
      %p144 = scmp.eq.s32.totalorder %s34, 0
      %p145 = por %p143, %p144
      %s147 = sadd.s32 %s146, 1
      %p150 = scmp.eq.s32.totalorder %s28, 1
      %p151 = scmp.ne.s32.totalorder %s146, %s148
      %p152 = scmp.eq.s32.totalorder %s28, 0
      %p153 = por %p151, %p152
      %p154 = scmp.ne.s32.totalorder %s146, %s148
      %p155 = scmp.eq.s32.totalorder %s33, 1
      %p156 = por %p154, %p155
      %p157 = scmp.ne.s32.totalorder %s148, %s149
      %p158 = scmp.eq.s32.totalorder %s33, 0
      %p159 = por %p157, %p158
      %p160 = scmp.ne.s32.totalorder %s148, %s149
      %p161 = scmp.eq.s32.totalorder %s34, 1
      %p162 = por %p160, %p161
      %p164 = scmp.ne.s32.totalorder %s149, %s163
      %p165 = scmp.eq.s32.totalorder %s34, 0
      %p166 = por %p164, %p165
      %s168 = sadd.s32 %s167, 1
      %p171 = scmp.eq.s32.totalorder %s28, 1
      %p172 = scmp.ne.s32.totalorder %s167, %s169
      %p173 = scmp.eq.s32.totalorder %s28, 0
      %p174 = por %p172, %p173
      %p175 = scmp.ne.s32.totalorder %s167, %s169
      %p176 = scmp.eq.s32.totalorder %s33, 1
      %p177 = por %p175, %p176
      %p178 = scmp.ne.s32.totalorder %s169, %s170
      %p179 = scmp.eq.s32.totalorder %s33, 0
      %p180 = por %p178, %p179
      %p181 = scmp.ne.s32.totalorder %s169, %s170
      %p182 = scmp.eq.s32.totalorder %s34, 1
      %p183 = por %p181, %p182
      %p185 = scmp.ne.s32.totalorder %s170, %s184
      %p186 = scmp.eq.s32.totalorder %s34, 0
      %p187 = por %p185, %p186
      %s189 = sadd.s32 %s188, 1
      %p192 = scmp.eq.s32.totalorder %s28, 1
      %p193 = scmp.ne.s32.totalorder %s188, %s190
      %p194 = scmp.eq.s32.totalorder %s28, 0
      %p195 = por %p193, %p194
      %p196 = scmp.ne.s32.totalorder %s188, %s190
      %p197 = scmp.eq.s32.totalorder %s33, 1
      %p198 = por %p196, %p197
      %p199 = scmp.ne.s32.totalorder %s190, %s191
      %p200 = scmp.eq.s32.totalorder %s33, 0
      %p201 = por %p199, %p200
      %p202 = scmp.ne.s32.totalorder %s190, %s191
      %p203 = scmp.eq.s32.totalorder %s34, 1
      %p204 = por %p202, %p203
      %p206 = scmp.ne.s32.totalorder %s191, %s205
      %p207 = scmp.eq.s32.totalorder %s34, 0
      %p208 = por %p206, %p207
      %s210 = sadd.s32 %s209, 1
      %p213 = scmp.eq.s32.totalorder %s28, 1
      %p214 = scmp.ne.s32.totalorder %s209, %s211
      %p215 = scmp.eq.s32.totalorder %s28, 0
      %p216 = por %p214, %p215
      %p217 = scmp.ne.s32.totalorder %s209, %s211
      %p218 = scmp.eq.s32.totalorder %s33, 1
      %p219 = por %p217, %p218
      %p220 = scmp.ne.s32.totalorder %s211, %s212
      %p221 = scmp.eq.s32.totalorder %s33, 0
      %p222 = por %p220, %p221
      %p223 = scmp.ne.s32.totalorder %s211, %s212
      %p224 = scmp.eq.s32.totalorder %s34, 1
      %p225 = por %p223, %p224
      %p227 = scmp.ne.s32.totalorder %s212, %s226
      %p228 = scmp.eq.s32.totalorder %s34, 0
      %p229 = por %p227, %p228
      %s231 = sadd.s32 %s230, 1
      %p234 = scmp.eq.s32.totalorder %s28, 1
      %p235 = scmp.ne.s32.totalorder %s230, %s232
      %p236 = scmp.eq.s32.totalorder %s28, 0
      %p237 = por %p235, %p236
      %p238 = scmp.ne.s32.totalorder %s230, %s232
      %p239 = scmp.eq.s32.totalorder %s33, 1
      %p240 = por %p238, %p239
      %p241 = scmp.ne.s32.totalorder %s232, %s233
      %p242 = scmp.eq.s32.totalorder %s33, 0
      %p243 = por %p241, %p242
      %p244 = scmp.ne.s32.totalorder %s232, %s233
      %p245 = scmp.eq.s32.totalorder %s34, 1
      %p246 = por %p244, %p245
      %p248 = scmp.ne.s32.totalorder %s233, %s247
      %p249 = scmp.eq.s32.totalorder %s34, 0
      %p250 = por %p248, %p249
      %s252 = sadd.s32 %s251, 1
      %p255 = scmp.eq.s32.totalorder %s28, 1
      %p256 = scmp.ne.s32.totalorder %s251, %s253
      %p257 = scmp.eq.s32.totalorder %s28, 0
      %p258 = por %p256, %p257
      %p259 = scmp.ne.s32.totalorder %s251, %s253
      %p260 = scmp.eq.s32.totalorder %s33, 1
      %p261 = por %p259, %p260
      %p262 = scmp.ne.s32.totalorder %s253, %s254
      %p263 = scmp.eq.s32.totalorder %s33, 0
      %p264 = por %p262, %p263
      %p265 = scmp.ne.s32.totalorder %s253, %s254
      %p266 = scmp.eq.s32.totalorder %s34, 1
      %p267 = por %p265, %p266
      %p269 = scmp.ne.s32.totalorder %s254, %s268
      %p270 = scmp.eq.s32.totalorder %s34, 0
      %p271 = por %p269, %p270
      %s273 = sadd.s32 %s272, 1
      %p276 = scmp.eq.s32.totalorder %s28, 1
      %p277 = scmp.ne.s32.totalorder %s272, %s274
      %p278 = scmp.eq.s32.totalorder %s28, 0
      %p279 = por %p277, %p278
      %p280 = scmp.ne.s32.totalorder %s272, %s274
      %p281 = scmp.eq.s32.totalorder %s33, 1
      %p282 = por %p280, %p281
      %p283 = scmp.ne.s32.totalorder %s274, %s275
      %p284 = scmp.eq.s32.totalorder %s33, 0
      %p285 = por %p283, %p284
      %p286 = scmp.ne.s32.totalorder %s274, %s275
      %p287 = scmp.eq.s32.totalorder %s34, 1
      %p288 = por %p286, %p287
      %p290 = scmp.ne.s32.totalorder %s275, %s289
      %p291 = scmp.eq.s32.totalorder %s34, 0
      %p292 = por %p290, %p291
      %s294 = sadd.s32 %s293, 1
      %p297 = scmp.eq.s32.totalorder %s28, 1
      %p298 = scmp.ne.s32.totalorder %s293, %s295
      %p299 = scmp.eq.s32.totalorder %s28, 0
      %p300 = por %p298, %p299
      %p301 = scmp.ne.s32.totalorder %s293, %s295
      %p302 = scmp.eq.s32.totalorder %s33, 1
      %p303 = por %p301, %p302
      %p304 = scmp.ne.s32.totalorder %s295, %s296
      %p305 = scmp.eq.s32.totalorder %s33, 0
      %p306 = por %p304, %p305
      %p307 = scmp.ne.s32.totalorder %s295, %s296
      %p308 = scmp.eq.s32.totalorder %s34, 1
      %p309 = por %p307, %p308
      %p311 = scmp.ne.s32.totalorder %s296, %s310
      %p312 = scmp.eq.s32.totalorder %s34, 0
      %p313 = por %p311, %p312
      %s315 = sadd.s32 %s314, 1
      %p318 = scmp.eq.s32.totalorder %s28, 1
      %p319 = scmp.ne.s32.totalorder %s314, %s316
      %p320 = scmp.eq.s32.totalorder %s28, 0
      %p321 = por %p319, %p320
      %p322 = scmp.ne.s32.totalorder %s314, %s316
      %p323 = scmp.eq.s32.totalorder %s33, 1
      %p324 = por %p322, %p323
      %p325 = scmp.ne.s32.totalorder %s316, %s317
      %p326 = scmp.eq.s32.totalorder %s33, 0
      %p327 = por %p325, %p326
      %p328 = scmp.ne.s32.totalorder %s316, %s317
      %p329 = scmp.eq.s32.totalorder %s34, 1
      %p330 = por %p328, %p329
      %p332 = scmp.ne.s32.totalorder %s317, %s331
      %p333 = scmp.eq.s32.totalorder %s34, 0
      %p334 = por %p332, %p333
      %s336 = sadd.s32 %s335, 1
      %p339 = scmp.eq.s32.totalorder %s28, 1
      %p340 = scmp.ne.s32.totalorder %s335, %s337
      %p341 = scmp.eq.s32.totalorder %s28, 0
      %p342 = por %p340, %p341
      %p343 = scmp.ne.s32.totalorder %s335, %s337
      %p344 = scmp.eq.s32.totalorder %s33, 1
      %p345 = por %p343, %p344
      %p346 = scmp.ne.s32.totalorder %s337, %s338
      %p347 = scmp.eq.s32.totalorder %s33, 0
      %p348 = por %p346, %p347
      %p349 = scmp.ne.s32.totalorder %s337, %s338
      %p350 = scmp.eq.s32.totalorder %s34, 1
      %p351 = por %p349, %p350
      %p353 = scmp.ne.s32.totalorder %s338, %s352
      %p354 = scmp.eq.s32.totalorder %s34, 0
      %p355 = por %p353, %p354
      %s357 = sadd.s32 %s356, 1
      %p360 = scmp.eq.s32.totalorder %s28, 1
      %p361 = scmp.ne.s32.totalorder %s356, %s358
      %p362 = scmp.eq.s32.totalorder %s28, 0
      %p363 = por %p361, %p362
      %p364 = scmp.ne.s32.totalorder %s356, %s358
      %p365 = scmp.eq.s32.totalorder %s33, 1
      %p366 = por %p364, %p365
      %p367 = scmp.ne.s32.totalorder %s358, %s359
      %p368 = scmp.eq.s32.totalorder %s33, 0
      %p369 = por %p367, %p368
      %p370 = scmp.ne.s32.totalorder %s358, %s359
      %p371 = scmp.eq.s32.totalorder %s34, 1
      %p372 = por %p370, %p371
      %p374 = scmp.ne.s32.totalorder %s359, %s373
      %p375 = scmp.eq.s32.totalorder %s34, 0
      %p376 = por %p374, %p375
      %s378 = sadd.s32 %s377, 1
      %p381 = scmp.eq.s32.totalorder %s28, 1
      %p382 = scmp.ne.s32.totalorder %s377, %s379
      %p383 = scmp.eq.s32.totalorder %s28, 0
      %p384 = por %p382, %p383
      %p385 = scmp.ne.s32.totalorder %s377, %s379
      %p386 = scmp.eq.s32.totalorder %s33, 1
      %p387 = por %p385, %p386
      %p388 = scmp.ne.s32.totalorder %s379, %s380
      %p389 = scmp.eq.s32.totalorder %s33, 0
      %p390 = por %p388, %p389
      %p391 = scmp.ne.s32.totalorder %s379, %s380
      %p392 = scmp.eq.s32.totalorder %s34, 1
      %p393 = por %p391, %p392
      %p395 = scmp.ne.s32.totalorder %s380, %s394
      %p396 = scmp.eq.s32.totalorder %s34, 0
      %p397 = por %p395, %p396
      %s399 = sadd.s32 %s398, 1
      %p402 = scmp.eq.s32.totalorder %s28, 1
      %p403 = scmp.ne.s32.totalorder %s398, %s400
      %p404 = scmp.eq.s32.totalorder %s28, 0
      %p405 = por %p403, %p404
      %p406 = scmp.ne.s32.totalorder %s398, %s400
      %p407 = scmp.eq.s32.totalorder %s33, 1
      %p408 = por %p406, %p407
      %p409 = scmp.ne.s32.totalorder %s400, %s401
      %p410 = scmp.eq.s32.totalorder %s33, 0
      %p411 = por %p409, %p410
      %p412 = scmp.ne.s32.totalorder %s400, %s401
      %p413 = scmp.eq.s32.totalorder %s34, 1
      %p414 = por %p412, %p413
      %p416 = scmp.ne.s32.totalorder %s401, %s415
      %p417 = scmp.eq.s32.totalorder %s34, 0
      %p418 = por %p416, %p417
      %s420 = sadd.s32 %s419, 1
      %p423 = scmp.eq.s32.totalorder %s28, 1
      %p424 = scmp.ne.s32.totalorder %s419, %s421
      %p425 = scmp.eq.s32.totalorder %s28, 0
      %p426 = por %p424, %p425
      %p427 = scmp.ne.s32.totalorder %s419, %s421
      %p428 = scmp.eq.s32.totalorder %s33, 1
      %p429 = por %p427, %p428
      %p430 = scmp.ne.s32.totalorder %s421, %s422
      %p431 = scmp.eq.s32.totalorder %s33, 0
      %p432 = por %p430, %p431
      %p433 = scmp.ne.s32.totalorder %s421, %s422
      %p434 = scmp.eq.s32.totalorder %s34, 1
      %p435 = por %p433, %p434
      %p437 = scmp.ne.s32.totalorder %s422, %s436
      %p438 = scmp.eq.s32.totalorder %s34, 0
      %p439 = por %p437, %p438
      %s440 = ssub.s32 %s28, %s35
      %p441 = scmp.eq.s32.totalorder %s440, 0
      %s443 = sadd.s32 %s442, 1
      %s444 = scalar_select %p441, %s442, %s443
      %p447 = pneg %p441
      %p448 = scmp.eq.s32.totalorder %s28, 1
      %p449 = por %p447, %p448
      %p450 = scmp.ne.s32.totalorder %s442, %s445
      %p451 = scmp.eq.s32.totalorder %s28, 0
      %p452 = por %p450, %p451
      %p453 = scmp.ne.s32.totalorder %s442, %s445
      %p454 = scmp.eq.s32.totalorder %s33, 1
      %p455 = por %p453, %p454
      %p456 = scmp.ne.s32.totalorder %s445, %s446
      %p457 = scmp.eq.s32.totalorder %s33, 0
      %p458 = por %p456, %p457
      %p459 = scmp.ne.s32.totalorder %s445, %s446
      %p460 = scmp.eq.s32.totalorder %s34, 1
      %p461 = por %p459, %p460
      %p463 = scmp.ne.s32.totalorder %s446, %s462
      %p464 = scmp.eq.s32.totalorder %s34, 0
      %p465 = por %p463, %p464
      %p466 = scmp.le.s32.totalorder 1, %s28
      %p467 = scmp.lt.s32.totalorder %s28, 3
      %p468 = pnand %p466, %p467
      %p469 = pneg %p468
      // Predicated region
      $region9: #{tpu_custom_call.1} parent=5 // pred_check
        _
      $region10: #{tpu_custom_call.1} parent=5 // pred_check_branch
        %471 = sbr.rel (%p468) target = $region12
      $region11: #{tpu_custom_call.1} parent=5 // pred_region
        %s472 = ssub.s32 %s28, 1
        // Predicated region
        $region13: #{tpu_custom_call.1} parent=11 // pred_check
          %p473 = pneg %p75
        $region14: #{tpu_custom_call.1} parent=11 // pred_check_branch
          %475 = sbr.rel (%p473) target = $region16
        $region15: #{tpu_custom_call.1} parent=11 // pred_region
          _
        $region16: #{tpu_custom_call.1} parent=11 // pred_fallthru
          _
        // Predicated region
        $region17: #{tpu_custom_call.1} parent=11 // pred_check
          %p476 = pneg %p96
        $region18: #{tpu_custom_call.1} parent=11 // pred_check_branch
          %478 = sbr.rel (%p476) target = $region20
        $region19: #{tpu_custom_call.1} parent=11 // pred_region
          _
        $region20: #{tpu_custom_call.1} parent=11 // pred_fallthru
          _
        // Predicated region
        $region21: #{tpu_custom_call.1} parent=11 // pred_check
          %p479 = pneg %p117
        $region22: #{tpu_custom_call.1} parent=11 // pred_check_branch
          %481 = sbr.rel (%p479) target = $region24
        $region23: #{tpu_custom_call.1} parent=11 // pred_region
          _
        $region24: #{tpu_custom_call.1} parent=11 // pred_fallthru
          _
        // Predicated region
        $region25: #{tpu_custom_call.1} parent=11 // pred_check
          %p482 = pneg %p138
        $region26: #{tpu_custom_call.1} parent=11 // pred_check_branch
          %484 = sbr.rel (%p482) target = $region28
        $region27: #{tpu_custom_call.1} parent=11 // pred_region
          _
        $region28: #{tpu_custom_call.1} parent=11 // pred_fallthru
          _
        // Predicated region
        $region29: #{tpu_custom_call.1} parent=11 // pred_check
          %p485 = pneg %p159
        $region30: #{tpu_custom_call.1} parent=11 // pred_check_branch
          %487 = sbr.rel (%p485) target = $region32
        $region31: #{tpu_custom_call.1} parent=11 // pred_region
          _
        $region32: #{tpu_custom_call.1} parent=11 // pred_fallthru
          _
        // Predicated region
        $region33: #{tpu_custom_call.1} parent=11 // pred_check
          %p488 = pneg %p180
        $region34: #{tpu_custom_call.1} parent=11 // pred_check_branch
          %490 = sbr.rel (%p488) target = $region36
        $region35: #{tpu_custom_call.1} parent=11 // pred_region
          _
        $region36: #{tpu_custom_call.1} parent=11 // pred_fallthru
          _
        // Predicated region
        $region37: #{tpu_custom_call.1} parent=11 // pred_check
          %p491 = pneg %p201
        $region38: #{tpu_custom_call.1} parent=11 // pred_check_branch
          %493 = sbr.rel (%p491) target = $region40
        $region39: #{tpu_custom_call.1} parent=11 // pred_region
          _
        $region40: #{tpu_custom_call.1} parent=11 // pred_fallthru
          _
        // Predicated region
        $region41: #{tpu_custom_call.1} parent=11 // pred_check
          %p494 = pneg %p222
        $region42: #{tpu_custom_call.1} parent=11 // pred_check_branch
          %496 = sbr.rel (%p494) target = $region44
        $region43: #{tpu_custom_call.1} parent=11 // pred_region
          _
        $region44: #{tpu_custom_call.1} parent=11 // pred_fallthru
          _
        // Predicated region
        $region45: #{tpu_custom_call.1} parent=11 // pred_check
          %p497 = pneg %p243
        $region46: #{tpu_custom_call.1} parent=11 // pred_check_branch
          %499 = sbr.rel (%p497) target = $region48
        $region47: #{tpu_custom_call.1} parent=11 // pred_region
          _
        $region48: #{tpu_custom_call.1} parent=11 // pred_fallthru
          _
        // Predicated region
        $region49: #{tpu_custom_call.1} parent=11 // pred_check
          %p500 = pneg %p264
        $region50: #{tpu_custom_call.1} parent=11 // pred_check_branch
          %502 = sbr.rel (%p500) target = $region52
        $region51: #{tpu_custom_call.1} parent=11 // pred_region
          _
        $region52: #{tpu_custom_call.1} parent=11 // pred_fallthru
          _
        // Predicated region
        $region53: #{tpu_custom_call.1} parent=11 // pred_check
          %p503 = pneg %p285
        $region54: #{tpu_custom_call.1} parent=11 // pred_check_branch
          %505 = sbr.rel (%p503) target = $region56
        $region55: #{tpu_custom_call.1} parent=11 // pred_region
          _
        $region56: #{tpu_custom_call.1} parent=11 // pred_fallthru
          _
        // Predicated region
        $region57: #{tpu_custom_call.1} parent=11 // pred_check
          %p506 = pneg %p306
        $region58: #{tpu_custom_call.1} parent=11 // pred_check_branch
          %508 = sbr.rel (%p506) target = $region60
        $region59: #{tpu_custom_call.1} parent=11 // pred_region
          _
        $region60: #{tpu_custom_call.1} parent=11 // pred_fallthru
          _
        // Predicated region
        $region61: #{tpu_custom_call.1} parent=11 // pred_check
          %p509 = pneg %p327
        $region62: #{tpu_custom_call.1} parent=11 // pred_check_branch
          %511 = sbr.rel (%p509) target = $region64
        $region63: #{tpu_custom_call.1} parent=11 // pred_region
          _
        $region64: #{tpu_custom_call.1} parent=11 // pred_fallthru
          _
        // Predicated region
        $region65: #{tpu_custom_call.1} parent=11 // pred_check
          %p512 = pneg %p348
        $region66: #{tpu_custom_call.1} parent=11 // pred_check_branch
          %514 = sbr.rel (%p512) target = $region68
        $region67: #{tpu_custom_call.1} parent=11 // pred_region
          _
        $region68: #{tpu_custom_call.1} parent=11 // pred_fallthru
          _
        // Predicated region
        $region69: #{tpu_custom_call.1} parent=11 // pred_check
          %p515 = pneg %p369
        $region70: #{tpu_custom_call.1} parent=11 // pred_check_branch
          %517 = sbr.rel (%p515) target = $region72
        $region71: #{tpu_custom_call.1} parent=11 // pred_region
          _
        $region72: #{tpu_custom_call.1} parent=11 // pred_fallthru
          _
        // Predicated region
        $region73: #{tpu_custom_call.1} parent=11 // pred_check
          %p518 = pneg %p390
        $region74: #{tpu_custom_call.1} parent=11 // pred_check_branch
          %520 = sbr.rel (%p518) target = $region76
        $region75: #{tpu_custom_call.1} parent=11 // pred_region
          _
        $region76: #{tpu_custom_call.1} parent=11 // pred_fallthru
          _
        // Predicated region
        $region77: #{tpu_custom_call.1} parent=11 // pred_check
          %p521 = pneg %p411
        $region78: #{tpu_custom_call.1} parent=11 // pred_check_branch
          %523 = sbr.rel (%p521) target = $region80
        $region79: #{tpu_custom_call.1} parent=11 // pred_region
          _
        $region80: #{tpu_custom_call.1} parent=11 // pred_fallthru
          _
        // Predicated region
        $region81: #{tpu_custom_call.1} parent=11 // pred_check
          %p524 = pneg %p432
        $region82: #{tpu_custom_call.1} parent=11 // pred_check_branch
          %526 = sbr.rel (%p524) target = $region84
        $region83: #{tpu_custom_call.1} parent=11 // pred_region
          _
        $region84: #{tpu_custom_call.1} parent=11 // pred_fallthru
          _
      $region12: #{tpu_custom_call.1} parent=5 // pred_fallthru
        _
      %p527 = scmp.lt.s32.totalorder %s28, 2
      // Predicated region
      $region85: #{tpu_custom_call.1} parent=5 // pred_check
        %p528 = pneg %p527
      $region86: #{tpu_custom_call.1} parent=5 // pred_check_branch
        %530 = sbr.rel (%p528) target = $region88
      $region87: #{tpu_custom_call.1} parent=5 // pred_region
        // Predicated region
        $region89: #{tpu_custom_call.1} parent=87 // pred_check
          %p531 = pneg %p48
        $region90: #{tpu_custom_call.1} parent=87 // pred_check_branch
          %533 = sbr.rel (%p531) target = $region92
        $region91: #{tpu_custom_call.1} parent=87 // pred_region
          %p534 = scmp.lt.s32.totalorder %s28, 1
          %s535 = scalar_select %p534, %s28, 1
          %s536 = smul.addr %s535, 8
          %s537 = smul.addr %s536, 4
          %s538 = scalar_lea.vmem %s0, %s537
        $region92: #{tpu_custom_call.1} parent=87 // pred_fallthru
          _
      $region88: #{tpu_custom_call.1} parent=5 // pred_fallthru
        _
      %p539 = scmp.le.s32.totalorder 1, %s28
      %p540 = scmp.lt.s32.totalorder %s28, 3
      %p541 = pnand %p539, %p540
      %p542 = pneg %p541
      // Predicated region
      $region93: #{tpu_custom_call.1} parent=5 // pred_check
        _
      $region94: #{tpu_custom_call.1} parent=5 // pred_check_branch
        %544 = sbr.rel (%p541) target = $region96
      $region95: #{tpu_custom_call.1} parent=5 // pred_region
        %s545 = ssub.s32 %s28, 1
        %p546 = scmp.lt.s32.totalorder %s33, 1
        %s547 = scalar_select %p546, %s33, 1
        %s548 = smul.addr %s547, 8
        %s549 = smul.addr %s548, 4
        %s550 = scalar_lea.vmem %s0, %s549
        %p551 = pneg %p54
        %p552 = pneg %p51
        %p553 = pneg %p75
        %p554 = pneg %p72
        %p555 = pneg %p96
        %p556 = pneg %p93
        %p557 = pneg %p117
        %p558 = pneg %p114
        %p559 = pneg %p138
        %p560 = pneg %p135
        %p561 = pneg %p159
        %p562 = pneg %p156
        %p563 = pneg %p180
        %p564 = pneg %p177
        %p565 = pneg %p201
        %p566 = pneg %p198
        %p567 = pneg %p222
        %p568 = pneg %p219
        %p569 = pneg %p243
        %p570 = pneg %p240
        %p571 = pneg %p264
        %p572 = pneg %p261
        %p573 = pneg %p285
        %p574 = pneg %p282
        %p575 = pneg %p306
        %p576 = pneg %p303
        %p577 = pneg %p327
        %p578 = pneg %p324
        %p579 = pneg %p348
        %p580 = pneg %p345
        %p581 = pneg %p369
        %p582 = pneg %p366
        %p583 = pneg %p390
        %p584 = pneg %p387
        %p585 = pneg %p411
        %p586 = pneg %p408
        %p587 = pneg %p432
        %p588 = pneg %p429
        %p589 = pneg %p458
        %p590 = pneg %p455
        %s591 = sand.u32 %s445, 1
        %s592 = scalar_lea.sflag [#allocation3], %s591
        %s593 = sand.u32 %s445, 1
        %s594 = smul.addr %s593, 64
        %s595 = scalar_lea.vmem [#allocation2], %s594
        %p596 = scmp.lt.s32.totalorder %s33, 1
        %s597 = scalar_select %p596, %s33, 1
        %s598 = smul.addr %s597, 8
        %s599 = smul.addr %s598, 4
        %s600 = scalar_lea.vmem %s0, %s599
        %v602 = vld [vmem:[%s600] sm:$0xf]
        %v603 = vld [vmem:[%s600 + $0x4] sm:$0xf]
        %v604 = vld [vmem:[%s600 + $0x8] sm:$0xf]
        %v605 = vld [vmem:[%s600 + $0xc] sm:$0xf]
        %v606 = vld [vmem:[%s600 + $0x10] sm:$0xf]
        %v607 = vld [vmem:[%s600 + $0x14] sm:$0xf]
        %v608 = vld [vmem:[%s600 + $0x18] sm:$0xf]
        %v609 = vld [vmem:[%s600 + $0x1c] sm:$0xf]
        %v610 = vld [vmem:[%s1] sm:$0xf]
        %v611 = vld [vmem:[%s1 + $0x4] sm:$0xf]
        %v612 = vld [vmem:[%s1 + $0x8] sm:$0xf]
        %v613 = vld [vmem:[%s1 + $0xc] sm:$0xf]
        %v622 = vunpack.c.l.b16 %v602
        %v623 = vunpack.c.l.b16 %v603
        %v624 = vunpack.c.l.b16 %v604
        %v625 = vunpack.c.l.b16 %v605
        %v626 = vunpack.c.l.b16 %v606
        %v627 = vunpack.c.l.b16 %v607
        %v628 = vunpack.c.l.b16 %v608
        %v629 = vunpack.c.l.b16 %v609
        %v630 = vpack.c.b16 %v623, %v622
        %v631 = vpack.c.b16 %v625, %v624
        %v632 = vpack.c.b16 %v627, %v626
        %v633 = vpack.c.b16 %v629, %v628
        %v638 = vunpack.c.l.b16 %v610
        %v639 = vunpack.c.l.b16 %v611
        %v640 = vunpack.c.l.b16 %v612
        %v641 = vunpack.c.l.b16 %v613
        %v642 = vpack.c.b16 %v639, %v638
        %v643 = vpack.c.b16 %v641, %v640
        %vm646 = vcmask 261120
        %v648 = vsel %vm646, %v630, 0
        %v651 = vsel %vm646, %v631, 0
        %v654 = vsel %vm646, %v632, 0
        %v657 = vsel %vm646, %v633, 0
        %659 = vmatpush.bf16.msra.mxu0 0
        %660 = vmatpush.bf16.msra.mxu0 0
        %661 = vmatpush.bf16.msra.mxu0 0
        %662 = vmatpush.bf16.msra.mxu0 0
        %663 = vmatpush.bf16.msra.mxu0 0
        %664 = vmatpush.bf16.msra.mxu0 0
        %665 = vmatpush.bf16.msra.mxu0 %v643
        %666 = vmatpush.bf16.msra.mxu0 %v642
        %667 = vmatmul.bf16.gmra.mxu0 %v648
        %v668 = vpop.f32.mrf.mxu0
        %v669 = vadd.f32 0.0, %v668
        %v670 = vpop.f32.mrf.mxu0
        %v671 = vadd.f32 0.0, %v670
        %672 = vmatmul.bf16.gmra.mxu0 %v651
        %v673 = vpop.f32.mrf.mxu0
        %v674 = vadd.f32 0.0, %v673
        %v675 = vpop.f32.mrf.mxu0
        %v676 = vadd.f32 0.0, %v675
        %677 = vmatmul.bf16.gmra.mxu0 %v654
        %v678 = vpop.f32.mrf.mxu0
        %v679 = vadd.f32 0.0, %v678
        %v680 = vpop.f32.mrf.mxu0
        %v681 = vadd.f32 0.0, %v680
        %682 = vmatmul.bf16.gmra.mxu0 %v657
        %v683 = vpop.f32.mrf.mxu0
        %v684 = vadd.f32 0.0, %v683
        %v685 = vpop.f32.mrf.mxu0
        %v686 = vadd.f32 0.0, %v685
        %687 = vdwg.mxu0
        %v688 = vld [vmem:[%s2] sm:$0x1]
        %v690 = vperm.slane %v688, 0
        %v692 = vmul.f32 %v669, %v690
        %v693 = vmul.f32 %v671, %v690
        %v694 = vmul.f32 %v674, %v690
        %v695 = vmul.f32 %v676, %v690
        %v696 = vmul.f32 %v679, %v690
        %v697 = vmul.f32 %v681, %v690
        %v698 = vmul.f32 %v684, %v690
        %v699 = vmul.f32 %v686, %v690
        %v700 = vld [vmem:[%s3] sm:$0x1]
        %v702 = vperm.slane %v700, 0
        %v704 = vadd.f32 %v692, %v702
        %v705 = vadd.f32 %v693, %v702
        %v706 = vadd.f32 %v694, %v702
        %v707 = vadd.f32 %v695, %v702
        %v708 = vadd.f32 %v696, %v702
        %v709 = vadd.f32 %v697, %v702
        %v710 = vadd.f32 %v698, %v702
        %v711 = vadd.f32 %v699, %v702
        %v712 = vmax.f32 %v704, 0.0
        %v713 = vmax.f32 %v705, 0.0
        %v714 = vmax.f32 %v706, 0.0
        %v715 = vmax.f32 %v707, 0.0
        %v716 = vmax.f32 %v708, 0.0
        %v717 = vmax.f32 %v709, 0.0
        %v718 = vmax.f32 %v710, 0.0
        %v719 = vmax.f32 %v711, 0.0
        %v720 = vld [vmem:[%s6] sm:$0xf]
        %v721 = vld [vmem:[%s6 + $0x4] sm:$0xf]
        %v722 = vld [vmem:[%s6 + $0x8] sm:$0xf]
        %v723 = vld [vmem:[%s6 + $0xc] sm:$0xf]
        %v724 = vld [vmem:[%s6 + $0x10] sm:$0xf]
        %v725 = vld [vmem:[%s6 + $0x14] sm:$0xf]
        %v726 = vld [vmem:[%s6 + $0x18] sm:$0xf]
        %v727 = vld [vmem:[%s6 + $0x1c] sm:$0xf]
        %v728 = vld [vmem:[%s6 + $0x20] sm:$0xf]
        %v729 = vld [vmem:[%s6 + $0x24] sm:$0xf]
        %v730 = vld [vmem:[%s6 + $0x28] sm:$0xf]
        %v731 = vld [vmem:[%s6 + $0x2c] sm:$0xf]
        %v732 = vld [vmem:[%s6 + $0x30] sm:$0xf]
        %v733 = vld [vmem:[%s6 + $0x34] sm:$0xf]
        %v734 = vld [vmem:[%s6 + $0x38] sm:$0xf]
        %v735 = vld [vmem:[%s6 + $0x3c] sm:$0xf]
        %v736 = vld [vmem:[%s6 + $0x40] sm:$0xf]
        %v737 = vld [vmem:[%s6 + $0x44] sm:$0xf]
        %v738 = vld [vmem:[%s6 + $0x48] sm:$0xf]
        %v739 = vld [vmem:[%s6 + $0x4c] sm:$0xf]
        %v740 = vld [vmem:[%s6 + $0x50] sm:$0xf]
        %v741 = vld [vmem:[%s6 + $0x54] sm:$0xf]
        %v742 = vld [vmem:[%s6 + $0x58] sm:$0xf]
        %v743 = vld [vmem:[%s6 + $0x5c] sm:$0xf]
        %v744 = vld [vmem:[%s6 + $0x60] sm:$0xf]
        %v745 = vld [vmem:[%s6 + $0x64] sm:$0xf]
        %v746 = vld [vmem:[%s6 + $0x68] sm:$0xf]
        %v747 = vld [vmem:[%s6 + $0x6c] sm:$0xf]
        %v748 = vld [vmem:[%s6 + $0x70] sm:$0xf]
        %v749 = vld [vmem:[%s6 + $0x74] sm:$0xf]
        %v750 = vld [vmem:[%s6 + $0x78] sm:$0xf]
        %v751 = vld [vmem:[%s6 + $0x7c] sm:$0xf]
        %v752 = vld [vmem:[%s6 + $0x80] sm:$0xf]
        %v753 = vld [vmem:[%s6 + $0x84] sm:$0xf]
        %v754 = vld [vmem:[%s6 + $0x88] sm:$0xf]
        %v755 = vld [vmem:[%s6 + $0x8c] sm:$0xf]
        %v756 = vld [vmem:[%s6 + $0x90] sm:$0xf]
        %v757 = vld [vmem:[%s6 + $0x94] sm:$0xf]
        %v758 = vld [vmem:[%s6 + $0x98] sm:$0xf]
        %v759 = vld [vmem:[%s6 + $0x9c] sm:$0xf]
        %v760 = vld [vmem:[%s6 + $0xa0] sm:$0xf]
        %v761 = vld [vmem:[%s6 + $0xa4] sm:$0xf]
        %v762 = vld [vmem:[%s6 + $0xa8] sm:$0xf]
        %v763 = vld [vmem:[%s6 + $0xac] sm:$0xf]
        %v764 = vld [vmem:[%s6 + $0xb0] sm:$0xf]
        %v765 = vld [vmem:[%s6 + $0xb4] sm:$0xf]
        %v766 = vld [vmem:[%s6 + $0xb8] sm:$0xf]
        %v767 = vld [vmem:[%s6 + $0xbc] sm:$0xf]
        %v768 = vld [vmem:[%s6 + $0xc0] sm:$0xf]
        %v769 = vld [vmem:[%s6 + $0xc4] sm:$0xf]
        %v770 = vld [vmem:[%s6 + $0xc8] sm:$0xf]
        %v771 = vld [vmem:[%s6 + $0xcc] sm:$0xf]
        %v772 = vld [vmem:[%s6 + $0xd0] sm:$0xf]
        %v773 = vld [vmem:[%s6 + $0xd4] sm:$0xf]
        %v774 = vld [vmem:[%s6 + $0xd8] sm:$0xf]
        %v775 = vld [vmem:[%s6 + $0xdc] sm:$0xf]
        %v776 = vld [vmem:[%s6 + $0xe0] sm:$0xf]
        %v777 = vld [vmem:[%s6 + $0xe4] sm:$0xf]
        %v778 = vld [vmem:[%s6 + $0xe8] sm:$0xf]
        %v779 = vld [vmem:[%s6 + $0xec] sm:$0xf]
        %v780 = vld [vmem:[%s6 + $0xf0] sm:$0xf]
        %v781 = vld [vmem:[%s6 + $0xf4] sm:$0xf]
        %v782 = vld [vmem:[%s6 + $0xf8] sm:$0xf]
        %v783 = vld [vmem:[%s6 + $0xfc] sm:$0xf]
        %v784 = vld [vmem:[%s6 + $0x100] sm:$0xf]
        %v785 = vld [vmem:[%s6 + $0x104] sm:$0xf]
        %v786 = vld [vmem:[%s6 + $0x108] sm:$0xf]
        %v787 = vld [vmem:[%s6 + $0x10c] sm:$0xf]
        %v788 = vld [vmem:[%s6 + $0x110] sm:$0xf]
        %v789 = vld [vmem:[%s6 + $0x114] sm:$0xf]
        %v790 = vld [vmem:[%s6 + $0x118] sm:$0xf]
        %v791 = vld [vmem:[%s6 + $0x11c] sm:$0xf]
        %v792 = vpack.c.bf16 %v713, %v712
        %v793 = vpack.c.bf16 %v715, %v714
        %v794 = vpack.c.bf16 %v717, %v716
        %v795 = vpack.c.bf16 %v719, %v718
        %v796 = vld [vmem:[%s4] sm:$0xf]
        %v797 = vld [vmem:[%s4 + $0x4] sm:$0xf]
        %v800 = vunpack.c.l.b16 %v796
        %v801 = vunpack.c.l.b16 %v797
        %v802 = vpack.c.b16 %v801, %v800
        %vm804 = vcmask 130048
        %v806 = vsel %vm804, %v792, 0
        %v809 = vsel %vm804, %v793, 0
        %v812 = vsel %vm804, %v794, 0
        %v815 = vsel %vm804, %v795, 0
        %817 = vmatpush.bf16.msra.mxu0 0
        %818 = vmatpush.bf16.msra.mxu0 0
        %819 = vmatpush.bf16.msra.mxu0 0
        %820 = vmatpush.bf16.msra.mxu0 0
        %821 = vmatpush.bf16.msra.mxu0 0
        %822 = vmatpush.bf16.msra.mxu0 0
        %823 = vmatpush.bf16.msra.mxu0 0
        %824 = vmatpush.bf16.msra.mxu0 %v802
        %825 = vmatmul.bf16.gmra.mxu0 %v806
        %v826 = vpop.f32.mrf.mxu0
        %v827 = vadd.f32 0.0, %v826
        %v828 = vpop.f32.mrf.mxu0
        %v829 = vadd.f32 0.0, %v828
        %830 = vmatmul.bf16.gmra.mxu0 %v809
        %v831 = vpop.f32.mrf.mxu0
        %v832 = vadd.f32 0.0, %v831
        %v833 = vpop.f32.mrf.mxu0
        %v834 = vadd.f32 0.0, %v833
        %835 = vmatmul.bf16.gmra.mxu0 %v812
        %v836 = vpop.f32.mrf.mxu0
        %v837 = vadd.f32 0.0, %v836
        %v838 = vpop.f32.mrf.mxu0
        %v839 = vadd.f32 0.0, %v838
        %840 = vmatmul.bf16.gmra.mxu0 %v815
        %v841 = vpop.f32.mrf.mxu0
        %v842 = vadd.f32 0.0, %v841
        %v843 = vpop.f32.mrf.mxu0
        %v844 = vadd.f32 0.0, %v843
        %845 = vdwg.mxu0
        %v846 = vpack.c.bf16 %v829, %v827
        %v847 = vpack.c.bf16 %v834, %v832
        %v848 = vpack.c.bf16 %v839, %v837
        %v849 = vpack.c.bf16 %v844, %v842
        %v922 = vunpack.c.l.b16 %v720
        %v923 = vunpack.c.l.b16 %v721
        %v924 = vunpack.c.l.b16 %v722
        %v925 = vunpack.c.l.b16 %v723
        %v926 = vunpack.c.l.b16 %v724
        %v927 = vunpack.c.l.b16 %v725
        %v928 = vunpack.c.l.b16 %v726
        %v929 = vunpack.c.l.b16 %v727
        %v930 = vunpack.c.l.b16 %v728
        %v931 = vunpack.c.l.b16 %v729
        %v932 = vunpack.c.l.b16 %v730
        %v933 = vunpack.c.l.b16 %v731
        %v934 = vunpack.c.l.b16 %v732
        %v935 = vunpack.c.l.b16 %v733
        %v936 = vunpack.c.l.b16 %v734
        %v937 = vunpack.c.l.b16 %v735
        %v938 = vunpack.c.l.b16 %v736
        %v939 = vunpack.c.l.b16 %v737
        %v940 = vunpack.c.l.b16 %v738
        %v941 = vunpack.c.l.b16 %v739
        %v942 = vunpack.c.l.b16 %v740
        %v943 = vunpack.c.l.b16 %v741
        %v944 = vunpack.c.l.b16 %v742
        %v945 = vunpack.c.l.b16 %v743
        %v946 = vunpack.c.l.b16 %v744
        %v947 = vunpack.c.l.b16 %v745
        %v948 = vunpack.c.l.b16 %v746
        %v949 = vunpack.c.l.b16 %v747
        %v950 = vunpack.c.l.b16 %v748
        %v951 = vunpack.c.l.b16 %v749
        %v952 = vunpack.c.l.b16 %v750
        %v953 = vunpack.c.l.b16 %v751
        %v954 = vunpack.c.l.b16 %v752
        %v955 = vunpack.c.l.b16 %v753
        %v956 = vunpack.c.l.b16 %v754
        %v957 = vunpack.c.l.b16 %v755
        %v958 = vunpack.c.l.b16 %v756
        %v959 = vunpack.c.l.b16 %v757
        %v960 = vunpack.c.l.b16 %v758
        %v961 = vunpack.c.l.b16 %v759
        %v962 = vunpack.c.l.b16 %v760
        %v963 = vunpack.c.l.b16 %v761
        %v964 = vunpack.c.l.b16 %v762
        %v965 = vunpack.c.l.b16 %v763
        %v966 = vunpack.c.l.b16 %v764
        %v967 = vunpack.c.l.b16 %v765
        %v968 = vunpack.c.l.b16 %v766
        %v969 = vunpack.c.l.b16 %v767
        %v970 = vunpack.c.l.b16 %v768
        %v971 = vunpack.c.l.b16 %v769
        %v972 = vunpack.c.l.b16 %v770
        %v973 = vunpack.c.l.b16 %v771
        %v974 = vunpack.c.l.b16 %v772
        %v975 = vunpack.c.l.b16 %v773
        %v976 = vunpack.c.l.b16 %v774
        %v977 = vunpack.c.l.b16 %v775
        %v978 = vunpack.c.l.b16 %v776
        %v979 = vunpack.c.l.b16 %v777
        %v980 = vunpack.c.l.b16 %v778
        %v981 = vunpack.c.l.b16 %v779
        %v982 = vunpack.c.l.b16 %v780
        %v983 = vunpack.c.l.b16 %v781
        %v984 = vunpack.c.l.b16 %v782
        %v985 = vunpack.c.l.b16 %v783
        %v986 = vunpack.c.l.b16 %v784
        %v987 = vunpack.c.l.b16 %v785
        %v988 = vunpack.c.l.b16 %v786
        %v989 = vunpack.c.l.b16 %v787
        %v990 = vunpack.c.l.b16 %v788
        %v991 = vunpack.c.l.b16 %v789
        %v992 = vunpack.c.l.b16 %v790
        %v993 = vunpack.c.l.b16 %v791
        %v994 = vpack.c.b16 %v923, %v922
        %v995 = vpack.c.b16 %v925, %v924
        %v996 = vpack.c.b16 %v927, %v926
        %v997 = vpack.c.b16 %v929, %v928
        %v998 = vpack.c.b16 %v931, %v930
        %v999 = vpack.c.b16 %v933, %v932
        %v1000 = vpack.c.b16 %v935, %v934
        %v1001 = vpack.c.b16 %v937, %v936
        %v1002 = vpack.c.b16 %v939, %v938
        %v1003 = vpack.c.b16 %v941, %v940
        %v1004 = vpack.c.b16 %v943, %v942
        %v1005 = vpack.c.b16 %v945, %v944
        %v1006 = vpack.c.b16 %v947, %v946
        %v1007 = vpack.c.b16 %v949, %v948
        %v1008 = vpack.c.b16 %v951, %v950
        %v1009 = vpack.c.b16 %v953, %v952
        %v1010 = vpack.c.b16 %v955, %v954
        %v1011 = vpack.c.b16 %v957, %v956
        %v1012 = vpack.c.b16 %v959, %v958
        %v1013 = vpack.c.b16 %v961, %v960
        %v1014 = vpack.c.b16 %v963, %v962
        %v1015 = vpack.c.b16 %v965, %v964
        %v1016 = vpack.c.b16 %v967, %v966
        %v1017 = vpack.c.b16 %v969, %v968
        %v1018 = vpack.c.b16 %v971, %v970
        %v1019 = vpack.c.b16 %v973, %v972
        %v1020 = vpack.c.b16 %v975, %v974
        %v1021 = vpack.c.b16 %v977, %v976
        %v1022 = vpack.c.b16 %v979, %v978
        %v1023 = vpack.c.b16 %v981, %v980
        %v1024 = vpack.c.b16 %v983, %v982
        %v1025 = vpack.c.b16 %v985, %v984
        %v1026 = vpack.c.b16 %v987, %v986
        %v1027 = vpack.c.b16 %v989, %v988
        %v1028 = vpack.c.b16 %v991, %v990
        %v1029 = vpack.c.b16 %v993, %v992
        %vm1030 = vcmask 523264
        %v1032 = vsel %vm1030, %v994, 0
        %v1035 = vsel %vm1030, %v995, 0
        %v1038 = vsel %vm1030, %v996, 0
        %v1041 = vsel %vm1030, %v997, 0
        %v1044 = vsel %vm1030, %v998, 0
        %v1047 = vsel %vm1030, %v999, 0
        %v1050 = vsel %vm1030, %v1000, 0
        %v1053 = vsel %vm1030, %v1001, 0
        %v1056 = vsel %vm1030, %v1002, 0
        %v1059 = vsel %vm1030, %v1003, 0
        %v1062 = vsel %vm1030, %v1004, 0
        %v1065 = vsel %vm1030, %v1005, 0
        %v1068 = vsel %vm1030, %v1006, 0
        %v1071 = vsel %vm1030, %v1007, 0
        %v1074 = vsel %vm1030, %v1008, 0
        %v1077 = vsel %vm1030, %v1009, 0
        %v1080 = vsel %vm1030, %v1010, 0
        %v1083 = vsel %vm1030, %v1011, 0
        %v1086 = vsel %vm1030, %v1012, 0
        %v1089 = vsel %vm1030, %v1013, 0
        %v1092 = vsel %vm1030, %v1014, 0
        %v1095 = vsel %vm1030, %v1015, 0
        %v1098 = vsel %vm1030, %v1016, 0
        %v1101 = vsel %vm1030, %v1017, 0
        %v1104 = vsel %vm1030, %v1018, 0
        %v1107 = vsel %vm1030, %v1019, 0
        %v1110 = vsel %vm1030, %v1020, 0
        %v1113 = vsel %vm1030, %v1021, 0
        %v1116 = vsel %vm1030, %v1022, 0
        %v1119 = vsel %vm1030, %v1023, 0
        %v1122 = vsel %vm1030, %v1024, 0
        %v1125 = vsel %vm1030, %v1025, 0
        %v1128 = vsel %vm1030, %v1026, 0
        %v1131 = vsel %vm1030, %v1027, 0
        %v1134 = vsel %vm1030, %v1028, 0
        %v1137 = vsel %vm1030, %v1029, 0
        %1139 = vmatpush.bf16.msra.mxu0 0
        %1140 = vmatpush.bf16.msra.mxu0 0
        %1141 = vmatpush.bf16.msra.mxu0 0
        %1142 = vmatpush.bf16.msra.mxu0 0
        %1143 = vmatpush.bf16.msra.mxu0 %v849
        %1144 = vmatpush.bf16.msra.mxu0 %v848
        %1145 = vmatpush.bf16.msra.mxu0 %v847
        %1146 = vmatpush.bf16.msra.mxu0 %v846
        %1147 = vmatmul.bf16.gmra.mxu0 %v1032
        %v1148 = vpop.f32.mrf.mxu0
        %v1149 = vadd.f32 0.0, %v1148
        %v1150 = vpop.f32.mrf.mxu0
        %v1151 = vadd.f32 0.0, %v1150
        %1152 = vmatmul.bf16.gmra.mxu0 %v1035
        %v1153 = vpop.f32.mrf.mxu0
        %v1154 = vadd.f32 0.0, %v1153
        %v1155 = vpop.f32.mrf.mxu0
        %v1156 = vadd.f32 0.0, %v1155
        %1157 = vmatmul.bf16.gmra.mxu0 %v1038
        %v1158 = vpop.f32.mrf.mxu0
        %v1159 = vadd.f32 0.0, %v1158
        %v1160 = vpop.f32.mrf.mxu0
        %v1161 = vadd.f32 0.0, %v1160
        %1162 = vmatmul.bf16.gmra.mxu0 %v1041
        %v1163 = vpop.f32.mrf.mxu0
        %v1164 = vadd.f32 0.0, %v1163
        %v1165 = vpop.f32.mrf.mxu0
        %v1166 = vadd.f32 0.0, %v1165
        %1167 = vmatmul.bf16.gmra.mxu0 %v1044
        %v1168 = vpop.f32.mrf.mxu0
        %v1169 = vadd.f32 0.0, %v1168
        %v1170 = vpop.f32.mrf.mxu0
        %v1171 = vadd.f32 0.0, %v1170
        %1172 = vmatmul.bf16.gmra.mxu0 %v1047
        %v1173 = vpop.f32.mrf.mxu0
        %v1174 = vadd.f32 0.0, %v1173
        %v1175 = vpop.f32.mrf.mxu0
        %v1176 = vadd.f32 0.0, %v1175
        %1177 = vmatmul.bf16.gmra.mxu0 %v1050
        %v1178 = vpop.f32.mrf.mxu0
        %v1179 = vadd.f32 0.0, %v1178
        %v1180 = vpop.f32.mrf.mxu0
        %v1181 = vadd.f32 0.0, %v1180
        %1182 = vmatmul.bf16.gmra.mxu0 %v1053
        %v1183 = vpop.f32.mrf.mxu0
        %v1184 = vadd.f32 0.0, %v1183
        %v1185 = vpop.f32.mrf.mxu0
        %v1186 = vadd.f32 0.0, %v1185
        %1187 = vmatmul.bf16.gmra.mxu0 %v1056
        %v1188 = vpop.f32.mrf.mxu0
        %v1189 = vadd.f32 0.0, %v1188
        %v1190 = vpop.f32.mrf.mxu0
        %v1191 = vadd.f32 0.0, %v1190
        %1192 = vmatmul.bf16.gmra.mxu0 %v1059
        %v1193 = vpop.f32.mrf.mxu0
        %v1194 = vadd.f32 0.0, %v1193
        %v1195 = vpop.f32.mrf.mxu0
        %v1196 = vadd.f32 0.0, %v1195
        %1197 = vmatmul.bf16.gmra.mxu0 %v1062
        %v1198 = vpop.f32.mrf.mxu0
        %v1199 = vadd.f32 0.0, %v1198
        %v1200 = vpop.f32.mrf.mxu0
        %v1201 = vadd.f32 0.0, %v1200
        %1202 = vmatmul.bf16.gmra.mxu0 %v1065
        %v1203 = vpop.f32.mrf.mxu0
        %v1204 = vadd.f32 0.0, %v1203
        %v1205 = vpop.f32.mrf.mxu0
        %v1206 = vadd.f32 0.0, %v1205
        %1207 = vmatmul.bf16.gmra.mxu0 %v1068
        %v1208 = vpop.f32.mrf.mxu0
        %v1209 = vadd.f32 0.0, %v1208
        %v1210 = vpop.f32.mrf.mxu0
        %v1211 = vadd.f32 0.0, %v1210
        %1212 = vmatmul.bf16.gmra.mxu0 %v1071
        %v1213 = vpop.f32.mrf.mxu0
        %v1214 = vadd.f32 0.0, %v1213
        %v1215 = vpop.f32.mrf.mxu0
        %v1216 = vadd.f32 0.0, %v1215
        %1217 = vmatmul.bf16.gmra.mxu0 %v1074
        %v1218 = vpop.f32.mrf.mxu0
        %v1219 = vadd.f32 0.0, %v1218
        %v1220 = vpop.f32.mrf.mxu0
        %v1221 = vadd.f32 0.0, %v1220
        %1222 = vmatmul.bf16.gmra.mxu0 %v1077
        %v1223 = vpop.f32.mrf.mxu0
        %v1224 = vadd.f32 0.0, %v1223
        %v1225 = vpop.f32.mrf.mxu0
        %v1226 = vadd.f32 0.0, %v1225
        %1227 = vmatmul.bf16.gmra.mxu0 %v1080
        %v1228 = vpop.f32.mrf.mxu0
        %v1229 = vadd.f32 0.0, %v1228
        %v1230 = vpop.f32.mrf.mxu0
        %v1231 = vadd.f32 0.0, %v1230
        %1232 = vmatmul.bf16.gmra.mxu0 %v1083
        %v1233 = vpop.f32.mrf.mxu0
        %v1234 = vadd.f32 0.0, %v1233
        %v1235 = vpop.f32.mrf.mxu0
        %v1236 = vadd.f32 0.0, %v1235
        %1237 = vmatmul.bf16.gmra.mxu0 %v1086
        %v1238 = vpop.f32.mrf.mxu0
        %v1239 = vadd.f32 0.0, %v1238
        %v1240 = vpop.f32.mrf.mxu0
        %v1241 = vadd.f32 0.0, %v1240
        %1242 = vmatmul.bf16.gmra.mxu0 %v1089
        %v1243 = vpop.f32.mrf.mxu0
        %v1244 = vadd.f32 0.0, %v1243
        %v1245 = vpop.f32.mrf.mxu0
        %v1246 = vadd.f32 0.0, %v1245
        %1247 = vmatmul.bf16.gmra.mxu0 %v1092
        %v1248 = vpop.f32.mrf.mxu0
        %v1249 = vadd.f32 0.0, %v1248
        %v1250 = vpop.f32.mrf.mxu0
        %v1251 = vadd.f32 0.0, %v1250
        %1252 = vmatmul.bf16.gmra.mxu0 %v1095
        %v1253 = vpop.f32.mrf.mxu0
        %v1254 = vadd.f32 0.0, %v1253
        %v1255 = vpop.f32.mrf.mxu0
        %v1256 = vadd.f32 0.0, %v1255
        %1257 = vmatmul.bf16.gmra.mxu0 %v1098
        %v1258 = vpop.f32.mrf.mxu0
        %v1259 = vadd.f32 0.0, %v1258
        %v1260 = vpop.f32.mrf.mxu0
        %v1261 = vadd.f32 0.0, %v1260
        %1262 = vmatmul.bf16.gmra.mxu0 %v1101
        %v1263 = vpop.f32.mrf.mxu0
        %v1264 = vadd.f32 0.0, %v1263
        %v1265 = vpop.f32.mrf.mxu0
        %v1266 = vadd.f32 0.0, %v1265
        %1267 = vmatmul.bf16.gmra.mxu0 %v1104
        %v1268 = vpop.f32.mrf.mxu0
        %v1269 = vadd.f32 0.0, %v1268
        %v1270 = vpop.f32.mrf.mxu0
        %v1271 = vadd.f32 0.0, %v1270
        %1272 = vmatmul.bf16.gmra.mxu0 %v1107
        %v1273 = vpop.f32.mrf.mxu0
        %v1274 = vadd.f32 0.0, %v1273
        %v1275 = vpop.f32.mrf.mxu0
        %v1276 = vadd.f32 0.0, %v1275
        %1277 = vmatmul.bf16.gmra.mxu0 %v1110
        %v1278 = vpop.f32.mrf.mxu0
        %v1279 = vadd.f32 0.0, %v1278
        %v1280 = vpop.f32.mrf.mxu0
        %v1281 = vadd.f32 0.0, %v1280
        %1282 = vmatmul.bf16.gmra.mxu0 %v1113
        %v1283 = vpop.f32.mrf.mxu0
        %v1284 = vadd.f32 0.0, %v1283
        %v1285 = vpop.f32.mrf.mxu0
        %v1286 = vadd.f32 0.0, %v1285
        %1287 = vmatmul.bf16.gmra.mxu0 %v1116
        %v1288 = vpop.f32.mrf.mxu0
        %v1289 = vadd.f32 0.0, %v1288
        %v1290 = vpop.f32.mrf.mxu0
        %v1291 = vadd.f32 0.0, %v1290
        %1292 = vmatmul.bf16.gmra.mxu0 %v1119
        %v1293 = vpop.f32.mrf.mxu0
        %v1294 = vadd.f32 0.0, %v1293
        %v1295 = vpop.f32.mrf.mxu0
        %v1296 = vadd.f32 0.0, %v1295
        %1297 = vmatmul.bf16.gmra.mxu0 %v1122
        %v1298 = vpop.f32.mrf.mxu0
        %v1299 = vadd.f32 0.0, %v1298
        %v1300 = vpop.f32.mrf.mxu0
        %v1301 = vadd.f32 0.0, %v1300
        %1302 = vmatmul.bf16.gmra.mxu0 %v1125
        %v1303 = vpop.f32.mrf.mxu0
        %v1304 = vadd.f32 0.0, %v1303
        %v1305 = vpop.f32.mrf.mxu0
        %v1306 = vadd.f32 0.0, %v1305
        %1307 = vmatmul.bf16.gmra.mxu0 %v1128
        %v1308 = vpop.f32.mrf.mxu0
        %v1309 = vadd.f32 0.0, %v1308
        %v1310 = vpop.f32.mrf.mxu0
        %v1311 = vadd.f32 0.0, %v1310
        %1312 = vmatmul.bf16.gmra.mxu0 %v1131
        %v1313 = vpop.f32.mrf.mxu0
        %v1314 = vadd.f32 0.0, %v1313
        %v1315 = vpop.f32.mrf.mxu0
        %v1316 = vadd.f32 0.0, %v1315
        %1317 = vmatmul.bf16.gmra.mxu0 %v1134
        %v1318 = vpop.f32.mrf.mxu0
        %v1319 = vadd.f32 0.0, %v1318
        %v1320 = vpop.f32.mrf.mxu0
        %v1321 = vadd.f32 0.0, %v1320
        %1322 = vmatmul.bf16.gmra.mxu0 %v1137
        %v1323 = vpop.f32.mrf.mxu0
        %v1324 = vadd.f32 0.0, %v1323
        %v1325 = vpop.f32.mrf.mxu0
        %v1326 = vadd.f32 0.0, %v1325
        %1327 = vdwg.mxu0
        %v1328 = vld [vmem:[%s7] sm:$0x1]
        %v1329 = vperm.slane %v1328, 0
        %v1330 = vmul.f32 %v1149, %v1329
        %v1331 = vmul.f32 %v1151, %v1329
        %v1332 = vmul.f32 %v1154, %v1329
        %v1333 = vmul.f32 %v1156, %v1329
        %v1334 = vmul.f32 %v1159, %v1329
        %v1335 = vmul.f32 %v1161, %v1329
        %v1336 = vmul.f32 %v1164, %v1329
        %v1337 = vmul.f32 %v1166, %v1329
        %v1338 = vadd.f32 %v1330, 0.0
        %v1339 = vadd.f32 %v1331, 0.0
        %v1340 = vadd.f32 %v1332, 0.0
        %v1341 = vadd.f32 %v1333, 0.0
        %v1342 = vadd.f32 %v1334, 0.0
        %v1343 = vadd.f32 %v1335, 0.0
        %v1344 = vadd.f32 %v1336, 0.0
        %v1345 = vadd.f32 %v1337, 0.0
        %v1346 = vld [vmem:[%s7 + $0x1] sm:$0x1]
        %v1347 = vperm.slane %v1346, 0
        %v1348 = vmul.f32 %v1169, %v1347
        %v1349 = vmul.f32 %v1171, %v1347
        %v1350 = vmul.f32 %v1174, %v1347
        %v1351 = vmul.f32 %v1176, %v1347
        %v1352 = vmul.f32 %v1179, %v1347
        %v1353 = vmul.f32 %v1181, %v1347
        %v1354 = vmul.f32 %v1184, %v1347
        %v1355 = vmul.f32 %v1186, %v1347
        %v1356 = vadd.f32 %v1338, %v1348
        %v1357 = vadd.f32 %v1339, %v1349
        %v1358 = vadd.f32 %v1340, %v1350
        %v1359 = vadd.f32 %v1341, %v1351
        %v1360 = vadd.f32 %v1342, %v1352
        %v1361 = vadd.f32 %v1343, %v1353
        %v1362 = vadd.f32 %v1344, %v1354
        %v1363 = vadd.f32 %v1345, %v1355
        %v1364 = vld [vmem:[%s7 + $0x2] sm:$0x1]
        %v1365 = vperm.slane %v1364, 0
        %v1366 = vmul.f32 %v1189, %v1365
        %v1367 = vmul.f32 %v1191, %v1365
        %v1368 = vmul.f32 %v1194, %v1365
        %v1369 = vmul.f32 %v1196, %v1365
        %v1370 = vmul.f32 %v1199, %v1365
        %v1371 = vmul.f32 %v1201, %v1365
        %v1372 = vmul.f32 %v1204, %v1365
        %v1373 = vmul.f32 %v1206, %v1365
        %v1374 = vadd.f32 %v1356, %v1366
        %v1375 = vadd.f32 %v1357, %v1367
        %v1376 = vadd.f32 %v1358, %v1368
        %v1377 = vadd.f32 %v1359, %v1369
        %v1378 = vadd.f32 %v1360, %v1370
        %v1379 = vadd.f32 %v1361, %v1371
        %v1380 = vadd.f32 %v1362, %v1372
        %v1381 = vadd.f32 %v1363, %v1373
        %v1382 = vld [vmem:[%s7 + $0x3] sm:$0x1]
        %v1383 = vperm.slane %v1382, 0
        %v1384 = vmul.f32 %v1209, %v1383
        %v1385 = vmul.f32 %v1211, %v1383
        %v1386 = vmul.f32 %v1214, %v1383
        %v1387 = vmul.f32 %v1216, %v1383
        %v1388 = vmul.f32 %v1219, %v1383
        %v1389 = vmul.f32 %v1221, %v1383
        %v1390 = vmul.f32 %v1224, %v1383
        %v1391 = vmul.f32 %v1226, %v1383
        %v1392 = vadd.f32 %v1374, %v1384
        %v1393 = vadd.f32 %v1375, %v1385
        %v1394 = vadd.f32 %v1376, %v1386
        %v1395 = vadd.f32 %v1377, %v1387
        %v1396 = vadd.f32 %v1378, %v1388
        %v1397 = vadd.f32 %v1379, %v1389
        %v1398 = vadd.f32 %v1380, %v1390
        %v1399 = vadd.f32 %v1381, %v1391
        %v1400 = vld [vmem:[%s7 + $0x4] sm:$0x1]
        %v1401 = vperm.slane %v1400, 0
        %v1402 = vmul.f32 %v1229, %v1401
        %v1403 = vmul.f32 %v1231, %v1401
        %v1404 = vmul.f32 %v1234, %v1401
        %v1405 = vmul.f32 %v1236, %v1401
        %v1406 = vmul.f32 %v1239, %v1401
        %v1407 = vmul.f32 %v1241, %v1401
        %v1408 = vmul.f32 %v1244, %v1401
        %v1409 = vmul.f32 %v1246, %v1401
        %v1410 = vadd.f32 %v1392, %v1402
        %v1411 = vadd.f32 %v1393, %v1403
        %v1412 = vadd.f32 %v1394, %v1404
        %v1413 = vadd.f32 %v1395, %v1405
        %v1414 = vadd.f32 %v1396, %v1406
        %v1415 = vadd.f32 %v1397, %v1407
        %v1416 = vadd.f32 %v1398, %v1408
        %v1417 = vadd.f32 %v1399, %v1409
        %v1418 = vld [vmem:[%s7 + $0x5] sm:$0x1]
        %v1419 = vperm.slane %v1418, 0
        %v1420 = vmul.f32 %v1249, %v1419
        %v1421 = vmul.f32 %v1251, %v1419
        %v1422 = vmul.f32 %v1254, %v1419
        %v1423 = vmul.f32 %v1256, %v1419
        %v1424 = vmul.f32 %v1259, %v1419
        %v1425 = vmul.f32 %v1261, %v1419
        %v1426 = vmul.f32 %v1264, %v1419
        %v1427 = vmul.f32 %v1266, %v1419
        %v1428 = vadd.f32 %v1410, %v1420
        %v1429 = vadd.f32 %v1411, %v1421
        %v1430 = vadd.f32 %v1412, %v1422
        %v1431 = vadd.f32 %v1413, %v1423
        %v1432 = vadd.f32 %v1414, %v1424
        %v1433 = vadd.f32 %v1415, %v1425
        %v1434 = vadd.f32 %v1416, %v1426
        %v1435 = vadd.f32 %v1417, %v1427
        %v1436 = vld [vmem:[%s7 + $0x6] sm:$0x1]
        %v1437 = vperm.slane %v1436, 0
        %v1438 = vmul.f32 %v1269, %v1437
        %v1439 = vmul.f32 %v1271, %v1437
        %v1440 = vmul.f32 %v1274, %v1437
        %v1441 = vmul.f32 %v1276, %v1437
        %v1442 = vmul.f32 %v1279, %v1437
        %v1443 = vmul.f32 %v1281, %v1437
        %v1444 = vmul.f32 %v1284, %v1437
        %v1445 = vmul.f32 %v1286, %v1437
        %v1446 = vadd.f32 %v1428, %v1438
        %v1447 = vadd.f32 %v1429, %v1439
        %v1448 = vadd.f32 %v1430, %v1440
        %v1449 = vadd.f32 %v1431, %v1441
        %v1450 = vadd.f32 %v1432, %v1442
        %v1451 = vadd.f32 %v1433, %v1443
        %v1452 = vadd.f32 %v1434, %v1444
        %v1453 = vadd.f32 %v1435, %v1445
        %v1454 = vld [vmem:[%s7 + $0x7] sm:$0x1]
        %v1455 = vperm.slane %v1454, 0
        %v1456 = vmul.f32 %v1289, %v1455
        %v1457 = vmul.f32 %v1291, %v1455
        %v1458 = vmul.f32 %v1294, %v1455
        %v1459 = vmul.f32 %v1296, %v1455
        %v1460 = vmul.f32 %v1299, %v1455
        %v1461 = vmul.f32 %v1301, %v1455
        %v1462 = vmul.f32 %v1304, %v1455
        %v1463 = vmul.f32 %v1306, %v1455
        %v1464 = vadd.f32 %v1446, %v1456
        %v1465 = vadd.f32 %v1447, %v1457
        %v1466 = vadd.f32 %v1448, %v1458
        %v1467 = vadd.f32 %v1449, %v1459
        %v1468 = vadd.f32 %v1450, %v1460
        %v1469 = vadd.f32 %v1451, %v1461
        %v1470 = vadd.f32 %v1452, %v1462
        %v1471 = vadd.f32 %v1453, %v1463
        %v1472 = vld [vmem:[%s7 + $0x8] sm:$0x1]
        %v1473 = vperm.slane %v1472, 0
        %v1474 = vmul.f32 %v1309, %v1473
        %v1475 = vmul.f32 %v1311, %v1473
        %v1476 = vmul.f32 %v1314, %v1473
        %v1477 = vmul.f32 %v1316, %v1473
        %v1478 = vmul.f32 %v1319, %v1473
        %v1479 = vmul.f32 %v1321, %v1473
        %v1480 = vmul.f32 %v1324, %v1473
        %v1481 = vmul.f32 %v1326, %v1473
        %v1482 = vadd.f32 %v1464, %v1474
        %v1483 = vadd.f32 %v1465, %v1475
        %v1484 = vadd.f32 %v1466, %v1476
        %v1485 = vadd.f32 %v1467, %v1477
        %v1486 = vadd.f32 %v1468, %v1478
        %v1487 = vadd.f32 %v1469, %v1479
        %v1488 = vadd.f32 %v1470, %v1480
        %v1489 = vadd.f32 %v1471, %v1481
        %v1490 = vld [vmem:[%s8] sm:$0x1]
        %v1491 = vperm.slane %v1490, 0
        %v1492 = vadd.f32 %v1482, %v1491
        %v1493 = vadd.f32 %v1483, %v1491
        %v1494 = vadd.f32 %v1484, %v1491
        %v1495 = vadd.f32 %v1485, %v1491
        %v1496 = vadd.f32 %v1486, %v1491
        %v1497 = vadd.f32 %v1487, %v1491
        %v1498 = vadd.f32 %v1488, %v1491
        %v1499 = vadd.f32 %v1489, %v1491
        %v1500 = vmax.f32 %v1492, 0.0
        %v1501 = vmax.f32 %v1493, 0.0
        %v1502 = vmax.f32 %v1494, 0.0
        %v1503 = vmax.f32 %v1495, 0.0
        %v1504 = vmax.f32 %v1496, 0.0
        %v1505 = vmax.f32 %v1497, 0.0
        %v1506 = vmax.f32 %v1498, 0.0
        %v1507 = vmax.f32 %v1499, 0.0
        %v1508 = vpack.c.bf16 %v1501, %v1500
        %v1509 = vpack.c.bf16 %v1503, %v1502
        %v1510 = vpack.c.bf16 %v1505, %v1504
        %v1511 = vpack.c.bf16 %v1507, %v1506
        %v1512 = vld [vmem:[%s5] sm:$0xf]
        %v1513 = vld [vmem:[%s5 + $0x4] sm:$0xf]
        %v1514 = vld [vmem:[%s5 + $0x8] sm:$0xf]
        %v1515 = vld [vmem:[%s5 + $0xc] sm:$0xf]
        %v1516 = vld [vmem:[%s5 + $0x10] sm:$0xf]
        %v1517 = vld [vmem:[%s5 + $0x14] sm:$0xf]
        %v1518 = vld [vmem:[%s5 + $0x18] sm:$0xf]
        %v1519 = vld [vmem:[%s5 + $0x1c] sm:$0xf]
        %v1528 = vunpack.c.l.b16 %v1512
        %v1529 = vunpack.c.l.b16 %v1513
        %v1530 = vunpack.c.l.b16 %v1514
        %v1531 = vunpack.c.l.b16 %v1515
        %v1532 = vunpack.c.l.b16 %v1516
        %v1533 = vunpack.c.l.b16 %v1517
        %v1534 = vunpack.c.l.b16 %v1518
        %v1535 = vunpack.c.l.b16 %v1519
        %v1536 = vpack.c.b16 %v1529, %v1528
        %v1537 = vpack.c.b16 %v1531, %v1530
        %v1538 = vpack.c.b16 %v1533, %v1532
        %v1539 = vpack.c.b16 %v1535, %v1534
        %v1545 = vsel %vm1030, %v1508, 0
        %v1548 = vsel %vm1030, %v1509, 0
        %v1551 = vsel %vm1030, %v1510, 0
        %v1554 = vsel %vm1030, %v1511, 0
        %1556 = vmatpush.bf16.msra.mxu0 0
        %1557 = vmatpush.bf16.msra.mxu0 0
        %1558 = vmatpush.bf16.msra.mxu0 0
        %1559 = vmatpush.bf16.msra.mxu0 0
        %1560 = vmatpush.bf16.msra.mxu0 %v1539
        %1561 = vmatpush.bf16.msra.mxu0 %v1538
        %1562 = vmatpush.bf16.msra.mxu0 %v1537
        %1563 = vmatpush.bf16.msra.mxu0 %v1536
        %1564 = vmatmul.bf16.gmra.mxu0 %v1545
        %v1565 = vpop.f32.mrf.mxu0
        %v1566 = vadd.f32 0.0, %v1565
        %v1567 = vpop.f32.mrf.mxu0
        %v1568 = vadd.f32 0.0, %v1567
        %1569 = vmatmul.bf16.gmra.mxu0 %v1548
        %v1570 = vpop.f32.mrf.mxu0
        %v1571 = vadd.f32 0.0, %v1570
        %v1572 = vpop.f32.mrf.mxu0
        %v1573 = vadd.f32 0.0, %v1572
        %1574 = vmatmul.bf16.gmra.mxu0 %v1551
        %v1575 = vpop.f32.mrf.mxu0
        %v1576 = vadd.f32 0.0, %v1575
        %v1577 = vpop.f32.mrf.mxu0
        %v1578 = vadd.f32 0.0, %v1577
        %1579 = vmatmul.bf16.gmra.mxu0 %v1554
        %v1580 = vpop.f32.mrf.mxu0
        %v1581 = vadd.f32 0.0, %v1580
        %v1582 = vpop.f32.mrf.mxu0
        %v1583 = vadd.f32 0.0, %v1582
        %1584 = vdwg.mxu0
        %v1585 = vpack.c.bf16 %v1568, %v1566
        %v1586 = vpack.c.bf16 %v1573, %v1571
        %v1587 = vpack.c.bf16 %v1578, %v1576
        %v1588 = vpack.c.bf16 %v1583, %v1581
        %1589 = vmatpush.bf16.msra.mxu0 0
        %1590 = vmatpush.bf16.msra.mxu0 0
        %1591 = vmatpush.bf16.msra.mxu0 0
        %1592 = vmatpush.bf16.msra.mxu0 0
        %1593 = vmatpush.bf16.msra.mxu0 %v1588
        %1594 = vmatpush.bf16.msra.mxu0 %v1587
        %1595 = vmatpush.bf16.msra.mxu0 %v1586
        %1596 = vmatpush.bf16.msra.mxu0 %v1585
        %1597 = vmatmul.bf16.gmra.mxu0 %v1032
        %v1598 = vpop.f32.mrf.mxu0
        %v1599 = vadd.f32 0.0, %v1598
        %v1600 = vpop.f32.mrf.mxu0
        %v1601 = vadd.f32 0.0, %v1600
        %1602 = vmatmul.bf16.gmra.mxu0 %v1035
        %v1603 = vpop.f32.mrf.mxu0
        %v1604 = vadd.f32 0.0, %v1603
        %v1605 = vpop.f32.mrf.mxu0
        %v1606 = vadd.f32 0.0, %v1605
        %1607 = vmatmul.bf16.gmra.mxu0 %v1038
        %v1608 = vpop.f32.mrf.mxu0
        %v1609 = vadd.f32 0.0, %v1608
        %v1610 = vpop.f32.mrf.mxu0
        %v1611 = vadd.f32 0.0, %v1610
        %1612 = vmatmul.bf16.gmra.mxu0 %v1041
        %v1613 = vpop.f32.mrf.mxu0
        %v1614 = vadd.f32 0.0, %v1613
        %v1615 = vpop.f32.mrf.mxu0
        %v1616 = vadd.f32 0.0, %v1615
        %1617 = vmatmul.bf16.gmra.mxu0 %v1044
        %v1618 = vpop.f32.mrf.mxu0
        %v1619 = vadd.f32 0.0, %v1618
        %v1620 = vpop.f32.mrf.mxu0
        %v1621 = vadd.f32 0.0, %v1620
        %1622 = vmatmul.bf16.gmra.mxu0 %v1047
        %v1623 = vpop.f32.mrf.mxu0
        %v1624 = vadd.f32 0.0, %v1623
        %v1625 = vpop.f32.mrf.mxu0
        %v1626 = vadd.f32 0.0, %v1625
        %1627 = vmatmul.bf16.gmra.mxu0 %v1050
        %v1628 = vpop.f32.mrf.mxu0
        %v1629 = vadd.f32 0.0, %v1628
        %v1630 = vpop.f32.mrf.mxu0
        %v1631 = vadd.f32 0.0, %v1630
        %1632 = vmatmul.bf16.gmra.mxu0 %v1053
        %v1633 = vpop.f32.mrf.mxu0
        %v1634 = vadd.f32 0.0, %v1633
        %v1635 = vpop.f32.mrf.mxu0
        %v1636 = vadd.f32 0.0, %v1635
        %1637 = vmatmul.bf16.gmra.mxu0 %v1056
        %v1638 = vpop.f32.mrf.mxu0
        %v1639 = vadd.f32 0.0, %v1638
        %v1640 = vpop.f32.mrf.mxu0
        %v1641 = vadd.f32 0.0, %v1640
        %1642 = vmatmul.bf16.gmra.mxu0 %v1059
        %v1643 = vpop.f32.mrf.mxu0
        %v1644 = vadd.f32 0.0, %v1643
        %v1645 = vpop.f32.mrf.mxu0
        %v1646 = vadd.f32 0.0, %v1645
        %1647 = vmatmul.bf16.gmra.mxu0 %v1062
        %v1648 = vpop.f32.mrf.mxu0
        %v1649 = vadd.f32 0.0, %v1648
        %v1650 = vpop.f32.mrf.mxu0
        %v1651 = vadd.f32 0.0, %v1650
        %1652 = vmatmul.bf16.gmra.mxu0 %v1065
        %v1653 = vpop.f32.mrf.mxu0
        %v1654 = vadd.f32 0.0, %v1653
        %v1655 = vpop.f32.mrf.mxu0
        %v1656 = vadd.f32 0.0, %v1655
        %1657 = vmatmul.bf16.gmra.mxu0 %v1068
        %v1658 = vpop.f32.mrf.mxu0
        %v1659 = vadd.f32 0.0, %v1658
        %v1660 = vpop.f32.mrf.mxu0
        %v1661 = vadd.f32 0.0, %v1660
        %1662 = vmatmul.bf16.gmra.mxu0 %v1071
        %v1663 = vpop.f32.mrf.mxu0
        %v1664 = vadd.f32 0.0, %v1663
        %v1665 = vpop.f32.mrf.mxu0
        %v1666 = vadd.f32 0.0, %v1665
        %1667 = vmatmul.bf16.gmra.mxu0 %v1074
        %v1668 = vpop.f32.mrf.mxu0
        %v1669 = vadd.f32 0.0, %v1668
        %v1670 = vpop.f32.mrf.mxu0
        %v1671 = vadd.f32 0.0, %v1670
        %1672 = vmatmul.bf16.gmra.mxu0 %v1077
        %v1673 = vpop.f32.mrf.mxu0
        %v1674 = vadd.f32 0.0, %v1673
        %v1675 = vpop.f32.mrf.mxu0
        %v1676 = vadd.f32 0.0, %v1675
        %1677 = vmatmul.bf16.gmra.mxu0 %v1080
        %v1678 = vpop.f32.mrf.mxu0
        %v1679 = vadd.f32 0.0, %v1678
        %v1680 = vpop.f32.mrf.mxu0
        %v1681 = vadd.f32 0.0, %v1680
        %1682 = vmatmul.bf16.gmra.mxu0 %v1083
        %v1683 = vpop.f32.mrf.mxu0
        %v1684 = vadd.f32 0.0, %v1683
        %v1685 = vpop.f32.mrf.mxu0
        %v1686 = vadd.f32 0.0, %v1685
        %1687 = vmatmul.bf16.gmra.mxu0 %v1086
        %v1688 = vpop.f32.mrf.mxu0
        %v1689 = vadd.f32 0.0, %v1688
        %v1690 = vpop.f32.mrf.mxu0
        %v1691 = vadd.f32 0.0, %v1690
        %1692 = vmatmul.bf16.gmra.mxu0 %v1089
        %v1693 = vpop.f32.mrf.mxu0
        %v1694 = vadd.f32 0.0, %v1693
        %v1695 = vpop.f32.mrf.mxu0
        %v1696 = vadd.f32 0.0, %v1695
        %1697 = vmatmul.bf16.gmra.mxu0 %v1092
        %v1698 = vpop.f32.mrf.mxu0
        %v1699 = vadd.f32 0.0, %v1698
        %v1700 = vpop.f32.mrf.mxu0
        %v1701 = vadd.f32 0.0, %v1700
        %1702 = vmatmul.bf16.gmra.mxu0 %v1095
        %v1703 = vpop.f32.mrf.mxu0
        %v1704 = vadd.f32 0.0, %v1703
        %v1705 = vpop.f32.mrf.mxu0
        %v1706 = vadd.f32 0.0, %v1705
        %1707 = vmatmul.bf16.gmra.mxu0 %v1098
        %v1708 = vpop.f32.mrf.mxu0
        %v1709 = vadd.f32 0.0, %v1708
        %v1710 = vpop.f32.mrf.mxu0
        %v1711 = vadd.f32 0.0, %v1710
        %1712 = vmatmul.bf16.gmra.mxu0 %v1101
        %v1713 = vpop.f32.mrf.mxu0
        %v1714 = vadd.f32 0.0, %v1713
        %v1715 = vpop.f32.mrf.mxu0
        %v1716 = vadd.f32 0.0, %v1715
        %1717 = vmatmul.bf16.gmra.mxu0 %v1104
        %v1718 = vpop.f32.mrf.mxu0
        %v1719 = vadd.f32 0.0, %v1718
        %v1720 = vpop.f32.mrf.mxu0
        %v1721 = vadd.f32 0.0, %v1720
        %1722 = vmatmul.bf16.gmra.mxu0 %v1107
        %v1723 = vpop.f32.mrf.mxu0
        %v1724 = vadd.f32 0.0, %v1723
        %v1725 = vpop.f32.mrf.mxu0
        %v1726 = vadd.f32 0.0, %v1725
        %1727 = vmatmul.bf16.gmra.mxu0 %v1110
        %v1728 = vpop.f32.mrf.mxu0
        %v1729 = vadd.f32 0.0, %v1728
        %v1730 = vpop.f32.mrf.mxu0
        %v1731 = vadd.f32 0.0, %v1730
        %1732 = vmatmul.bf16.gmra.mxu0 %v1113
        %v1733 = vpop.f32.mrf.mxu0
        %v1734 = vadd.f32 0.0, %v1733
        %v1735 = vpop.f32.mrf.mxu0
        %v1736 = vadd.f32 0.0, %v1735
        %1737 = vmatmul.bf16.gmra.mxu0 %v1116
        %v1738 = vpop.f32.mrf.mxu0
        %v1739 = vadd.f32 0.0, %v1738
        %v1740 = vpop.f32.mrf.mxu0
        %v1741 = vadd.f32 0.0, %v1740
        %1742 = vmatmul.bf16.gmra.mxu0 %v1119
        %v1743 = vpop.f32.mrf.mxu0
        %v1744 = vadd.f32 0.0, %v1743
        %v1745 = vpop.f32.mrf.mxu0
        %v1746 = vadd.f32 0.0, %v1745
        %1747 = vmatmul.bf16.gmra.mxu0 %v1122
        %v1748 = vpop.f32.mrf.mxu0
        %v1749 = vadd.f32 0.0, %v1748
        %v1750 = vpop.f32.mrf.mxu0
        %v1751 = vadd.f32 0.0, %v1750
        %1752 = vmatmul.bf16.gmra.mxu0 %v1125
        %v1753 = vpop.f32.mrf.mxu0
        %v1754 = vadd.f32 0.0, %v1753
        %v1755 = vpop.f32.mrf.mxu0
        %v1756 = vadd.f32 0.0, %v1755
        %1757 = vmatmul.bf16.gmra.mxu0 %v1128
        %v1758 = vpop.f32.mrf.mxu0
        %v1759 = vadd.f32 0.0, %v1758
        %v1760 = vpop.f32.mrf.mxu0
        %v1761 = vadd.f32 0.0, %v1760
        %1762 = vmatmul.bf16.gmra.mxu0 %v1131
        %v1763 = vpop.f32.mrf.mxu0
        %v1764 = vadd.f32 0.0, %v1763
        %v1765 = vpop.f32.mrf.mxu0
        %v1766 = vadd.f32 0.0, %v1765
        %1767 = vmatmul.bf16.gmra.mxu0 %v1134
        %v1768 = vpop.f32.mrf.mxu0
        %v1769 = vadd.f32 0.0, %v1768
        %v1770 = vpop.f32.mrf.mxu0
        %v1771 = vadd.f32 0.0, %v1770
        %1772 = vmatmul.bf16.gmra.mxu0 %v1137
        %v1773 = vpop.f32.mrf.mxu0
        %v1774 = vadd.f32 0.0, %v1773
        %v1775 = vpop.f32.mrf.mxu0
        %v1776 = vadd.f32 0.0, %v1775
        %1777 = vdwg.mxu0
        %v1778 = vld [vmem:[%s7 + $0x9] sm:$0x1]
        %v1779 = vperm.slane %v1778, 0
        %v1780 = vmul.f32 %v1599, %v1779
        %v1781 = vmul.f32 %v1601, %v1779
        %v1782 = vmul.f32 %v1604, %v1779
        %v1783 = vmul.f32 %v1606, %v1779
        %v1784 = vmul.f32 %v1609, %v1779
        %v1785 = vmul.f32 %v1611, %v1779
        %v1786 = vmul.f32 %v1614, %v1779
        %v1787 = vmul.f32 %v1616, %v1779
        %v1788 = vadd.f32 %v1780, 0.0
        %v1789 = vadd.f32 %v1781, 0.0
        %v1790 = vadd.f32 %v1782, 0.0
        %v1791 = vadd.f32 %v1783, 0.0
        %v1792 = vadd.f32 %v1784, 0.0
        %v1793 = vadd.f32 %v1785, 0.0
        %v1794 = vadd.f32 %v1786, 0.0
        %v1795 = vadd.f32 %v1787, 0.0
        %v1796 = vld [vmem:[%s7 + $0xa] sm:$0x1]
        %v1797 = vperm.slane %v1796, 0
        %v1798 = vmul.f32 %v1619, %v1797
        %v1799 = vmul.f32 %v1621, %v1797
        %v1800 = vmul.f32 %v1624, %v1797
        %v1801 = vmul.f32 %v1626, %v1797
        %v1802 = vmul.f32 %v1629, %v1797
        %v1803 = vmul.f32 %v1631, %v1797
        %v1804 = vmul.f32 %v1634, %v1797
        %v1805 = vmul.f32 %v1636, %v1797
        %v1806 = vadd.f32 %v1788, %v1798
        %v1807 = vadd.f32 %v1789, %v1799
        %v1808 = vadd.f32 %v1790, %v1800
        %v1809 = vadd.f32 %v1791, %v1801
        %v1810 = vadd.f32 %v1792, %v1802
        %v1811 = vadd.f32 %v1793, %v1803
        %v1812 = vadd.f32 %v1794, %v1804
        %v1813 = vadd.f32 %v1795, %v1805
        %v1814 = vld [vmem:[%s7 + $0xb] sm:$0x1]
        %v1815 = vperm.slane %v1814, 0
        %v1816 = vmul.f32 %v1639, %v1815
        %v1817 = vmul.f32 %v1641, %v1815
        %v1818 = vmul.f32 %v1644, %v1815
        %v1819 = vmul.f32 %v1646, %v1815
        %v1820 = vmul.f32 %v1649, %v1815
        %v1821 = vmul.f32 %v1651, %v1815
        %v1822 = vmul.f32 %v1654, %v1815
        %v1823 = vmul.f32 %v1656, %v1815
        %v1824 = vadd.f32 %v1806, %v1816
        %v1825 = vadd.f32 %v1807, %v1817
        %v1826 = vadd.f32 %v1808, %v1818
        %v1827 = vadd.f32 %v1809, %v1819
        %v1828 = vadd.f32 %v1810, %v1820
        %v1829 = vadd.f32 %v1811, %v1821
        %v1830 = vadd.f32 %v1812, %v1822
        %v1831 = vadd.f32 %v1813, %v1823
        %v1832 = vld [vmem:[%s7 + $0xc] sm:$0x1]
        %v1833 = vperm.slane %v1832, 0
        %v1834 = vmul.f32 %v1659, %v1833
        %v1835 = vmul.f32 %v1661, %v1833
        %v1836 = vmul.f32 %v1664, %v1833
        %v1837 = vmul.f32 %v1666, %v1833
        %v1838 = vmul.f32 %v1669, %v1833
        %v1839 = vmul.f32 %v1671, %v1833
        %v1840 = vmul.f32 %v1674, %v1833
        %v1841 = vmul.f32 %v1676, %v1833
        %v1842 = vadd.f32 %v1824, %v1834
        %v1843 = vadd.f32 %v1825, %v1835
        %v1844 = vadd.f32 %v1826, %v1836
        %v1845 = vadd.f32 %v1827, %v1837
        %v1846 = vadd.f32 %v1828, %v1838
        %v1847 = vadd.f32 %v1829, %v1839
        %v1848 = vadd.f32 %v1830, %v1840
        %v1849 = vadd.f32 %v1831, %v1841
        %v1850 = vld [vmem:[%s7 + $0xd] sm:$0x1]
        %v1851 = vperm.slane %v1850, 0
        %v1852 = vmul.f32 %v1679, %v1851
        %v1853 = vmul.f32 %v1681, %v1851
        %v1854 = vmul.f32 %v1684, %v1851
        %v1855 = vmul.f32 %v1686, %v1851
        %v1856 = vmul.f32 %v1689, %v1851
        %v1857 = vmul.f32 %v1691, %v1851
        %v1858 = vmul.f32 %v1694, %v1851
        %v1859 = vmul.f32 %v1696, %v1851
        %v1860 = vadd.f32 %v1842, %v1852
        %v1861 = vadd.f32 %v1843, %v1853
        %v1862 = vadd.f32 %v1844, %v1854
        %v1863 = vadd.f32 %v1845, %v1855
        %v1864 = vadd.f32 %v1846, %v1856
        %v1865 = vadd.f32 %v1847, %v1857
        %v1866 = vadd.f32 %v1848, %v1858
        %v1867 = vadd.f32 %v1849, %v1859
        %v1868 = vld [vmem:[%s7 + $0xe] sm:$0x1]
        %v1869 = vperm.slane %v1868, 0
        %v1870 = vmul.f32 %v1699, %v1869
        %v1871 = vmul.f32 %v1701, %v1869
        %v1872 = vmul.f32 %v1704, %v1869
        %v1873 = vmul.f32 %v1706, %v1869
        %v1874 = vmul.f32 %v1709, %v1869
        %v1875 = vmul.f32 %v1711, %v1869
        %v1876 = vmul.f32 %v1714, %v1869
        %v1877 = vmul.f32 %v1716, %v1869
        %v1878 = vadd.f32 %v1860, %v1870
        %v1879 = vadd.f32 %v1861, %v1871
        %v1880 = vadd.f32 %v1862, %v1872
        %v1881 = vadd.f32 %v1863, %v1873
        %v1882 = vadd.f32 %v1864, %v1874
        %v1883 = vadd.f32 %v1865, %v1875
        %v1884 = vadd.f32 %v1866, %v1876
        %v1885 = vadd.f32 %v1867, %v1877
        %v1886 = vld [vmem:[%s7 + $0xf] sm:$0x1]
        %v1887 = vperm.slane %v1886, 0
        %v1888 = vmul.f32 %v1719, %v1887
        %v1889 = vmul.f32 %v1721, %v1887
        %v1890 = vmul.f32 %v1724, %v1887
        %v1891 = vmul.f32 %v1726, %v1887
        %v1892 = vmul.f32 %v1729, %v1887
        %v1893 = vmul.f32 %v1731, %v1887
        %v1894 = vmul.f32 %v1734, %v1887
        %v1895 = vmul.f32 %v1736, %v1887
        %v1896 = vadd.f32 %v1878, %v1888
        %v1897 = vadd.f32 %v1879, %v1889
        %v1898 = vadd.f32 %v1880, %v1890
        %v1899 = vadd.f32 %v1881, %v1891
        %v1900 = vadd.f32 %v1882, %v1892
        %v1901 = vadd.f32 %v1883, %v1893
        %v1902 = vadd.f32 %v1884, %v1894
        %v1903 = vadd.f32 %v1885, %v1895
        %v1904 = vld [vmem:[%s7 + $0x10] sm:$0x1]
        %v1905 = vperm.slane %v1904, 0
        %v1906 = vmul.f32 %v1739, %v1905
        %v1907 = vmul.f32 %v1741, %v1905
        %v1908 = vmul.f32 %v1744, %v1905
        %v1909 = vmul.f32 %v1746, %v1905
        %v1910 = vmul.f32 %v1749, %v1905
        %v1911 = vmul.f32 %v1751, %v1905
        %v1912 = vmul.f32 %v1754, %v1905
        %v1913 = vmul.f32 %v1756, %v1905
        %v1914 = vadd.f32 %v1896, %v1906
        %v1915 = vadd.f32 %v1897, %v1907
        %v1916 = vadd.f32 %v1898, %v1908
        %v1917 = vadd.f32 %v1899, %v1909
        %v1918 = vadd.f32 %v1900, %v1910
        %v1919 = vadd.f32 %v1901, %v1911
        %v1920 = vadd.f32 %v1902, %v1912
        %v1921 = vadd.f32 %v1903, %v1913
        %v1922 = vld [vmem:[%s7 + $0x11] sm:$0x1]
        %v1923 = vperm.slane %v1922, 0
        %v1924 = vmul.f32 %v1759, %v1923
        %v1925 = vmul.f32 %v1761, %v1923
        %v1926 = vmul.f32 %v1764, %v1923
        %v1927 = vmul.f32 %v1766, %v1923
        %v1928 = vmul.f32 %v1769, %v1923
        %v1929 = vmul.f32 %v1771, %v1923
        %v1930 = vmul.f32 %v1774, %v1923
        %v1931 = vmul.f32 %v1776, %v1923
        %v1932 = vadd.f32 %v1914, %v1924
        %v1933 = vadd.f32 %v1915, %v1925
        %v1934 = vadd.f32 %v1916, %v1926
        %v1935 = vadd.f32 %v1917, %v1927
        %v1936 = vadd.f32 %v1918, %v1928
        %v1937 = vadd.f32 %v1919, %v1929
        %v1938 = vadd.f32 %v1920, %v1930
        %v1939 = vadd.f32 %v1921, %v1931
        %v1940 = vld [vmem:[%s8 + $0x1] sm:$0x1]
        %v1941 = vperm.slane %v1940, 0
        %v1942 = vadd.f32 %v1932, %v1941
        %v1943 = vadd.f32 %v1933, %v1941
        %v1944 = vadd.f32 %v1934, %v1941
        %v1945 = vadd.f32 %v1935, %v1941
        %v1946 = vadd.f32 %v1936, %v1941
        %v1947 = vadd.f32 %v1937, %v1941
        %v1948 = vadd.f32 %v1938, %v1941
        %v1949 = vadd.f32 %v1939, %v1941
        %v1950 = vmax.f32 %v1942, 0.0
        %v1951 = vmax.f32 %v1943, 0.0
        %v1952 = vmax.f32 %v1944, 0.0
        %v1953 = vmax.f32 %v1945, 0.0
        %v1954 = vmax.f32 %v1946, 0.0
        %v1955 = vmax.f32 %v1947, 0.0
        %v1956 = vmax.f32 %v1948, 0.0
        %v1957 = vmax.f32 %v1949, 0.0
        %v1958 = vpack.c.bf16 %v1951, %v1950
        %v1959 = vpack.c.bf16 %v1953, %v1952
        %v1960 = vpack.c.bf16 %v1955, %v1954
        %v1961 = vpack.c.bf16 %v1957, %v1956
        %s1962 = scalar_lea.vmem %s5, 32
        %v1963 = vld [vmem:[%s1962] sm:$0xf]
        %v1964 = vld [vmem:[%s1962 + $0x4] sm:$0xf]
        %v1965 = vld [vmem:[%s1962 + $0x8] sm:$0xf]
        %v1966 = vld [vmem:[%s1962 + $0xc] sm:$0xf]
        %v1967 = vld [vmem:[%s1962 + $0x10] sm:$0xf]
        %v1968 = vld [vmem:[%s1962 + $0x14] sm:$0xf]
        %v1969 = vld [vmem:[%s1962 + $0x18] sm:$0xf]
        %v1970 = vld [vmem:[%s1962 + $0x1c] sm:$0xf]
        %v1979 = vunpack.c.l.b16 %v1963
        %v1980 = vunpack.c.l.b16 %v1964
        %v1981 = vunpack.c.l.b16 %v1965
        %v1982 = vunpack.c.l.b16 %v1966
        %v1983 = vunpack.c.l.b16 %v1967
        %v1984 = vunpack.c.l.b16 %v1968
        %v1985 = vunpack.c.l.b16 %v1969
        %v1986 = vunpack.c.l.b16 %v1970
        %v1987 = vpack.c.b16 %v1980, %v1979
        %v1988 = vpack.c.b16 %v1982, %v1981
        %v1989 = vpack.c.b16 %v1984, %v1983
        %v1990 = vpack.c.b16 %v1986, %v1985
        %v1996 = vsel %vm1030, %v1958, 0
        %v1999 = vsel %vm1030, %v1959, 0
        %v2002 = vsel %vm1030, %v1960, 0
        %v2005 = vsel %vm1030, %v1961, 0
        %2007 = vmatpush.bf16.msra.mxu0 0
        %2008 = vmatpush.bf16.msra.mxu0 0
        %2009 = vmatpush.bf16.msra.mxu0 0
        %2010 = vmatpush.bf16.msra.mxu0 0
        %2011 = vmatpush.bf16.msra.mxu0 %v1990
        %2012 = vmatpush.bf16.msra.mxu0 %v1989
        %2013 = vmatpush.bf16.msra.mxu0 %v1988
        %2014 = vmatpush.bf16.msra.mxu0 %v1987
        %2015 = vmatmul.bf16.gmra.mxu0 %v1996
        %v2016 = vpop.f32.mrf.mxu0
        %v2017 = vadd.f32 0.0, %v2016
        %v2018 = vpop.f32.mrf.mxu0
        %v2019 = vadd.f32 0.0, %v2018
        %2020 = vmatmul.bf16.gmra.mxu0 %v1999
        %v2021 = vpop.f32.mrf.mxu0
        %v2022 = vadd.f32 0.0, %v2021
        %v2023 = vpop.f32.mrf.mxu0
        %v2024 = vadd.f32 0.0, %v2023
        %2025 = vmatmul.bf16.gmra.mxu0 %v2002
        %v2026 = vpop.f32.mrf.mxu0
        %v2027 = vadd.f32 0.0, %v2026
        %v2028 = vpop.f32.mrf.mxu0
        %v2029 = vadd.f32 0.0, %v2028
        %2030 = vmatmul.bf16.gmra.mxu0 %v2005
        %v2031 = vpop.f32.mrf.mxu0
        %v2032 = vadd.f32 0.0, %v2031
        %v2033 = vpop.f32.mrf.mxu0
        %v2034 = vadd.f32 0.0, %v2033
        %2035 = vdwg.mxu0
        %v2036 = vpack.c.bf16 %v2019, %v2017
        %v2037 = vpack.c.bf16 %v2024, %v2022
        %v2038 = vpack.c.bf16 %v2029, %v2027
        %v2039 = vpack.c.bf16 %v2034, %v2032
        %2040 = vmatpush.bf16.msra.mxu0 0
        %2041 = vmatpush.bf16.msra.mxu0 0
        %2042 = vmatpush.bf16.msra.mxu0 0
        %2043 = vmatpush.bf16.msra.mxu0 0
        %2044 = vmatpush.bf16.msra.mxu0 %v2039
        %2045 = vmatpush.bf16.msra.mxu0 %v2038
        %2046 = vmatpush.bf16.msra.mxu0 %v2037
        %2047 = vmatpush.bf16.msra.mxu0 %v2036
        %2048 = vmatmul.bf16.gmra.mxu0 %v1032
        %v2049 = vpop.f32.mrf.mxu0
        %v2050 = vadd.f32 0.0, %v2049
        %v2051 = vpop.f32.mrf.mxu0
        %v2052 = vadd.f32 0.0, %v2051
        %2053 = vmatmul.bf16.gmra.mxu0 %v1035
        %v2054 = vpop.f32.mrf.mxu0
        %v2055 = vadd.f32 0.0, %v2054
        %v2056 = vpop.f32.mrf.mxu0
        %v2057 = vadd.f32 0.0, %v2056
        %2058 = vmatmul.bf16.gmra.mxu0 %v1038
        %v2059 = vpop.f32.mrf.mxu0
        %v2060 = vadd.f32 0.0, %v2059
        %v2061 = vpop.f32.mrf.mxu0
        %v2062 = vadd.f32 0.0, %v2061
        %2063 = vmatmul.bf16.gmra.mxu0 %v1041
        %v2064 = vpop.f32.mrf.mxu0
        %v2065 = vadd.f32 0.0, %v2064
        %v2066 = vpop.f32.mrf.mxu0
        %v2067 = vadd.f32 0.0, %v2066
        %2068 = vmatmul.bf16.gmra.mxu0 %v1044
        %v2069 = vpop.f32.mrf.mxu0
        %v2070 = vadd.f32 0.0, %v2069
        %v2071 = vpop.f32.mrf.mxu0
        %v2072 = vadd.f32 0.0, %v2071
        %2073 = vmatmul.bf16.gmra.mxu0 %v1047
        %v2074 = vpop.f32.mrf.mxu0
        %v2075 = vadd.f32 0.0, %v2074
        %v2076 = vpop.f32.mrf.mxu0
        %v2077 = vadd.f32 0.0, %v2076
        %2078 = vmatmul.bf16.gmra.mxu0 %v1050
        %v2079 = vpop.f32.mrf.mxu0
        %v2080 = vadd.f32 0.0, %v2079
        %v2081 = vpop.f32.mrf.mxu0
        %v2082 = vadd.f32 0.0, %v2081
        %2083 = vmatmul.bf16.gmra.mxu0 %v1053
        %v2084 = vpop.f32.mrf.mxu0
        %v2085 = vadd.f32 0.0, %v2084
        %v2086 = vpop.f32.mrf.mxu0
        %v2087 = vadd.f32 0.0, %v2086
        %2088 = vmatmul.bf16.gmra.mxu0 %v1056
        %v2089 = vpop.f32.mrf.mxu0
        %v2090 = vadd.f32 0.0, %v2089
        %v2091 = vpop.f32.mrf.mxu0
        %v2092 = vadd.f32 0.0, %v2091
        %2093 = vmatmul.bf16.gmra.mxu0 %v1059
        %v2094 = vpop.f32.mrf.mxu0
        %v2095 = vadd.f32 0.0, %v2094
        %v2096 = vpop.f32.mrf.mxu0
        %v2097 = vadd.f32 0.0, %v2096
        %2098 = vmatmul.bf16.gmra.mxu0 %v1062
        %v2099 = vpop.f32.mrf.mxu0
        %v2100 = vadd.f32 0.0, %v2099
        %v2101 = vpop.f32.mrf.mxu0
        %v2102 = vadd.f32 0.0, %v2101
        %2103 = vmatmul.bf16.gmra.mxu0 %v1065
        %v2104 = vpop.f32.mrf.mxu0
        %v2105 = vadd.f32 0.0, %v2104
        %v2106 = vpop.f32.mrf.mxu0
        %v2107 = vadd.f32 0.0, %v2106
        %2108 = vmatmul.bf16.gmra.mxu0 %v1068
        %v2109 = vpop.f32.mrf.mxu0
        %v2110 = vadd.f32 0.0, %v2109
        %v2111 = vpop.f32.mrf.mxu0
        %v2112 = vadd.f32 0.0, %v2111
        %2113 = vmatmul.bf16.gmra.mxu0 %v1071
        %v2114 = vpop.f32.mrf.mxu0
        %v2115 = vadd.f32 0.0, %v2114
        %v2116 = vpop.f32.mrf.mxu0
        %v2117 = vadd.f32 0.0, %v2116
        %2118 = vmatmul.bf16.gmra.mxu0 %v1074
        %v2119 = vpop.f32.mrf.mxu0
        %v2120 = vadd.f32 0.0, %v2119
        %v2121 = vpop.f32.mrf.mxu0
        %v2122 = vadd.f32 0.0, %v2121
        %2123 = vmatmul.bf16.gmra.mxu0 %v1077
        %v2124 = vpop.f32.mrf.mxu0
        %v2125 = vadd.f32 0.0, %v2124
        %v2126 = vpop.f32.mrf.mxu0
        %v2127 = vadd.f32 0.0, %v2126
        %2128 = vmatmul.bf16.gmra.mxu0 %v1080
        %v2129 = vpop.f32.mrf.mxu0
        %v2130 = vadd.f32 0.0, %v2129
        %v2131 = vpop.f32.mrf.mxu0
        %v2132 = vadd.f32 0.0, %v2131
        %2133 = vmatmul.bf16.gmra.mxu0 %v1083
        %v2134 = vpop.f32.mrf.mxu0
        %v2135 = vadd.f32 0.0, %v2134
        %v2136 = vpop.f32.mrf.mxu0
        %v2137 = vadd.f32 0.0, %v2136
        %2138 = vmatmul.bf16.gmra.mxu0 %v1086
        %v2139 = vpop.f32.mrf.mxu0
        %v2140 = vadd.f32 0.0, %v2139
        %v2141 = vpop.f32.mrf.mxu0
        %v2142 = vadd.f32 0.0, %v2141
        %2143 = vmatmul.bf16.gmra.mxu0 %v1089
        %v2144 = vpop.f32.mrf.mxu0
        %v2145 = vadd.f32 0.0, %v2144
        %v2146 = vpop.f32.mrf.mxu0
        %v2147 = vadd.f32 0.0, %v2146
        %2148 = vmatmul.bf16.gmra.mxu0 %v1092
        %v2149 = vpop.f32.mrf.mxu0
        %v2150 = vadd.f32 0.0, %v2149
        %v2151 = vpop.f32.mrf.mxu0
        %v2152 = vadd.f32 0.0, %v2151
        %2153 = vmatmul.bf16.gmra.mxu0 %v1095
        %v2154 = vpop.f32.mrf.mxu0
        %v2155 = vadd.f32 0.0, %v2154
        %v2156 = vpop.f32.mrf.mxu0
        %v2157 = vadd.f32 0.0, %v2156
        %2158 = vmatmul.bf16.gmra.mxu0 %v1098
        %v2159 = vpop.f32.mrf.mxu0
        %v2160 = vadd.f32 0.0, %v2159
        %v2161 = vpop.f32.mrf.mxu0
        %v2162 = vadd.f32 0.0, %v2161
        %2163 = vmatmul.bf16.gmra.mxu0 %v1101
        %v2164 = vpop.f32.mrf.mxu0
        %v2165 = vadd.f32 0.0, %v2164
        %v2166 = vpop.f32.mrf.mxu0
        %v2167 = vadd.f32 0.0, %v2166
        %2168 = vmatmul.bf16.gmra.mxu0 %v1104
        %v2169 = vpop.f32.mrf.mxu0
        %v2170 = vadd.f32 0.0, %v2169
        %v2171 = vpop.f32.mrf.mxu0
        %v2172 = vadd.f32 0.0, %v2171
        %2173 = vmatmul.bf16.gmra.mxu0 %v1107
        %v2174 = vpop.f32.mrf.mxu0
        %v2175 = vadd.f32 0.0, %v2174
        %v2176 = vpop.f32.mrf.mxu0
        %v2177 = vadd.f32 0.0, %v2176
        %2178 = vmatmul.bf16.gmra.mxu0 %v1110
        %v2179 = vpop.f32.mrf.mxu0
        %v2180 = vadd.f32 0.0, %v2179
        %v2181 = vpop.f32.mrf.mxu0
        %v2182 = vadd.f32 0.0, %v2181
        %2183 = vmatmul.bf16.gmra.mxu0 %v1113
        %v2184 = vpop.f32.mrf.mxu0
        %v2185 = vadd.f32 0.0, %v2184
        %v2186 = vpop.f32.mrf.mxu0
        %v2187 = vadd.f32 0.0, %v2186
        %2188 = vmatmul.bf16.gmra.mxu0 %v1116
        %v2189 = vpop.f32.mrf.mxu0
        %v2190 = vadd.f32 0.0, %v2189
        %v2191 = vpop.f32.mrf.mxu0
        %v2192 = vadd.f32 0.0, %v2191
        %2193 = vmatmul.bf16.gmra.mxu0 %v1119
        %v2194 = vpop.f32.mrf.mxu0
        %v2195 = vadd.f32 0.0, %v2194
        %v2196 = vpop.f32.mrf.mxu0
        %v2197 = vadd.f32 0.0, %v2196
        %2198 = vmatmul.bf16.gmra.mxu0 %v1122
        %v2199 = vpop.f32.mrf.mxu0
        %v2200 = vadd.f32 0.0, %v2199
        %v2201 = vpop.f32.mrf.mxu0
        %v2202 = vadd.f32 0.0, %v2201
        %2203 = vmatmul.bf16.gmra.mxu0 %v1125
        %v2204 = vpop.f32.mrf.mxu0
        %v2205 = vadd.f32 0.0, %v2204
        %v2206 = vpop.f32.mrf.mxu0
        %v2207 = vadd.f32 0.0, %v2206
        %2208 = vmatmul.bf16.gmra.mxu0 %v1128
        %v2209 = vpop.f32.mrf.mxu0
        %v2210 = vadd.f32 0.0, %v2209
        %v2211 = vpop.f32.mrf.mxu0
        %v2212 = vadd.f32 0.0, %v2211
        %2213 = vmatmul.bf16.gmra.mxu0 %v1131
        %v2214 = vpop.f32.mrf.mxu0
        %v2215 = vadd.f32 0.0, %v2214
        %v2216 = vpop.f32.mrf.mxu0
        %v2217 = vadd.f32 0.0, %v2216
        %2218 = vmatmul.bf16.gmra.mxu0 %v1134
        %v2219 = vpop.f32.mrf.mxu0
        %v2220 = vadd.f32 0.0, %v2219
        %v2221 = vpop.f32.mrf.mxu0
        %v2222 = vadd.f32 0.0, %v2221
        %2223 = vmatmul.bf16.gmra.mxu0 %v1137
        %v2224 = vpop.f32.mrf.mxu0
        %v2225 = vadd.f32 0.0, %v2224
        %v2226 = vpop.f32.mrf.mxu0
        %v2227 = vadd.f32 0.0, %v2226
        %2228 = vdwg.mxu0
        %v2229 = vld [vmem:[%s7 + $0x12] sm:$0x1]
        %v2230 = vperm.slane %v2229, 0
        %v2231 = vmul.f32 %v2050, %v2230
        %v2232 = vmul.f32 %v2052, %v2230
        %v2233 = vmul.f32 %v2055, %v2230
        %v2234 = vmul.f32 %v2057, %v2230
        %v2235 = vmul.f32 %v2060, %v2230
        %v2236 = vmul.f32 %v2062, %v2230
        %v2237 = vmul.f32 %v2065, %v2230
        %v2238 = vmul.f32 %v2067, %v2230
        %v2239 = vadd.f32 %v2231, 0.0
        %v2240 = vadd.f32 %v2232, 0.0
        %v2241 = vadd.f32 %v2233, 0.0
        %v2242 = vadd.f32 %v2234, 0.0
        %v2243 = vadd.f32 %v2235, 0.0
        %v2244 = vadd.f32 %v2236, 0.0
        %v2245 = vadd.f32 %v2237, 0.0
        %v2246 = vadd.f32 %v2238, 0.0
        %v2247 = vld [vmem:[%s7 + $0x13] sm:$0x1]
        %v2248 = vperm.slane %v2247, 0
        %v2249 = vmul.f32 %v2070, %v2248
        %v2250 = vmul.f32 %v2072, %v2248
        %v2251 = vmul.f32 %v2075, %v2248
        %v2252 = vmul.f32 %v2077, %v2248
        %v2253 = vmul.f32 %v2080, %v2248
        %v2254 = vmul.f32 %v2082, %v2248
        %v2255 = vmul.f32 %v2085, %v2248
        %v2256 = vmul.f32 %v2087, %v2248
        %v2257 = vadd.f32 %v2239, %v2249
        %v2258 = vadd.f32 %v2240, %v2250
        %v2259 = vadd.f32 %v2241, %v2251
        %v2260 = vadd.f32 %v2242, %v2252
        %v2261 = vadd.f32 %v2243, %v2253
        %v2262 = vadd.f32 %v2244, %v2254
        %v2263 = vadd.f32 %v2245, %v2255
        %v2264 = vadd.f32 %v2246, %v2256
        %v2265 = vld [vmem:[%s7 + $0x14] sm:$0x1]
        %v2266 = vperm.slane %v2265, 0
        %v2267 = vmul.f32 %v2090, %v2266
        %v2268 = vmul.f32 %v2092, %v2266
        %v2269 = vmul.f32 %v2095, %v2266
        %v2270 = vmul.f32 %v2097, %v2266
        %v2271 = vmul.f32 %v2100, %v2266
        %v2272 = vmul.f32 %v2102, %v2266
        %v2273 = vmul.f32 %v2105, %v2266
        %v2274 = vmul.f32 %v2107, %v2266
        %v2275 = vadd.f32 %v2257, %v2267
        %v2276 = vadd.f32 %v2258, %v2268
        %v2277 = vadd.f32 %v2259, %v2269
        %v2278 = vadd.f32 %v2260, %v2270
        %v2279 = vadd.f32 %v2261, %v2271
        %v2280 = vadd.f32 %v2262, %v2272
        %v2281 = vadd.f32 %v2263, %v2273
        %v2282 = vadd.f32 %v2264, %v2274
        %v2283 = vld [vmem:[%s7 + $0x15] sm:$0x1]
        %v2284 = vperm.slane %v2283, 0
        %v2285 = vmul.f32 %v2110, %v2284
        %v2286 = vmul.f32 %v2112, %v2284
        %v2287 = vmul.f32 %v2115, %v2284
        %v2288 = vmul.f32 %v2117, %v2284
        %v2289 = vmul.f32 %v2120, %v2284
        %v2290 = vmul.f32 %v2122, %v2284
        %v2291 = vmul.f32 %v2125, %v2284
        %v2292 = vmul.f32 %v2127, %v2284
        %v2293 = vadd.f32 %v2275, %v2285
        %v2294 = vadd.f32 %v2276, %v2286
        %v2295 = vadd.f32 %v2277, %v2287
        %v2296 = vadd.f32 %v2278, %v2288
        %v2297 = vadd.f32 %v2279, %v2289
        %v2298 = vadd.f32 %v2280, %v2290
        %v2299 = vadd.f32 %v2281, %v2291
        %v2300 = vadd.f32 %v2282, %v2292
        %v2301 = vld [vmem:[%s7 + $0x16] sm:$0x1]
        %v2302 = vperm.slane %v2301, 0
        %v2303 = vmul.f32 %v2130, %v2302
        %v2304 = vmul.f32 %v2132, %v2302
        %v2305 = vmul.f32 %v2135, %v2302
        %v2306 = vmul.f32 %v2137, %v2302
        %v2307 = vmul.f32 %v2140, %v2302
        %v2308 = vmul.f32 %v2142, %v2302
        %v2309 = vmul.f32 %v2145, %v2302
        %v2310 = vmul.f32 %v2147, %v2302
        %v2311 = vadd.f32 %v2293, %v2303
        %v2312 = vadd.f32 %v2294, %v2304
        %v2313 = vadd.f32 %v2295, %v2305
        %v2314 = vadd.f32 %v2296, %v2306
        %v2315 = vadd.f32 %v2297, %v2307
        %v2316 = vadd.f32 %v2298, %v2308
        %v2317 = vadd.f32 %v2299, %v2309
        %v2318 = vadd.f32 %v2300, %v2310
        %v2319 = vld [vmem:[%s7 + $0x17] sm:$0x1]
        %v2320 = vperm.slane %v2319, 0
        %v2321 = vmul.f32 %v2150, %v2320
        %v2322 = vmul.f32 %v2152, %v2320
        %v2323 = vmul.f32 %v2155, %v2320
        %v2324 = vmul.f32 %v2157, %v2320
        %v2325 = vmul.f32 %v2160, %v2320
        %v2326 = vmul.f32 %v2162, %v2320
        %v2327 = vmul.f32 %v2165, %v2320
        %v2328 = vmul.f32 %v2167, %v2320
        %v2329 = vadd.f32 %v2311, %v2321
        %v2330 = vadd.f32 %v2312, %v2322
        %v2331 = vadd.f32 %v2313, %v2323
        %v2332 = vadd.f32 %v2314, %v2324
        %v2333 = vadd.f32 %v2315, %v2325
        %v2334 = vadd.f32 %v2316, %v2326
        %v2335 = vadd.f32 %v2317, %v2327
        %v2336 = vadd.f32 %v2318, %v2328
        %v2337 = vld [vmem:[%s7 + $0x18] sm:$0x1]
        %v2338 = vperm.slane %v2337, 0
        %v2339 = vmul.f32 %v2170, %v2338
        %v2340 = vmul.f32 %v2172, %v2338
        %v2341 = vmul.f32 %v2175, %v2338
        %v2342 = vmul.f32 %v2177, %v2338
        %v2343 = vmul.f32 %v2180, %v2338
        %v2344 = vmul.f32 %v2182, %v2338
        %v2345 = vmul.f32 %v2185, %v2338
        %v2346 = vmul.f32 %v2187, %v2338
        %v2347 = vadd.f32 %v2329, %v2339
        %v2348 = vadd.f32 %v2330, %v2340
        %v2349 = vadd.f32 %v2331, %v2341
        %v2350 = vadd.f32 %v2332, %v2342
        %v2351 = vadd.f32 %v2333, %v2343
        %v2352 = vadd.f32 %v2334, %v2344
        %v2353 = vadd.f32 %v2335, %v2345
        %v2354 = vadd.f32 %v2336, %v2346
        %v2355 = vld [vmem:[%s7 + $0x19] sm:$0x1]
        %v2356 = vperm.slane %v2355, 0
        %v2357 = vmul.f32 %v2190, %v2356
        %v2358 = vmul.f32 %v2192, %v2356
        %v2359 = vmul.f32 %v2195, %v2356
        %v2360 = vmul.f32 %v2197, %v2356
        %v2361 = vmul.f32 %v2200, %v2356
        %v2362 = vmul.f32 %v2202, %v2356
        %v2363 = vmul.f32 %v2205, %v2356
        %v2364 = vmul.f32 %v2207, %v2356
        %v2365 = vadd.f32 %v2347, %v2357
        %v2366 = vadd.f32 %v2348, %v2358
        %v2367 = vadd.f32 %v2349, %v2359
        %v2368 = vadd.f32 %v2350, %v2360
        %v2369 = vadd.f32 %v2351, %v2361
        %v2370 = vadd.f32 %v2352, %v2362
        %v2371 = vadd.f32 %v2353, %v2363
        %v2372 = vadd.f32 %v2354, %v2364
        %v2373 = vld [vmem:[%s7 + $0x1a] sm:$0x1]
        %v2374 = vperm.slane %v2373, 0
        %v2375 = vmul.f32 %v2210, %v2374
        %v2376 = vmul.f32 %v2212, %v2374
        %v2377 = vmul.f32 %v2215, %v2374
        %v2378 = vmul.f32 %v2217, %v2374
        %v2379 = vmul.f32 %v2220, %v2374
        %v2380 = vmul.f32 %v2222, %v2374
        %v2381 = vmul.f32 %v2225, %v2374
        %v2382 = vmul.f32 %v2227, %v2374
        %v2383 = vadd.f32 %v2365, %v2375
        %v2384 = vadd.f32 %v2366, %v2376
        %v2385 = vadd.f32 %v2367, %v2377
        %v2386 = vadd.f32 %v2368, %v2378
        %v2387 = vadd.f32 %v2369, %v2379
        %v2388 = vadd.f32 %v2370, %v2380
        %v2389 = vadd.f32 %v2371, %v2381
        %v2390 = vadd.f32 %v2372, %v2382
        %v2391 = vld [vmem:[%s8 + $0x2] sm:$0x1]
        %v2392 = vperm.slane %v2391, 0
        %v2393 = vadd.f32 %v2383, %v2392
        %v2394 = vadd.f32 %v2384, %v2392
        %v2395 = vadd.f32 %v2385, %v2392
        %v2396 = vadd.f32 %v2386, %v2392
        %v2397 = vadd.f32 %v2387, %v2392
        %v2398 = vadd.f32 %v2388, %v2392
        %v2399 = vadd.f32 %v2389, %v2392
        %v2400 = vadd.f32 %v2390, %v2392
        %v2401 = vmax.f32 %v2393, 0.0
        %v2402 = vmax.f32 %v2394, 0.0
        %v2403 = vmax.f32 %v2395, 0.0
        %v2404 = vmax.f32 %v2396, 0.0
        %v2405 = vmax.f32 %v2397, 0.0
        %v2406 = vmax.f32 %v2398, 0.0
        %v2407 = vmax.f32 %v2399, 0.0
        %v2408 = vmax.f32 %v2400, 0.0
        %v2409 = vpack.c.bf16 %v2402, %v2401
        %v2410 = vpack.c.bf16 %v2404, %v2403
        %v2411 = vpack.c.bf16 %v2406, %v2405
        %v2412 = vpack.c.bf16 %v2408, %v2407
        %s2413 = scalar_lea.vmem %s5, 64
        %v2414 = vld [vmem:[%s2413] sm:$0xf]
        %v2415 = vld [vmem:[%s2413 + $0x4] sm:$0xf]
        %v2416 = vld [vmem:[%s2413 + $0x8] sm:$0xf]
        %v2417 = vld [vmem:[%s2413 + $0xc] sm:$0xf]
        %v2418 = vld [vmem:[%s2413 + $0x10] sm:$0xf]
        %v2419 = vld [vmem:[%s2413 + $0x14] sm:$0xf]
        %v2420 = vld [vmem:[%s2413 + $0x18] sm:$0xf]
        %v2421 = vld [vmem:[%s2413 + $0x1c] sm:$0xf]
        %v2430 = vunpack.c.l.b16 %v2414
        %v2431 = vunpack.c.l.b16 %v2415
        %v2432 = vunpack.c.l.b16 %v2416
        %v2433 = vunpack.c.l.b16 %v2417
        %v2434 = vunpack.c.l.b16 %v2418
        %v2435 = vunpack.c.l.b16 %v2419
        %v2436 = vunpack.c.l.b16 %v2420
        %v2437 = vunpack.c.l.b16 %v2421
        %v2438 = vpack.c.b16 %v2431, %v2430
        %v2439 = vpack.c.b16 %v2433, %v2432
        %v2440 = vpack.c.b16 %v2435, %v2434
        %v2441 = vpack.c.b16 %v2437, %v2436
        %v2447 = vsel %vm1030, %v2409, 0
        %v2450 = vsel %vm1030, %v2410, 0
        %v2453 = vsel %vm1030, %v2411, 0
        %v2456 = vsel %vm1030, %v2412, 0
        %2458 = vmatpush.bf16.msra.mxu0 0
        %2459 = vmatpush.bf16.msra.mxu0 0
        %2460 = vmatpush.bf16.msra.mxu0 0
        %2461 = vmatpush.bf16.msra.mxu0 0
        %2462 = vmatpush.bf16.msra.mxu0 %v2441
        %2463 = vmatpush.bf16.msra.mxu0 %v2440
        %2464 = vmatpush.bf16.msra.mxu0 %v2439
        %2465 = vmatpush.bf16.msra.mxu0 %v2438
        %2466 = vmatmul.bf16.gmra.mxu0 %v2447
        %v2467 = vpop.f32.mrf.mxu0
        %v2468 = vadd.f32 0.0, %v2467
        %v2469 = vpop.f32.mrf.mxu0
        %v2470 = vadd.f32 0.0, %v2469
        %2471 = vmatmul.bf16.gmra.mxu0 %v2450
        %v2472 = vpop.f32.mrf.mxu0
        %v2473 = vadd.f32 0.0, %v2472
        %v2474 = vpop.f32.mrf.mxu0
        %v2475 = vadd.f32 0.0, %v2474
        %2476 = vmatmul.bf16.gmra.mxu0 %v2453
        %v2477 = vpop.f32.mrf.mxu0
        %v2478 = vadd.f32 0.0, %v2477
        %v2479 = vpop.f32.mrf.mxu0
        %v2480 = vadd.f32 0.0, %v2479
        %2481 = vmatmul.bf16.gmra.mxu0 %v2456
        %v2482 = vpop.f32.mrf.mxu0
        %v2483 = vadd.f32 0.0, %v2482
        %v2484 = vpop.f32.mrf.mxu0
        %v2485 = vadd.f32 0.0, %v2484
        %2486 = vdwg.mxu0
        %v2487 = vpack.c.bf16 %v2470, %v2468
        %v2488 = vpack.c.bf16 %v2475, %v2473
        %v2489 = vpack.c.bf16 %v2480, %v2478
        %v2490 = vpack.c.bf16 %v2485, %v2483
        %2491 = vmatpush.bf16.msra.mxu0 0
        %2492 = vmatpush.bf16.msra.mxu0 0
        %2493 = vmatpush.bf16.msra.mxu0 0
        %2494 = vmatpush.bf16.msra.mxu0 0
        %2495 = vmatpush.bf16.msra.mxu0 %v2490
        %2496 = vmatpush.bf16.msra.mxu0 %v2489
        %2497 = vmatpush.bf16.msra.mxu0 %v2488
        %2498 = vmatpush.bf16.msra.mxu0 %v2487
        %2499 = vmatmul.bf16.gmra.mxu0 %v1032
        %v2500 = vpop.f32.mrf.mxu0
        %v2501 = vadd.f32 0.0, %v2500
        %v2502 = vpop.f32.mrf.mxu0
        %v2503 = vadd.f32 0.0, %v2502
        %2504 = vmatmul.bf16.gmra.mxu0 %v1035
        %v2505 = vpop.f32.mrf.mxu0
        %v2506 = vadd.f32 0.0, %v2505
        %v2507 = vpop.f32.mrf.mxu0
        %v2508 = vadd.f32 0.0, %v2507
        %2509 = vmatmul.bf16.gmra.mxu0 %v1038
        %v2510 = vpop.f32.mrf.mxu0
        %v2511 = vadd.f32 0.0, %v2510
        %v2512 = vpop.f32.mrf.mxu0
        %v2513 = vadd.f32 0.0, %v2512
        %2514 = vmatmul.bf16.gmra.mxu0 %v1041
        %v2515 = vpop.f32.mrf.mxu0
        %v2516 = vadd.f32 0.0, %v2515
        %v2517 = vpop.f32.mrf.mxu0
        %v2518 = vadd.f32 0.0, %v2517
        %2519 = vmatmul.bf16.gmra.mxu0 %v1044
        %v2520 = vpop.f32.mrf.mxu0
        %v2521 = vadd.f32 0.0, %v2520
        %v2522 = vpop.f32.mrf.mxu0
        %v2523 = vadd.f32 0.0, %v2522
        %2524 = vmatmul.bf16.gmra.mxu0 %v1047
        %v2525 = vpop.f32.mrf.mxu0
        %v2526 = vadd.f32 0.0, %v2525
        %v2527 = vpop.f32.mrf.mxu0
        %v2528 = vadd.f32 0.0, %v2527
        %2529 = vmatmul.bf16.gmra.mxu0 %v1050
        %v2530 = vpop.f32.mrf.mxu0
        %v2531 = vadd.f32 0.0, %v2530
        %v2532 = vpop.f32.mrf.mxu0
        %v2533 = vadd.f32 0.0, %v2532
        %2534 = vmatmul.bf16.gmra.mxu0 %v1053
        %v2535 = vpop.f32.mrf.mxu0
        %v2536 = vadd.f32 0.0, %v2535
        %v2537 = vpop.f32.mrf.mxu0
        %v2538 = vadd.f32 0.0, %v2537
        %2539 = vmatmul.bf16.gmra.mxu0 %v1056
        %v2540 = vpop.f32.mrf.mxu0
        %v2541 = vadd.f32 0.0, %v2540
        %v2542 = vpop.f32.mrf.mxu0
        %v2543 = vadd.f32 0.0, %v2542
        %2544 = vmatmul.bf16.gmra.mxu0 %v1059
        %v2545 = vpop.f32.mrf.mxu0
        %v2546 = vadd.f32 0.0, %v2545
        %v2547 = vpop.f32.mrf.mxu0
        %v2548 = vadd.f32 0.0, %v2547
        %2549 = vmatmul.bf16.gmra.mxu0 %v1062
        %v2550 = vpop.f32.mrf.mxu0
        %v2551 = vadd.f32 0.0, %v2550
        %v2552 = vpop.f32.mrf.mxu0
        %v2553 = vadd.f32 0.0, %v2552
        %2554 = vmatmul.bf16.gmra.mxu0 %v1065
        %v2555 = vpop.f32.mrf.mxu0
        %v2556 = vadd.f32 0.0, %v2555
        %v2557 = vpop.f32.mrf.mxu0
        %v2558 = vadd.f32 0.0, %v2557
        %2559 = vmatmul.bf16.gmra.mxu0 %v1068
        %v2560 = vpop.f32.mrf.mxu0
        %v2561 = vadd.f32 0.0, %v2560
        %v2562 = vpop.f32.mrf.mxu0
        %v2563 = vadd.f32 0.0, %v2562
        %2564 = vmatmul.bf16.gmra.mxu0 %v1071
        %v2565 = vpop.f32.mrf.mxu0
        %v2566 = vadd.f32 0.0, %v2565
        %v2567 = vpop.f32.mrf.mxu0
        %v2568 = vadd.f32 0.0, %v2567
        %2569 = vmatmul.bf16.gmra.mxu0 %v1074
        %v2570 = vpop.f32.mrf.mxu0
        %v2571 = vadd.f32 0.0, %v2570
        %v2572 = vpop.f32.mrf.mxu0
        %v2573 = vadd.f32 0.0, %v2572
        %2574 = vmatmul.bf16.gmra.mxu0 %v1077
        %v2575 = vpop.f32.mrf.mxu0
        %v2576 = vadd.f32 0.0, %v2575
        %v2577 = vpop.f32.mrf.mxu0
        %v2578 = vadd.f32 0.0, %v2577
        %2579 = vmatmul.bf16.gmra.mxu0 %v1080
        %v2580 = vpop.f32.mrf.mxu0
        %v2581 = vadd.f32 0.0, %v2580
        %v2582 = vpop.f32.mrf.mxu0
        %v2583 = vadd.f32 0.0, %v2582
        %2584 = vmatmul.bf16.gmra.mxu0 %v1083
        %v2585 = vpop.f32.mrf.mxu0
        %v2586 = vadd.f32 0.0, %v2585
        %v2587 = vpop.f32.mrf.mxu0
        %v2588 = vadd.f32 0.0, %v2587
        %2589 = vmatmul.bf16.gmra.mxu0 %v1086
        %v2590 = vpop.f32.mrf.mxu0
        %v2591 = vadd.f32 0.0, %v2590
        %v2592 = vpop.f32.mrf.mxu0
        %v2593 = vadd.f32 0.0, %v2592
        %2594 = vmatmul.bf16.gmra.mxu0 %v1089
        %v2595 = vpop.f32.mrf.mxu0
        %v2596 = vadd.f32 0.0, %v2595
        %v2597 = vpop.f32.mrf.mxu0
        %v2598 = vadd.f32 0.0, %v2597
        %2599 = vmatmul.bf16.gmra.mxu0 %v1092
        %v2600 = vpop.f32.mrf.mxu0
        %v2601 = vadd.f32 0.0, %v2600
        %v2602 = vpop.f32.mrf.mxu0
        %v2603 = vadd.f32 0.0, %v2602
        %2604 = vmatmul.bf16.gmra.mxu0 %v1095
        %v2605 = vpop.f32.mrf.mxu0
        %v2606 = vadd.f32 0.0, %v2605
        %v2607 = vpop.f32.mrf.mxu0
        %v2608 = vadd.f32 0.0, %v2607
        %2609 = vmatmul.bf16.gmra.mxu0 %v1098
        %v2610 = vpop.f32.mrf.mxu0
        %v2611 = vadd.f32 0.0, %v2610
        %v2612 = vpop.f32.mrf.mxu0
        %v2613 = vadd.f32 0.0, %v2612
        %2614 = vmatmul.bf16.gmra.mxu0 %v1101
        %v2615 = vpop.f32.mrf.mxu0
        %v2616 = vadd.f32 0.0, %v2615
        %v2617 = vpop.f32.mrf.mxu0
        %v2618 = vadd.f32 0.0, %v2617
        %2619 = vmatmul.bf16.gmra.mxu0 %v1104
        %v2620 = vpop.f32.mrf.mxu0
        %v2621 = vadd.f32 0.0, %v2620
        %v2622 = vpop.f32.mrf.mxu0
        %v2623 = vadd.f32 0.0, %v2622
        %2624 = vmatmul.bf16.gmra.mxu0 %v1107
        %v2625 = vpop.f32.mrf.mxu0
        %v2626 = vadd.f32 0.0, %v2625
        %v2627 = vpop.f32.mrf.mxu0
        %v2628 = vadd.f32 0.0, %v2627
        %2629 = vmatmul.bf16.gmra.mxu0 %v1110
        %v2630 = vpop.f32.mrf.mxu0
        %v2631 = vadd.f32 0.0, %v2630
        %v2632 = vpop.f32.mrf.mxu0
        %v2633 = vadd.f32 0.0, %v2632
        %2634 = vmatmul.bf16.gmra.mxu0 %v1113
        %v2635 = vpop.f32.mrf.mxu0
        %v2636 = vadd.f32 0.0, %v2635
        %v2637 = vpop.f32.mrf.mxu0
        %v2638 = vadd.f32 0.0, %v2637
        %2639 = vmatmul.bf16.gmra.mxu0 %v1116
        %v2640 = vpop.f32.mrf.mxu0
        %v2641 = vadd.f32 0.0, %v2640
        %v2642 = vpop.f32.mrf.mxu0
        %v2643 = vadd.f32 0.0, %v2642
        %2644 = vmatmul.bf16.gmra.mxu0 %v1119
        %v2645 = vpop.f32.mrf.mxu0
        %v2646 = vadd.f32 0.0, %v2645
        %v2647 = vpop.f32.mrf.mxu0
        %v2648 = vadd.f32 0.0, %v2647
        %2649 = vmatmul.bf16.gmra.mxu0 %v1122
        %v2650 = vpop.f32.mrf.mxu0
        %v2651 = vadd.f32 0.0, %v2650
        %v2652 = vpop.f32.mrf.mxu0
        %v2653 = vadd.f32 0.0, %v2652
        %2654 = vmatmul.bf16.gmra.mxu0 %v1125
        %v2655 = vpop.f32.mrf.mxu0
        %v2656 = vadd.f32 0.0, %v2655
        %v2657 = vpop.f32.mrf.mxu0
        %v2658 = vadd.f32 0.0, %v2657
        %2659 = vmatmul.bf16.gmra.mxu0 %v1128
        %v2660 = vpop.f32.mrf.mxu0
        %v2661 = vadd.f32 0.0, %v2660
        %v2662 = vpop.f32.mrf.mxu0
        %v2663 = vadd.f32 0.0, %v2662
        %2664 = vmatmul.bf16.gmra.mxu0 %v1131
        %v2665 = vpop.f32.mrf.mxu0
        %v2666 = vadd.f32 0.0, %v2665
        %v2667 = vpop.f32.mrf.mxu0
        %v2668 = vadd.f32 0.0, %v2667
        %2669 = vmatmul.bf16.gmra.mxu0 %v1134
        %v2670 = vpop.f32.mrf.mxu0
        %v2671 = vadd.f32 0.0, %v2670
        %v2672 = vpop.f32.mrf.mxu0
        %v2673 = vadd.f32 0.0, %v2672
        %2674 = vmatmul.bf16.gmra.mxu0 %v1137
        %v2675 = vpop.f32.mrf.mxu0
        %v2676 = vadd.f32 0.0, %v2675
        %v2677 = vpop.f32.mrf.mxu0
        %v2678 = vadd.f32 0.0, %v2677
        %2679 = vdwg.mxu0
        %v2680 = vld [vmem:[%s7 + $0x1b] sm:$0x1]
        %v2681 = vperm.slane %v2680, 0
        %v2682 = vmul.f32 %v2501, %v2681
        %v2683 = vmul.f32 %v2503, %v2681
        %v2684 = vmul.f32 %v2506, %v2681
        %v2685 = vmul.f32 %v2508, %v2681
        %v2686 = vmul.f32 %v2511, %v2681
        %v2687 = vmul.f32 %v2513, %v2681
        %v2688 = vmul.f32 %v2516, %v2681
        %v2689 = vmul.f32 %v2518, %v2681
        %v2690 = vadd.f32 %v2682, 0.0
        %v2691 = vadd.f32 %v2683, 0.0
        %v2692 = vadd.f32 %v2684, 0.0
        %v2693 = vadd.f32 %v2685, 0.0
        %v2694 = vadd.f32 %v2686, 0.0
        %v2695 = vadd.f32 %v2687, 0.0
        %v2696 = vadd.f32 %v2688, 0.0
        %v2697 = vadd.f32 %v2689, 0.0
        %v2698 = vld [vmem:[%s7 + $0x1c] sm:$0x1]
        %v2699 = vperm.slane %v2698, 0
        %v2700 = vmul.f32 %v2521, %v2699
        %v2701 = vmul.f32 %v2523, %v2699
        %v2702 = vmul.f32 %v2526, %v2699
        %v2703 = vmul.f32 %v2528, %v2699
        %v2704 = vmul.f32 %v2531, %v2699
        %v2705 = vmul.f32 %v2533, %v2699
        %v2706 = vmul.f32 %v2536, %v2699
        %v2707 = vmul.f32 %v2538, %v2699
        %v2708 = vadd.f32 %v2690, %v2700
        %v2709 = vadd.f32 %v2691, %v2701
        %v2710 = vadd.f32 %v2692, %v2702
        %v2711 = vadd.f32 %v2693, %v2703
        %v2712 = vadd.f32 %v2694, %v2704
        %v2713 = vadd.f32 %v2695, %v2705
        %v2714 = vadd.f32 %v2696, %v2706
        %v2715 = vadd.f32 %v2697, %v2707
        %v2716 = vld [vmem:[%s7 + $0x1d] sm:$0x1]
        %v2717 = vperm.slane %v2716, 0
        %v2718 = vmul.f32 %v2541, %v2717
        %v2719 = vmul.f32 %v2543, %v2717
        %v2720 = vmul.f32 %v2546, %v2717
        %v2721 = vmul.f32 %v2548, %v2717
        %v2722 = vmul.f32 %v2551, %v2717
        %v2723 = vmul.f32 %v2553, %v2717
        %v2724 = vmul.f32 %v2556, %v2717
        %v2725 = vmul.f32 %v2558, %v2717
        %v2726 = vadd.f32 %v2708, %v2718
        %v2727 = vadd.f32 %v2709, %v2719
        %v2728 = vadd.f32 %v2710, %v2720
        %v2729 = vadd.f32 %v2711, %v2721
        %v2730 = vadd.f32 %v2712, %v2722
        %v2731 = vadd.f32 %v2713, %v2723
        %v2732 = vadd.f32 %v2714, %v2724
        %v2733 = vadd.f32 %v2715, %v2725
        %v2734 = vld [vmem:[%s7 + $0x1e] sm:$0x1]
        %v2735 = vperm.slane %v2734, 0
        %v2736 = vmul.f32 %v2561, %v2735
        %v2737 = vmul.f32 %v2563, %v2735
        %v2738 = vmul.f32 %v2566, %v2735
        %v2739 = vmul.f32 %v2568, %v2735
        %v2740 = vmul.f32 %v2571, %v2735
        %v2741 = vmul.f32 %v2573, %v2735
        %v2742 = vmul.f32 %v2576, %v2735
        %v2743 = vmul.f32 %v2578, %v2735
        %v2744 = vadd.f32 %v2726, %v2736
        %v2745 = vadd.f32 %v2727, %v2737
        %v2746 = vadd.f32 %v2728, %v2738
        %v2747 = vadd.f32 %v2729, %v2739
        %v2748 = vadd.f32 %v2730, %v2740
        %v2749 = vadd.f32 %v2731, %v2741
        %v2750 = vadd.f32 %v2732, %v2742
        %v2751 = vadd.f32 %v2733, %v2743
        %v2752 = vld [vmem:[%s7 + $0x1f] sm:$0x1]
        %v2753 = vperm.slane %v2752, 0
        %v2754 = vmul.f32 %v2581, %v2753
        %v2755 = vmul.f32 %v2583, %v2753
        %v2756 = vmul.f32 %v2586, %v2753
        %v2757 = vmul.f32 %v2588, %v2753
        %v2758 = vmul.f32 %v2591, %v2753
        %v2759 = vmul.f32 %v2593, %v2753
        %v2760 = vmul.f32 %v2596, %v2753
        %v2761 = vmul.f32 %v2598, %v2753
        %v2762 = vadd.f32 %v2744, %v2754
        %v2763 = vadd.f32 %v2745, %v2755
        %v2764 = vadd.f32 %v2746, %v2756
        %v2765 = vadd.f32 %v2747, %v2757
        %v2766 = vadd.f32 %v2748, %v2758
        %v2767 = vadd.f32 %v2749, %v2759
        %v2768 = vadd.f32 %v2750, %v2760
        %v2769 = vadd.f32 %v2751, %v2761
        %v2770 = vld [vmem:[%s7 + $0x20] sm:$0x1]
        %v2771 = vperm.slane %v2770, 0
        %v2772 = vmul.f32 %v2601, %v2771
        %v2773 = vmul.f32 %v2603, %v2771
        %v2774 = vmul.f32 %v2606, %v2771
        %v2775 = vmul.f32 %v2608, %v2771
        %v2776 = vmul.f32 %v2611, %v2771
        %v2777 = vmul.f32 %v2613, %v2771
        %v2778 = vmul.f32 %v2616, %v2771
        %v2779 = vmul.f32 %v2618, %v2771
        %v2780 = vadd.f32 %v2762, %v2772
        %v2781 = vadd.f32 %v2763, %v2773
        %v2782 = vadd.f32 %v2764, %v2774
        %v2783 = vadd.f32 %v2765, %v2775
        %v2784 = vadd.f32 %v2766, %v2776
        %v2785 = vadd.f32 %v2767, %v2777
        %v2786 = vadd.f32 %v2768, %v2778
        %v2787 = vadd.f32 %v2769, %v2779
        %v2788 = vld [vmem:[%s7 + $0x21] sm:$0x1]
        %v2789 = vperm.slane %v2788, 0
        %v2790 = vmul.f32 %v2621, %v2789
        %v2791 = vmul.f32 %v2623, %v2789
        %v2792 = vmul.f32 %v2626, %v2789
        %v2793 = vmul.f32 %v2628, %v2789
        %v2794 = vmul.f32 %v2631, %v2789
        %v2795 = vmul.f32 %v2633, %v2789
        %v2796 = vmul.f32 %v2636, %v2789
        %v2797 = vmul.f32 %v2638, %v2789
        %v2798 = vadd.f32 %v2780, %v2790
        %v2799 = vadd.f32 %v2781, %v2791
        %v2800 = vadd.f32 %v2782, %v2792
        %v2801 = vadd.f32 %v2783, %v2793
        %v2802 = vadd.f32 %v2784, %v2794
        %v2803 = vadd.f32 %v2785, %v2795
        %v2804 = vadd.f32 %v2786, %v2796
        %v2805 = vadd.f32 %v2787, %v2797
        %v2806 = vld [vmem:[%s7 + $0x22] sm:$0x1]
        %v2807 = vperm.slane %v2806, 0
        %v2808 = vmul.f32 %v2641, %v2807
        %v2809 = vmul.f32 %v2643, %v2807
        %v2810 = vmul.f32 %v2646, %v2807
        %v2811 = vmul.f32 %v2648, %v2807
        %v2812 = vmul.f32 %v2651, %v2807
        %v2813 = vmul.f32 %v2653, %v2807
        %v2814 = vmul.f32 %v2656, %v2807
        %v2815 = vmul.f32 %v2658, %v2807
        %v2816 = vadd.f32 %v2798, %v2808
        %v2817 = vadd.f32 %v2799, %v2809
        %v2818 = vadd.f32 %v2800, %v2810
        %v2819 = vadd.f32 %v2801, %v2811
        %v2820 = vadd.f32 %v2802, %v2812
        %v2821 = vadd.f32 %v2803, %v2813
        %v2822 = vadd.f32 %v2804, %v2814
        %v2823 = vadd.f32 %v2805, %v2815
        %v2824 = vld [vmem:[%s7 + $0x23] sm:$0x1]
        %v2825 = vperm.slane %v2824, 0
        %v2826 = vmul.f32 %v2661, %v2825
        %v2827 = vmul.f32 %v2663, %v2825
        %v2828 = vmul.f32 %v2666, %v2825
        %v2829 = vmul.f32 %v2668, %v2825
        %v2830 = vmul.f32 %v2671, %v2825
        %v2831 = vmul.f32 %v2673, %v2825
        %v2832 = vmul.f32 %v2676, %v2825
        %v2833 = vmul.f32 %v2678, %v2825
        %v2834 = vadd.f32 %v2816, %v2826
        %v2835 = vadd.f32 %v2817, %v2827
        %v2836 = vadd.f32 %v2818, %v2828
        %v2837 = vadd.f32 %v2819, %v2829
        %v2838 = vadd.f32 %v2820, %v2830
        %v2839 = vadd.f32 %v2821, %v2831
        %v2840 = vadd.f32 %v2822, %v2832
        %v2841 = vadd.f32 %v2823, %v2833
        %v2842 = vld [vmem:[%s8 + $0x3] sm:$0x1]
        %v2843 = vperm.slane %v2842, 0
        %v2844 = vadd.f32 %v2834, %v2843
        %v2845 = vadd.f32 %v2835, %v2843
        %v2846 = vadd.f32 %v2836, %v2843
        %v2847 = vadd.f32 %v2837, %v2843
        %v2848 = vadd.f32 %v2838, %v2843
        %v2849 = vadd.f32 %v2839, %v2843
        %v2850 = vadd.f32 %v2840, %v2843
        %v2851 = vadd.f32 %v2841, %v2843
        %v2852 = vmax.f32 %v2844, 0.0
        %v2853 = vmax.f32 %v2845, 0.0
        %v2854 = vmax.f32 %v2846, 0.0
        %v2855 = vmax.f32 %v2847, 0.0
        %v2856 = vmax.f32 %v2848, 0.0
        %v2857 = vmax.f32 %v2849, 0.0
        %v2858 = vmax.f32 %v2850, 0.0
        %v2859 = vmax.f32 %v2851, 0.0
        %v2860 = vsel %vm1030, %v2852, 0.0
        %v2861 = vsel %vm1030, %v2853, 0.0
        %v2862 = vadd.f32 %v2860, %v2861
        %v2863 = vsel %vm1030, %v2854, 0.0
        %v2864 = vadd.f32 %v2862, %v2863
        %v2865 = vsel %vm1030, %v2855, 0.0
        %v2866 = vadd.f32 %v2864, %v2865
        %v2867 = vsel %vm1030, %v2856, 0.0
        %v2868 = vadd.f32 %v2866, %v2867
        %v2869 = vsel %vm1030, %v2857, 0.0
        %v2870 = vadd.f32 %v2868, %v2869
        %v2871 = vsel %vm1030, %v2858, 0.0
        %v2872 = vadd.f32 %v2870, %v2871
        %v2873 = vsel %vm1030, %v2859, 0.0
        %v2874 = vadd.f32 %v2872, %v2873
        %v2875 = vrot.slane %v2874, 4
        %v2876 = vadd.f32 %v2874, %v2875
        %v2877 = vrot.slane %v2876, 2
        %v2878 = vadd.f32 %v2876, %v2877
        %v2879 = vrot.slane %v2878, 1
        %v2880 = vadd.f32 %v2878, %v2879
        %v2881 = vrcp.pop 64.0
        %v2882 = vmul.f32 64.0, %v2881
        %v2883 = vsub.f32 1.0, %v2882
        %v2884 = vmul.f32 %v2881, %v2883
        %v2885 = vadd.f32 %v2881, %v2884
        %vm2886 = vweird.f32 %v2881
        %v2887 = vsel %vm2886, %v2881, %v2885
        %v2888 = vmul.f32 %v2880, %v2887
        %v2889 = vld [vmem:[%s9] sm:$0xff]
        %v2890 = vld [vmem:[%s9 + $0x8] sm:$0xff]
        %v2891 = vld [vmem:[%s9 + $0x10] sm:$0xff]
        %v2892 = vld [vmem:[%s9 + $0x18] sm:$0xff]
        %v2893 = vld [vmem:[%s9 + $0x20] sm:$0xff]
        %v2894 = vld [vmem:[%s9 + $0x28] sm:$0xff]
        %v2895 = vld [vmem:[%s9 + $0x30] sm:$0xff]
        %v2896 = vld [vmem:[%s9 + $0x38] sm:$0xff]
        %v2897 = vld [vmem:[%s10] sm:$0x1]
        %v2899 = vsel %vm1030, %v2888, 0
        %2901 = vmatpush.msra.mxu0 0.0
        %2902 = vmatpush.msra.mxu0 0.0
        %2903 = vmatpush.msra.mxu0 0.0
        %2904 = vmatpush.msra.mxu0 0.0
        %2905 = vmatpush.msra.mxu0 0.0
        %2906 = vmatpush.msra.mxu0 0.0
        %2907 = vmatpush.msra.mxu0 0.0
        %2908 = vmatpush.msra.mxu0 0.0
        %2909 = vmatpush.msra.mxu0 %v2896
        %2910 = vmatpush.msra.mxu0 %v2895
        %2911 = vmatpush.msra.mxu0 %v2894
        %2912 = vmatpush.msra.mxu0 %v2893
        %2913 = vmatpush.msra.mxu0 %v2892
        %2914 = vmatpush.msra.mxu0 %v2891
        %2915 = vmatpush.msra.mxu0 %v2890
        %2916 = vmatpush.msra.mxu0 %v2889
        %2917 = vmatmul.f32.gmra.mxu0 %v2899
        %v2918 = vpop.f32.mrf.mxu0
        %v2919 = vadd.f32 %v2897, %v2918
        %2920 = vdwg.mxu0
        %v2921 = vmax.f32 %v2919, 0.0
        %v2922 = vld [vmem:[%s11] sm:$0xff]
        %v2923 = vld [vmem:[%s11 + $0x8] sm:$0xff]
        %v2924 = vld [vmem:[%s11 + $0x10] sm:$0xff]
        %v2925 = vld [vmem:[%s11 + $0x18] sm:$0xff]
        %v2926 = vld [vmem:[%s12] sm:$0x1]
        %v2928 = vsel %vm646, %v2921, 0
        %2930 = vmatpush.msra.mxu0 0.0
        %2931 = vmatpush.msra.mxu0 0.0
        %2932 = vmatpush.msra.mxu0 0.0
        %2933 = vmatpush.msra.mxu0 0.0
        %2934 = vmatpush.msra.mxu0 0.0
        %2935 = vmatpush.msra.mxu0 0.0
        %2936 = vmatpush.msra.mxu0 0.0
        %2937 = vmatpush.msra.mxu0 0.0
        %2938 = vmatpush.msra.mxu0 0.0
        %2939 = vmatpush.msra.mxu0 0.0
        %2940 = vmatpush.msra.mxu0 0.0
        %2941 = vmatpush.msra.mxu0 0.0
        %2942 = vmatpush.msra.mxu0 %v2925
        %2943 = vmatpush.msra.mxu0 %v2924
        %2944 = vmatpush.msra.mxu0 %v2923
        %2945 = vmatpush.msra.mxu0 %v2922
        %2946 = vmatmul.f32.gmra.mxu0 %v2928
        %v2947 = vpop.f32.mrf.mxu0
        %v2948 = vadd.f32 %v2926, %v2947
        %2949 = vdwg.mxu0
        %v2950 = vxor.u32 %v2948, 2147483648
        %v2951 = vmul.f32 %v2950, 1.442695
        %v2952 = vpow.pop %v2951
        %v2953 = vadd.f32 %v2952, 1.0
        %v2954 = vrcp.pop %v2953
        %v2955 = vmul.f32 %v2953, %v2954
        %v2956 = vsub.f32 1.0, %v2955
        %v2957 = vmul.f32 %v2954, %v2956
        %v2958 = vadd.f32 %v2954, %v2957
        %vm2959 = vweird.f32 %v2953
        %vm2960 = vweird.f32 %v2954
        %vm2961 = vmor %vm2959, %vm2960
        %v2962 = vsel %vm2961, %v2954, %v2958
        %v2963 = vand.u32 2147483647, %v2953
        %vm2964 = vcmp.eq.f32.partialorder %v2963, 8.507059e+37
        %v2965 = vand.u32 %v2953, 2147483648
        %v2966 = vor.u32 1.1754944e-38, %v2965
        %v2967 = vsel %vm2964, %v2966, %v2962
        %v2968 = vmul.f32 1.0, %v2967
        %v2969 = vperm.slane %v2968, 0
        %v2970 = vmul.f32 %v2852, %v2969
        %v2971 = vmul.f32 %v2853, %v2969
        %v2972 = vmul.f32 %v2854, %v2969
        %v2973 = vmul.f32 %v2855, %v2969
        %v2974 = vmul.f32 %v2856, %v2969
        %v2975 = vmul.f32 %v2857, %v2969
        %v2976 = vmul.f32 %v2858, %v2969
        %v2977 = vmul.f32 %v2859, %v2969
        %v2978 = vpack.c.bf16 %v2971, %v2970
        %v2979 = vpack.c.bf16 %v2973, %v2972
        %v2980 = vpack.c.bf16 %v2975, %v2974
        %v2981 = vpack.c.bf16 %v2977, %v2976
        %v2982 = vld [vmem:[%s13] sm:$0xf]
        %v2983 = vld [vmem:[%s13 + $0x4] sm:$0xf]
        %v2984 = vld [vmem:[%s13 + $0x8] sm:$0xf]
        %v2985 = vld [vmem:[%s13 + $0xc] sm:$0xf]
        %v2986 = vld [vmem:[%s13 + $0x10] sm:$0xf]
        %v2987 = vld [vmem:[%s13 + $0x14] sm:$0xf]
        %v2988 = vld [vmem:[%s13 + $0x18] sm:$0xf]
        %v2989 = vld [vmem:[%s13 + $0x1c] sm:$0xf]
        %v2998 = vunpack.c.l.b16 %v2982
        %v2999 = vunpack.c.l.b16 %v2983
        %v3000 = vunpack.c.l.b16 %v2984
        %v3001 = vunpack.c.l.b16 %v2985
        %v3002 = vunpack.c.l.b16 %v2986
        %v3003 = vunpack.c.l.b16 %v2987
        %v3004 = vunpack.c.l.b16 %v2988
        %v3005 = vunpack.c.l.b16 %v2989
        %v3006 = vpack.c.b16 %v2999, %v2998
        %v3007 = vpack.c.b16 %v3001, %v3000
        %v3008 = vpack.c.b16 %v3003, %v3002
        %v3009 = vpack.c.b16 %v3005, %v3004
        %v3015 = vsel %vm1030, %v2978, 0
        %v3018 = vsel %vm1030, %v2979, 0
        %v3021 = vsel %vm1030, %v2980, 0
        %v3024 = vsel %vm1030, %v2981, 0
        %3026 = vmatpush.bf16.msra.mxu0 0
        %3027 = vmatpush.bf16.msra.mxu0 0
        %3028 = vmatpush.bf16.msra.mxu0 0
        %3029 = vmatpush.bf16.msra.mxu0 0
        %3030 = vmatpush.bf16.msra.mxu0 %v3009
        %3031 = vmatpush.bf16.msra.mxu0 %v3008
        %3032 = vmatpush.bf16.msra.mxu0 %v3007
        %3033 = vmatpush.bf16.msra.mxu0 %v3006
        %3034 = vmatmul.bf16.gmra.mxu0 %v3015
        %v3035 = vpop.f32.mrf.mxu0
        %v3036 = vadd.f32 0.0, %v3035
        %v3037 = vpop.f32.mrf.mxu0
        %v3038 = vadd.f32 0.0, %v3037
        %3039 = vmatmul.bf16.gmra.mxu0 %v3018
        %v3040 = vpop.f32.mrf.mxu0
        %v3041 = vadd.f32 0.0, %v3040
        %v3042 = vpop.f32.mrf.mxu0
        %v3043 = vadd.f32 0.0, %v3042
        %3044 = vmatmul.bf16.gmra.mxu0 %v3021
        %v3045 = vpop.f32.mrf.mxu0
        %v3046 = vadd.f32 0.0, %v3045
        %v3047 = vpop.f32.mrf.mxu0
        %v3048 = vadd.f32 0.0, %v3047
        %3049 = vmatmul.bf16.gmra.mxu0 %v3024
        %v3050 = vpop.f32.mrf.mxu0
        %v3051 = vadd.f32 0.0, %v3050
        %v3052 = vpop.f32.mrf.mxu0
        %v3053 = vadd.f32 0.0, %v3052
        %3054 = vdwg.mxu0
        %v3055 = vld [vmem:[%s14] sm:$0x1]
        %v3057 = vperm.slane %v3055, 0
        %v3059 = vmul.f32 %v3036, %v3057
        %v3060 = vmul.f32 %v3038, %v3057
        %v3061 = vmul.f32 %v3041, %v3057
        %v3062 = vmul.f32 %v3043, %v3057
        %v3063 = vmul.f32 %v3046, %v3057
        %v3064 = vmul.f32 %v3048, %v3057
        %v3065 = vmul.f32 %v3051, %v3057
        %v3066 = vmul.f32 %v3053, %v3057
        %v3067 = vld [vmem:[%s15] sm:$0x1]
        %v3069 = vperm.slane %v3067, 0
        %v3071 = vadd.f32 %v3059, %v3069
        %v3072 = vadd.f32 %v3060, %v3069
        %v3073 = vadd.f32 %v3061, %v3069
        %v3074 = vadd.f32 %v3062, %v3069
        %v3075 = vadd.f32 %v3063, %v3069
        %v3076 = vadd.f32 %v3064, %v3069
        %v3077 = vadd.f32 %v3065, %v3069
        %v3078 = vadd.f32 %v3066, %v3069
        %v3079 = vld [vmem:[%s16] sm:$0xf]
        %v3080 = vld [vmem:[%s16 + $0x4] sm:$0xf]
        %v3081 = vld [vmem:[%s16 + $0x8] sm:$0xf]
        %v3082 = vld [vmem:[%s16 + $0xc] sm:$0xf]
        %v3087 = vunpack.c.l.b16 %v3079
        %v3088 = vunpack.c.l.b16 %v3080
        %v3089 = vunpack.c.l.b16 %v3081
        %v3090 = vunpack.c.l.b16 %v3082
        %v3091 = vpack.c.b16 %v3088, %v3087
        %v3092 = vpack.c.b16 %v3090, %v3089
        %3095 = vmatpush.bf16.msra.mxu0 0
        %3096 = vmatpush.bf16.msra.mxu0 0
        %3097 = vmatpush.bf16.msra.mxu0 0
        %3098 = vmatpush.bf16.msra.mxu0 0
        %3099 = vmatpush.bf16.msra.mxu0 0
        %3100 = vmatpush.bf16.msra.mxu0 0
        %3101 = vmatpush.bf16.msra.mxu0 %v3092
        %3102 = vmatpush.bf16.msra.mxu0 %v3091
        %3103 = vmatmul.bf16.gmra.mxu0 %v648
        %v3104 = vpop.f32.mrf.mxu0
        %v3105 = vadd.f32 0.0, %v3104
        %v3106 = vpop.f32.mrf.mxu0
        %v3107 = vadd.f32 0.0, %v3106
        %3108 = vmatmul.bf16.gmra.mxu0 %v651
        %v3109 = vpop.f32.mrf.mxu0
        %v3110 = vadd.f32 0.0, %v3109
        %v3111 = vpop.f32.mrf.mxu0
        %v3112 = vadd.f32 0.0, %v3111
        %3113 = vmatmul.bf16.gmra.mxu0 %v654
        %v3114 = vpop.f32.mrf.mxu0
        %v3115 = vadd.f32 0.0, %v3114
        %v3116 = vpop.f32.mrf.mxu0
        %v3117 = vadd.f32 0.0, %v3116
        %3118 = vmatmul.bf16.gmra.mxu0 %v657
        %v3119 = vpop.f32.mrf.mxu0
        %v3120 = vadd.f32 0.0, %v3119
        %v3121 = vpop.f32.mrf.mxu0
        %v3122 = vadd.f32 0.0, %v3121
        %3123 = vdwg.mxu0
        %v3124 = vld [vmem:[%s17] sm:$0x1]
        %v3126 = vperm.slane %v3124, 0
        %v3128 = vmul.f32 %v3105, %v3126
        %v3129 = vmul.f32 %v3107, %v3126
        %v3130 = vmul.f32 %v3110, %v3126
        %v3131 = vmul.f32 %v3112, %v3126
        %v3132 = vmul.f32 %v3115, %v3126
        %v3133 = vmul.f32 %v3117, %v3126
        %v3134 = vmul.f32 %v3120, %v3126
        %v3135 = vmul.f32 %v3122, %v3126
        %v3136 = vld [vmem:[%s18] sm:$0x1]
        %v3138 = vperm.slane %v3136, 0
        %v3140 = vadd.f32 %v3128, %v3138
        %v3141 = vadd.f32 %v3129, %v3138
        %v3142 = vadd.f32 %v3130, %v3138
        %v3143 = vadd.f32 %v3131, %v3138
        %v3144 = vadd.f32 %v3132, %v3138
        %v3145 = vadd.f32 %v3133, %v3138
        %v3146 = vadd.f32 %v3134, %v3138
        %v3147 = vadd.f32 %v3135, %v3138
        %v3148 = vadd.f32 %v3071, %v3140
        %v3149 = vadd.f32 %v3072, %v3141
        %v3150 = vadd.f32 %v3073, %v3142
        %v3151 = vadd.f32 %v3074, %v3143
        %v3152 = vadd.f32 %v3075, %v3144
        %v3153 = vadd.f32 %v3076, %v3145
        %v3154 = vadd.f32 %v3077, %v3146
        %v3155 = vadd.f32 %v3078, %v3147
        %v3156 = vmax.f32 %v3148, 0.0
        %v3157 = vmax.f32 %v3149, 0.0
        %v3158 = vmax.f32 %v3150, 0.0
        %v3159 = vmax.f32 %v3151, 0.0
        %v3160 = vmax.f32 %v3152, 0.0
        %v3161 = vmax.f32 %v3153, 0.0
        %v3162 = vmax.f32 %v3154, 0.0
        %v3163 = vmax.f32 %v3155, 0.0
        %3164 = vst.msk [vmem:[%s595] sm:$0xff] %vm1030, %v3156
        %3165 = vst.msk [vmem:[%s595 + $0x8] sm:$0xff] %vm1030, %v3157
        %3166 = vst.msk [vmem:[%s595 + $0x10] sm:$0xff] %vm1030, %v3158
        %3167 = vst.msk [vmem:[%s595 + $0x18] sm:$0xff] %vm1030, %v3159
        %3168 = vst.msk [vmem:[%s595 + $0x20] sm:$0xff] %vm1030, %v3160
        %3169 = vst.msk [vmem:[%s595 + $0x28] sm:$0xff] %vm1030, %v3161
        %3170 = vst.msk [vmem:[%s595 + $0x30] sm:$0xff] %vm1030, %v3162
        %3171 = vst.msk [vmem:[%s595 + $0x38] sm:$0xff] %vm1030, %v3163
        %s3172 = sand.u32 %s445, 1
        %s3173 = scalar_lea.sflag [#allocation3], %s3172
        %s3174 = sand.u32 %s445, 1
        %s3175 = smul.addr %s3174, 64
        %s3176 = scalar_lea.vmem [#allocation2], %s3175
        // Predicated region
        $region97: #{tpu_custom_call.1} parent=95 // pred_check
          %p3177 = pneg %p455
        $region98: #{tpu_custom_call.1} parent=95 // pred_check_branch
          %3179 = sbr.rel (%p3177) target = $region100
        $region99: #{tpu_custom_call.1} parent=95 // pred_region
          %3181 = vsyncadd %s3173, 0
          %s3182 = smul.addr %s33, 8
          %s3183 = smul.addr %s3182, 8
          %s3184 = scalar_lea.hbm %s19, %s3183
          %s3185 = sshll.u32 %s3176, 4
          %s3186 = int_to_ptr.vmem [resolvable:$true] %s3185
          %s3187 = sshll.u32 %s3184, 4
          %s3188 = int_to_ptr.hbm [resolvable:$true] %s3187
          %3193 = dma.vmem_to_hbm [thread:$0]  %s3186, 1024, %s3188, %s3173, 128, 128, 8
        $region100: #{tpu_custom_call.1} parent=95 // pred_fallthru
          _
      $region96: #{tpu_custom_call.1} parent=5 // pred_fallthru
        _
      %p3194 = scmp.le.s32.totalorder 2, %s28
      // Predicated region
      $region101: #{tpu_custom_call.1} parent=5 // pred_check
        %p3195 = pneg %p3194
      $region102: #{tpu_custom_call.1} parent=5 // pred_check_branch
        %3197 = sbr.rel (%p3195) target = $region104
      $region103: #{tpu_custom_call.1} parent=5 // pred_region
        %s3198 = ssub.s32 %s28, 2
        // Predicated region
        $region105: #{tpu_custom_call.1} parent=103 // pred_check
          %p3199 = pneg %p461
        $region106: #{tpu_custom_call.1} parent=103 // pred_check_branch
          %3201 = sbr.rel (%p3199) target = $region108
        $region107: #{tpu_custom_call.1} parent=103 // pred_region
          %s3202 = sand.u32 %s446, 1
          %s3203 = scalar_lea.sflag [#allocation3], %s3202
          %s3204 = sand.u32 %s446, 1
          %s3205 = smul.addr %s3204, 64
          %s3206 = scalar_lea.vmem [#allocation2], %s3205
          %3208 = dma.done %s3203, 1024
        $region108: #{tpu_custom_call.1} parent=103 // pred_fallthru
          _
      $region104: #{tpu_custom_call.1} parent=5 // pred_fallthru
        _
    $region6: #{tpu_custom_call.1} parent=1 // loop_footer
      %s32 = sadd.s32 1, %s28
    $region7: #{tpu_custom_call.1} parent=1 // loop_footer_branch
      %27 = sbr.rel target = $region3
    $region8: #{tpu_custom_call.1} parent=1 // loop_exit
      _
    %3209 = vsyncpa [#allocation3], 1
    %s3210 = scalar_lea.sflag [#allocation3], 1
    %3211 = vsyncpa %s3210, 1

</llo_original>
